<compile_context>
chip_gen: v5e
topology: v5e:2x2
jax: 0.10.0
libtpu: 0.0.40
codegen_flags: <defaults>
</compile_context>

<pallas_src>
import jax
import jax.numpy as jnp
import numpy as np
from jax.experimental import pallas as pl
from jax.experimental.pallas import tpu as pltpu

# ----------------------------- configuration --------------------------------
B = 4            # batch size
L = 8            # decode length (max_seq_length)
E = 32           # embedding_size == hidden_size (required by the module)
H = 32           # hidden_size
Z = 16           # latent_size
V = 64           # vocab_size
VPAD = 128       # lane-dense padded vocab width for the fused projection
NL = 2           # GRU num_layers
NUM_USERS = 10
NUM_ITEMS = 12
TEMP = 0.001     # gumbel-softmax temperature (module default)
GUMBEL_EPS = 1e-20


# --------------------------- fused Pallas kernel ------------------------------
def _gen_gate_kernel(
    emb0_ref,       # (B, E)   embedding of token 0 (the only one the gate branch uses)
    user_ref,       # (B, Z)
    item_ref,       # (B, Z)
    misc_ref,       # (1, Z)   misc embedding parameter (zeros)
    noise_ref,      # (L, B, 3) gumbel noise, whole array resident in VMEM
    w_l2o_ref,      # (Z, E)   latent2output weight (transposed: in, out)
    b_l2o_ref,      # (1, E)
    w_ih_ref,       # (NL, E, 3H)  GRU input weights (transposed)
    w_hh_ref,       # (NL, H, 3H)  GRU hidden weights (transposed)
    b_ih_ref,       # (NL, 1, 3H)
    b_hh_ref,       # (NL, 1, 3H)
    w_gate_ref,     # (H, 3)   de_gate weight (transposed)
    b_gate_ref,     # (1, 3)
    w_cat_ref,      # (E, 3E)  concat of shared general/item/aspect word weights
    b_out_ref,      # (3, 1, E) output-word biases
    b_in_ref,       # (3, 1, E) input-word biases
    w_o2v_ref,      # (E, VPAD) output2vocab weight, lane-padded
    b_o2v_ref,      # (1, VPAD)
    out_ref,        # (B, L, VPAD) per-step logits slab
):
    f32 = jnp.float32

    # ---- load everything once (step-invariant) ----
    emb0 = emb0_ref[...]
    user = user_ref[...]
    item = item_ref[...]
    misc = jnp.broadcast_to(misc_ref[...], user.shape)   # hoisted out of step loop

    w_l2o = w_l2o_ref[...]
    b_l2o = b_l2o_ref[...]
    w_gate = w_gate_ref[...]
    b_gate = b_gate_ref[...]
    w_cat = w_cat_ref[...]
    w_o2v = w_o2v_ref[...]
    b_o2v = b_o2v_ref[...]
    b_out = [b_out_ref[k] for k in range(3)]
    b_in = [b_in_ref[k] for k in range(3)]
    w_ih = [w_ih_ref[l] for l in range(NL)]
    w_hh = [w_hh_ref[l] for l in range(NL)]
    b_ih = [b_ih_ref[l] for l in range(NL)]
    b_hh = [b_hh_ref[l] for l in range(NL)]

    def dot(a, b):
        return jnp.dot(a, b, preferred_element_type=f32)

    # ---- step-invariant matmuls hoisted out of the recurrence ----
    # next-input candidates: emb0 through the shared input-word layers (one MXU pass)
    p_cat = dot(emb0, w_cat)                                        # (B, 3E)
    nxt = [p_cat[:, k * E:(k + 1) * E] + b_in[k] for k in range(3)]
    # user/item-hidden candidates through latent2output.  Exact hoist: the softmax
    # gates sum to 1, so the l2o bias term is preserved under the gated mix.
    uih_cand = [dot(misc, w_l2o) + b_l2o,
                dot(item, w_l2o) + b_l2o,
                dot(item + user, w_l2o) + b_l2o]

    # ---- initial state (carried in vregs, no scratch) ----
    h = [jnp.zeros((B, H), f32) for _ in range(NL)]
    x_in = emb0
    uih = dot(user + item, w_l2o) + b_l2o

    inv_temp = f32(1.0 / TEMP)

    # ---- fully unrolled recurrence over L steps ----
    for i in range(L):
        x = x_in + uih

        # multi-layer GRU step (torch gate order: r, z, n)
        for l in range(NL):
            gi = dot(x, w_ih[l]) + b_ih[l]
            gh = dot(h[l], w_hh[l]) + b_hh[l]
            r = jax.nn.sigmoid(gi[:, 0:H] + gh[:, 0:H])
            z = jax.nn.sigmoid(gi[:, H:2 * H] + gh[:, H:2 * H])
            n = jnp.tanh(gi[:, 2 * H:3 * H] + r * gh[:, 2 * H:3 * H])
            h_new = (1.0 - z) * n + z * h[l]
            h[l] = h_new
            x = h_new
        out_step = x                                               # (B, H)

        # gate = gumbel_softmax(de_gate(out_step))
        gate_logits = dot(out_step, w_gate) + b_gate               # (B, 3)
        y = (gate_logits + noise_ref[i]) * inv_temp
        y = y - jnp.max(y, axis=-1, keepdims=True)
        ey = jnp.exp(y)
        gate = ey * pl.reciprocal(jnp.sum(ey, axis=-1, keepdims=True), approx=True)
        g = [gate[:, k:k + 1] for k in range(3)]

        # output word mix: single MXU pass against the concatenated shared weights
        s_cat = dot(out_step, w_cat)                               # (B, 3E)
        mix_out = (g[0] * (s_cat[:, 0:E] + b_out[0])
                   + g[1] * (s_cat[:, E:2 * E] + b_out[1])
                   + g[2] * (s_cat[:, 2 * E:3 * E] + b_out[2]))

        # fused output2vocab; lane-dense (VPAD = 128) store
        out_ref[:, i, :] = dot(mix_out, w_o2v) + b_o2v

        # recurrence updates: gated sums of the precomputed candidates (no matmuls)
        x_in = g[0] * nxt[0] + g[1] * nxt[1] + g[2] * nxt[2]
        uih = g[0] * uih_cand[0] + g[1] * uih_cand[1] + g[2] * uih_cand[2]


# ------------------------------- forward glue --------------------------------
def gen_network_forward(params, input_de_sequence, user_ids, item_ids, random_flag, noise):
    del random_flag  # unused in the PyTorch forward as well
    emb0 = params['embedding'][input_de_sequence[:, 0]]   # (B, E): 'gate' branch only uses token 0
    user_h = params['user_embedding'][user_ids]            # (B, Z)
    item_h = params['item_embedding'][item_ids]            # (B, Z)
    misc = params['misc_embedding'][None, :]                # (1, Z)

    out = pl.pallas_call(
        _gen_gate_kernel,
        out_shape=jax.ShapeDtypeStruct((B, L, VPAD), jnp.float32),
    )(emb0, user_h, item_h, misc, noise,
      params['w_l2o'], params['b_l2o'],
      params['w_ih'], params['w_hh'], params['b_ih'], params['b_hh'],
      params['w_gate'], params['b_gate'],
      params['w_share_cat'], params['b_out'], params['b_in'],
      params['w_o2v_pad'], params['b_o2v_pad'])

    # (B, L, VPAD) -> (B*L, V): contiguous reshape (matches output.view(-1, E) row order)
    return out.reshape(B * L, VPAD)[:, :V]


# ------------------------------ parameter init --------------------------------
def init_params(key):
    ks = jax.random.split(key, 16)

    def norm(k, shape, scale=0.1):
        return (scale * jax.random.normal(k, shape)).astype(jnp.float32)

    p = {}
    p['embedding'] = norm(ks[0], (V, E))
    p['user_embedding'] = norm(ks[1], (NUM_USERS, Z))
    p['item_embedding'] = norm(ks[2], (NUM_ITEMS, Z))
    p['misc_embedding'] = jnp.zeros((Z,), jnp.float32)       # nn.Parameter(torch.zeros(latent))
    p['w_l2o'] = norm(ks[3], (Z, E))                          # latent2output (transposed)
    p['b_l2o'] = norm(ks[4], (1, E))
    p['w_ih'] = norm(ks[5], (NL, E, 3 * H))                   # GRU weight_ih (transposed)
    p['w_hh'] = norm(ks[6], (NL, H, 3 * H))                   # GRU weight_hh (transposed)
    p['b_ih'] = norm(ks[7], (NL, 1, 3 * H))
    p['b_hh'] = norm(ks[8], (NL, 1, 3 * H))
    p['w_gate'] = norm(ks[9], (H, 3))                         # de_gate (transposed)
    p['b_gate'] = norm(ks[10], (1, 3))
    p['w_share'] = norm(ks[11], (3, E, E))                    # general/item/aspect shared W
    p['b_out'] = norm(ks[12], (3, 1, E))                      # output_* biases
    p['b_in'] = norm(ks[13], (3, 1, E))                       # input_* biases
    p['w_o2v'] = norm(ks[14], (E, V))                         # output2vocab (transposed)
    p['b_o2v'] = norm(ks[15], (1, V))

    # kernel-layout derived params (built once, per perf review):
    p['w_share_cat'] = jnp.concatenate(
        [p['w_share'][0], p['w_share'][1], p['w_share'][2]], axis=1)          # (E, 3E)
    p['w_o2v_pad'] = jnp.zeros((E, VPAD), jnp.float32).at[:, :V].set(p['w_o2v'])
    p['b_o2v_pad'] = jnp.zeros((1, VPAD), jnp.float32).at[:, :V].set(p['b_o2v'])
    return p


# ---------------------------- pure-JAX reference ------------------------------
def reference_forward(p, seq, user_ids, item_ids, noise):
    emb0 = p['embedding'][seq][:, 0, :]
    user_h = p['user_embedding'][user_ids]
    item_h = p['item_embedding'][item_ids]
    misc = jnp.broadcast_to(p['misc_embedding'][None, :], user_h.shape)

    def l2o(x):
        return x @ p['w_l2o'] + p['b_l2o']

    h = jnp.zeros((NL, B, H), jnp.float32)
    x_in = emb0
    uih = l2o(user_h + item_h)
    outs = []
    for step in range(L):
        x = x_in + uih
        for l in range(NL):
            gi = x @ p['w_ih'][l] + p['b_ih'][l]
            gh = h[l] @ p['w_hh'][l] + p['b_hh'][l]
            r = jax.nn.sigmoid(gi[:, :H] + gh[:, :H])
            z = jax.nn.sigmoid(gi[:, H:2 * H] + gh[:, H:2 * H])
            n = jnp.tanh(gi[:, 2 * H:] + r * gh[:, 2 * H:])
            hn = (1 - z) * n + z * h[l]
            h = h.at[l].set(hn)
            x = hn
        out_step = x
        gl = out_step @ p['w_gate'] + p['b_gate']
        gate = jax.nn.softmax((gl + noise[step]) / TEMP, axis=-1)
        g0, g1, g2 = gate[:, 0:1], gate[:, 1:2], gate[:, 2:3]

        def mix(inp, bstack):
            return (g0 * (inp @ p['w_share'][0] + bstack[0])
                    + g1 * (inp @ p['w_share'][1] + bstack[1])
                    + g2 * (inp @ p['w_share'][2] + bstack[2]))

        outs.append(mix(out_step, p['b_out']))
        x_in = mix(emb0, p['b_in'])
        uih = l2o(g0 * misc + g1 * item_h + g2 * (item_h + user_h))
    out = jnp.stack(outs, axis=1)           # (B, L, E)
    flat = out.reshape(-1, E)
    return flat @ p['w_o2v'] + p['b_o2v']


# ------------------------------------ main ------------------------------------
if __name__ == "__main__":
    key = jax.random.PRNGKey(0)
    kp, kseq, ku, ki, kn = jax.random.split(key, 5)
    params = init_params(kp)

    input_de_sequence = jax.random.randint(kseq, (B, L), 0, V)
    user_ids = jax.random.randint(ku, (B,), 0, NUM_USERS)
    item_ids = jax.random.randint(ki, (B,), 0, NUM_ITEMS)

    # deterministic gumbel noise (replaces torch.rand().cuda() in f_gumbel_sample)
    U = jax.random.uniform(kn, (L, B, 3), dtype=jnp.float32)
    noise = -jnp.log(-jnp.log(U + GUMBEL_EPS) + GUMBEL_EPS)

    logits = gen_network_forward(params, input_de_sequence, user_ids, item_ids, True, noise)
    logits = jax.block_until_ready(logits)

    assert logits.shape == (B * L, V), logits.shape
    ref = reference_forward(params, input_de_sequence, user_ids, item_ids, noise)
    np.testing.assert_allclose(np.asarray(logits), np.asarray(ref), rtol=2e-2, atol=2e-2)

    print("KERNEL_OK")
</pallas_src>

<mosaic_0001>
module attributes {stable_mosaic.version = 11 : i64} {
  func.func @_gen_gate_kernel(%arg0: memref<4x32xf32, #tpu.memory_space<vmem>>, %arg1: memref<4x16xf32, #tpu.memory_space<vmem>>, %arg2: memref<4x16xf32, #tpu.memory_space<vmem>>, %arg3: memref<1x16xf32, #tpu.memory_space<vmem>>, %arg4: memref<8x4x3xf32, #tpu.memory_space<vmem>>, %arg5: memref<16x32xf32, #tpu.memory_space<vmem>>, %arg6: memref<1x32xf32, #tpu.memory_space<vmem>>, %arg7: memref<2x32x96xf32, #tpu.memory_space<vmem>>, %arg8: memref<2x32x96xf32, #tpu.memory_space<vmem>>, %arg9: memref<2x1x96xf32, #tpu.memory_space<vmem>>, %arg10: memref<2x1x96xf32, #tpu.memory_space<vmem>>, %arg11: memref<32x3xf32, #tpu.memory_space<vmem>>, %arg12: memref<1x3xf32, #tpu.memory_space<vmem>>, %arg13: memref<32x96xf32, #tpu.memory_space<vmem>>, %arg14: memref<3x1x32xf32, #tpu.memory_space<vmem>>, %arg15: memref<3x1x32xf32, #tpu.memory_space<vmem>>, %arg16: memref<32x128xf32, #tpu.memory_space<vmem>>, %arg17: memref<1x128xf32, #tpu.memory_space<vmem>>, %arg18: memref<4x8x128xf32, #tpu.memory_space<vmem>>) attributes {dimension_semantics = [], scalar_prefetch = 0 : i64, scratch_operands = 0 : i64, tpu.core_type = #tpu.core_type<tc>} {
    %c0 = arith.constant 0 : index
    %c0_0 = arith.constant 0 : index
    %0 = vector.load %arg0[%c0, %c0_0] : memref<4x32xf32, #tpu.memory_space<vmem>>, vector<4x32xf32>
    %c0_1 = arith.constant 0 : index
    %c0_2 = arith.constant 0 : index
    %1 = vector.load %arg1[%c0_1, %c0_2] : memref<4x16xf32, #tpu.memory_space<vmem>>, vector<4x16xf32>
    %c0_3 = arith.constant 0 : index
    %c0_4 = arith.constant 0 : index
    %2 = vector.load %arg2[%c0_3, %c0_4] : memref<4x16xf32, #tpu.memory_space<vmem>>, vector<4x16xf32>
    %c0_5 = arith.constant 0 : index
    %c0_6 = arith.constant 0 : index
    %3 = vector.load %arg3[%c0_5, %c0_6] : memref<1x16xf32, #tpu.memory_space<vmem>>, vector<1x16xf32>
    %4 = vector.shape_cast %3 : vector<1x16xf32> to vector<1x16xf32>
    %5 = vector.broadcast %4 : vector<1x16xf32> to vector<4x16xf32>
    %c0_7 = arith.constant 0 : index
    %c0_8 = arith.constant 0 : index
    %6 = vector.load %arg5[%c0_7, %c0_8] : memref<16x32xf32, #tpu.memory_space<vmem>>, vector<16x32xf32>
    %c0_9 = arith.constant 0 : index
    %c0_10 = arith.constant 0 : index
    %7 = vector.load %arg6[%c0_9, %c0_10] : memref<1x32xf32, #tpu.memory_space<vmem>>, vector<1x32xf32>
    %c0_11 = arith.constant 0 : index
    %c0_12 = arith.constant 0 : index
    %8 = vector.load %arg11[%c0_11, %c0_12] : memref<32x3xf32, #tpu.memory_space<vmem>>, vector<32x3xf32>
    %c0_13 = arith.constant 0 : index
    %c0_14 = arith.constant 0 : index
    %9 = vector.load %arg12[%c0_13, %c0_14] : memref<1x3xf32, #tpu.memory_space<vmem>>, vector<1x3xf32>
    %c0_15 = arith.constant 0 : index
    %c0_16 = arith.constant 0 : index
    %10 = vector.load %arg13[%c0_15, %c0_16] : memref<32x96xf32, #tpu.memory_space<vmem>>, vector<32x96xf32>
    %c0_17 = arith.constant 0 : index
    %c0_18 = arith.constant 0 : index
    %11 = vector.load %arg16[%c0_17, %c0_18] : memref<32x128xf32, #tpu.memory_space<vmem>>, vector<32x128xf32>
    %c0_19 = arith.constant 0 : index
    %c0_20 = arith.constant 0 : index
    %12 = vector.load %arg17[%c0_19, %c0_20] : memref<1x128xf32, #tpu.memory_space<vmem>>, vector<1x128xf32>
    %c0_21 = arith.constant 0 : index
    %c0_22 = arith.constant 0 : index
    %c0_23 = arith.constant 0 : index
    %13 = vector.load %arg14[%c0_21, %c0_22, %c0_23] : memref<3x1x32xf32, #tpu.memory_space<vmem>>, vector<1x1x32xf32>
    %14 = vector.shape_cast %13 : vector<1x1x32xf32> to vector<1x32xf32>
    %c1 = arith.constant 1 : index
    %c0_24 = arith.constant 0 : index
    %c0_25 = arith.constant 0 : index
    %15 = vector.load %arg14[%c1, %c0_24, %c0_25] : memref<3x1x32xf32, #tpu.memory_space<vmem>>, vector<1x1x32xf32>
    %16 = vector.shape_cast %15 : vector<1x1x32xf32> to vector<1x32xf32>
    %c2 = arith.constant 2 : index
    %c0_26 = arith.constant 0 : index
    %c0_27 = arith.constant 0 : index
    %17 = vector.load %arg14[%c2, %c0_26, %c0_27] : memref<3x1x32xf32, #tpu.memory_space<vmem>>, vector<1x1x32xf32>
    %18 = vector.shape_cast %17 : vector<1x1x32xf32> to vector<1x32xf32>
    %c0_28 = arith.constant 0 : index
    %c0_29 = arith.constant 0 : index
    %c0_30 = arith.constant 0 : index
    %19 = vector.load %arg15[%c0_28, %c0_29, %c0_30] : memref<3x1x32xf32, #tpu.memory_space<vmem>>, vector<1x1x32xf32>
    %20 = vector.shape_cast %19 : vector<1x1x32xf32> to vector<1x32xf32>
    %c1_31 = arith.constant 1 : index
    %c0_32 = arith.constant 0 : index
    %c0_33 = arith.constant 0 : index
    %21 = vector.load %arg15[%c1_31, %c0_32, %c0_33] : memref<3x1x32xf32, #tpu.memory_space<vmem>>, vector<1x1x32xf32>
    %22 = vector.shape_cast %21 : vector<1x1x32xf32> to vector<1x32xf32>
    %c2_34 = arith.constant 2 : index
    %c0_35 = arith.constant 0 : index
    %c0_36 = arith.constant 0 : index
    %23 = vector.load %arg15[%c2_34, %c0_35, %c0_36] : memref<3x1x32xf32, #tpu.memory_space<vmem>>, vector<1x1x32xf32>
    %24 = vector.shape_cast %23 : vector<1x1x32xf32> to vector<1x32xf32>
    %c0_37 = arith.constant 0 : index
    %c0_38 = arith.constant 0 : index
    %c0_39 = arith.constant 0 : index
    %25 = vector.load %arg7[%c0_37, %c0_38, %c0_39] : memref<2x32x96xf32, #tpu.memory_space<vmem>>, vector<1x32x96xf32>
    %26 = vector.shape_cast %25 : vector<1x32x96xf32> to vector<32x96xf32>
    %c1_40 = arith.constant 1 : index
    %c0_41 = arith.constant 0 : index
    %c0_42 = arith.constant 0 : index
    %27 = vector.load %arg7[%c1_40, %c0_41, %c0_42] : memref<2x32x96xf32, #tpu.memory_space<vmem>>, vector<1x32x96xf32>
    %28 = vector.shape_cast %27 : vector<1x32x96xf32> to vector<32x96xf32>
    %c0_43 = arith.constant 0 : index
    %c0_44 = arith.constant 0 : index
    %c0_45 = arith.constant 0 : index
    %29 = vector.load %arg8[%c0_43, %c0_44, %c0_45] : memref<2x32x96xf32, #tpu.memory_space<vmem>>, vector<1x32x96xf32>
    %30 = vector.shape_cast %29 : vector<1x32x96xf32> to vector<32x96xf32>
    %c1_46 = arith.constant 1 : index
    %c0_47 = arith.constant 0 : index
    %c0_48 = arith.constant 0 : index
    %31 = vector.load %arg8[%c1_46, %c0_47, %c0_48] : memref<2x32x96xf32, #tpu.memory_space<vmem>>, vector<1x32x96xf32>
    %32 = vector.shape_cast %31 : vector<1x32x96xf32> to vector<32x96xf32>
    %c0_49 = arith.constant 0 : index
    %c0_50 = arith.constant 0 : index
    %c0_51 = arith.constant 0 : index
    %33 = vector.load %arg9[%c0_49, %c0_50, %c0_51] : memref<2x1x96xf32, #tpu.memory_space<vmem>>, vector<1x1x96xf32>
    %34 = vector.shape_cast %33 : vector<1x1x96xf32> to vector<1x96xf32>
    %c1_52 = arith.constant 1 : index
    %c0_53 = arith.constant 0 : index
    %c0_54 = arith.constant 0 : index
    %35 = vector.load %arg9[%c1_52, %c0_53, %c0_54] : memref<2x1x96xf32, #tpu.memory_space<vmem>>, vector<1x1x96xf32>
    %36 = vector.shape_cast %35 : vector<1x1x96xf32> to vector<1x96xf32>
    %c0_55 = arith.constant 0 : index
    %c0_56 = arith.constant 0 : index
    %c0_57 = arith.constant 0 : index
    %37 = vector.load %arg10[%c0_55, %c0_56, %c0_57] : memref<2x1x96xf32, #tpu.memory_space<vmem>>, vector<1x1x96xf32>
    %38 = vector.shape_cast %37 : vector<1x1x96xf32> to vector<1x96xf32>
    %c1_58 = arith.constant 1 : index
    %c0_59 = arith.constant 0 : index
    %c0_60 = arith.constant 0 : index
    %39 = vector.load %arg10[%c1_58, %c0_59, %c0_60] : memref<2x1x96xf32, #tpu.memory_space<vmem>>, vector<1x1x96xf32>
    %40 = vector.shape_cast %39 : vector<1x1x96xf32> to vector<1x96xf32>
    %cst = arith.constant dense<0.000000e+00> : vector<4x96xf32>
    %41 = tpu.matmul %0, %10, %cst {dimension_numbers = #tpu.dot_dimension_numbers<[1], [0], [0], [1], [0, 0, 1, 1], [], []>} : vector<4x32xf32>, vector<32x96xf32>, vector<4x96xf32> -> vector<4x96xf32>
    %42 = vector.extract_strided_slice %41 {offsets = [0, 0], sizes = [4, 32], strides = [1, 1]} : vector<4x96xf32> to vector<4x32xf32>
    %43 = vector.broadcast %20 : vector<1x32xf32> to vector<4x32xf32>
    %44 = arith.addf %42, %43 : vector<4x32xf32>
    %45 = vector.extract_strided_slice %41 {offsets = [0, 32], sizes = [4, 32], strides = [1, 1]} : vector<4x96xf32> to vector<4x32xf32>
    %46 = vector.broadcast %22 : vector<1x32xf32> to vector<4x32xf32>
    %47 = arith.addf %45, %46 : vector<4x32xf32>
    %48 = vector.extract_strided_slice %41 {offsets = [0, 64], sizes = [4, 32], strides = [1, 1]} : vector<4x96xf32> to vector<4x32xf32>
    %49 = vector.broadcast %24 : vector<1x32xf32> to vector<4x32xf32>
    %50 = arith.addf %48, %49 : vector<4x32xf32>
    %cst_61 = arith.constant dense<0.000000e+00> : vector<4x32xf32>
    %51 = tpu.matmul %5, %6, %cst_61 {dimension_numbers = #tpu.dot_dimension_numbers<[1], [0], [0], [1], [0, 0, 1, 1], [], []>} : vector<4x16xf32>, vector<16x32xf32>, vector<4x32xf32> -> vector<4x32xf32>
    %52 = vector.broadcast %7 : vector<1x32xf32> to vector<4x32xf32>
    %53 = arith.addf %51, %52 : vector<4x32xf32>
    %cst_62 = arith.constant dense<0.000000e+00> : vector<4x32xf32>
    %54 = tpu.matmul %2, %6, %cst_62 {dimension_numbers = #tpu.dot_dimension_numbers<[1], [0], [0], [1], [0, 0, 1, 1], [], []>} : vector<4x16xf32>, vector<16x32xf32>, vector<4x32xf32> -> vector<4x32xf32>
    %55 = vector.broadcast %7 : vector<1x32xf32> to vector<4x32xf32>
    %56 = arith.addf %54, %55 : vector<4x32xf32>
    %57 = arith.addf %2, %1 : vector<4x16xf32>
    %cst_63 = arith.constant dense<0.000000e+00> : vector<4x32xf32>
    %58 = tpu.matmul %57, %6, %cst_63 {dimension_numbers = #tpu.dot_dimension_numbers<[1], [0], [0], [1], [0, 0, 1, 1], [], []>} : vector<4x16xf32>, vector<16x32xf32>, vector<4x32xf32> -> vector<4x32xf32>
    %59 = vector.broadcast %7 : vector<1x32xf32> to vector<4x32xf32>
    %60 = arith.addf %58, %59 : vector<4x32xf32>
    %cst_64 = arith.constant 0.000000e+00 : f32
    %61 = vector.broadcast %cst_64 : f32 to vector<4x32xf32>
    %cst_65 = arith.constant 0.000000e+00 : f32
    %62 = vector.broadcast %cst_65 : f32 to vector<4x32xf32>
    %63 = arith.addf %1, %2 : vector<4x16xf32>
    %cst_66 = arith.constant dense<0.000000e+00> : vector<4x32xf32>
    %64 = tpu.matmul %63, %6, %cst_66 {dimension_numbers = #tpu.dot_dimension_numbers<[1], [0], [0], [1], [0, 0, 1, 1], [], []>} : vector<4x16xf32>, vector<16x32xf32>, vector<4x32xf32> -> vector<4x32xf32>
    %65 = vector.broadcast %7 : vector<1x32xf32> to vector<4x32xf32>
    %66 = arith.addf %64, %65 : vector<4x32xf32>
    %67 = arith.addf %0, %66 : vector<4x32xf32>
    %cst_67 = arith.constant dense<0.000000e+00> : vector<4x96xf32>
    %68 = tpu.matmul %67, %26, %cst_67 {dimension_numbers = #tpu.dot_dimension_numbers<[1], [0], [0], [1], [0, 0, 1, 1], [], []>} : vector<4x32xf32>, vector<32x96xf32>, vector<4x96xf32> -> vector<4x96xf32>
    %69 = vector.broadcast %34 : vector<1x96xf32> to vector<4x96xf32>
    %70 = arith.addf %68, %69 : vector<4x96xf32>
    %cst_68 = arith.constant dense<0.000000e+00> : vector<4x96xf32>
    %71 = tpu.matmul %61, %30, %cst_68 {dimension_numbers = #tpu.dot_dimension_numbers<[1], [0], [0], [1], [0, 0, 1, 1], [], []>} : vector<4x32xf32>, vector<32x96xf32>, vector<4x96xf32> -> vector<4x96xf32>
    %72 = vector.broadcast %38 : vector<1x96xf32> to vector<4x96xf32>
    %73 = arith.addf %71, %72 : vector<4x96xf32>
    %74 = vector.extract_strided_slice %70 {offsets = [0, 0], sizes = [4, 32], strides = [1, 1]} : vector<4x96xf32> to vector<4x32xf32>
    %75 = vector.extract_strided_slice %73 {offsets = [0, 0], sizes = [4, 32], strides = [1, 1]} : vector<4x96xf32> to vector<4x32xf32>
    %76 = arith.addf %74, %75 : vector<4x32xf32>
    %77 = arith.negf %76 : vector<4x32xf32>
    %78 = math.exp %77 : vector<4x32xf32>
    %cst_69 = arith.constant 1.000000e+00 : f32
    %79 = vector.broadcast %cst_69 : f32 to vector<4x32xf32>
    %80 = arith.addf %79, %78 : vector<4x32xf32>
    %81 = arith.divf %79, %80 : vector<4x32xf32>
    %82 = vector.extract_strided_slice %70 {offsets = [0, 32], sizes = [4, 32], strides = [1, 1]} : vector<4x96xf32> to vector<4x32xf32>
    %83 = vector.extract_strided_slice %73 {offsets = [0, 32], sizes = [4, 32], strides = [1, 1]} : vector<4x96xf32> to vector<4x32xf32>
    %84 = arith.addf %82, %83 : vector<4x32xf32>
    %85 = arith.negf %84 : vector<4x32xf32>
    %86 = math.exp %85 : vector<4x32xf32>
    %cst_70 = arith.constant 1.000000e+00 : f32
    %87 = vector.broadcast %cst_70 : f32 to vector<4x32xf32>
    %88 = arith.addf %87, %86 : vector<4x32xf32>
    %89 = arith.divf %87, %88 : vector<4x32xf32>
    %90 = vector.extract_strided_slice %70 {offsets = [0, 64], sizes = [4, 32], strides = [1, 1]} : vector<4x96xf32> to vector<4x32xf32>
    %91 = vector.extract_strided_slice %73 {offsets = [0, 64], sizes = [4, 32], strides = [1, 1]} : vector<4x96xf32> to vector<4x32xf32>
    %92 = arith.mulf %81, %91 : vector<4x32xf32>
    %93 = arith.addf %90, %92 : vector<4x32xf32>
    %94 = math.tanh %93 : vector<4x32xf32>
    %cst_71 = arith.constant 1.000000e+00 : f32
    %95 = vector.broadcast %cst_71 : f32 to vector<4x32xf32>
    %96 = arith.subf %95, %89 : vector<4x32xf32>
    %97 = arith.mulf %96, %94 : vector<4x32xf32>
    %98 = arith.mulf %89, %61 : vector<4x32xf32>
    %99 = arith.addf %97, %98 : vector<4x32xf32>
    %cst_72 = arith.constant dense<0.000000e+00> : vector<4x96xf32>
    %100 = tpu.matmul %99, %28, %cst_72 {dimension_numbers = #tpu.dot_dimension_numbers<[1], [0], [0], [1], [0, 0, 1, 1], [], []>} : vector<4x32xf32>, vector<32x96xf32>, vector<4x96xf32> -> vector<4x96xf32>
    %101 = vector.broadcast %36 : vector<1x96xf32> to vector<4x96xf32>
    %102 = arith.addf %100, %101 : vector<4x96xf32>
    %cst_73 = arith.constant dense<0.000000e+00> : vector<4x96xf32>
    %103 = tpu.matmul %62, %32, %cst_73 {dimension_numbers = #tpu.dot_dimension_numbers<[1], [0], [0], [1], [0, 0, 1, 1], [], []>} : vector<4x32xf32>, vector<32x96xf32>, vector<4x96xf32> -> vector<4x96xf32>
    %104 = vector.broadcast %40 : vector<1x96xf32> to vector<4x96xf32>
    %105 = arith.addf %103, %104 : vector<4x96xf32>
    %106 = vector.extract_strided_slice %102 {offsets = [0, 0], sizes = [4, 32], strides = [1, 1]} : vector<4x96xf32> to vector<4x32xf32>
    %107 = vector.extract_strided_slice %105 {offsets = [0, 0], sizes = [4, 32], strides = [1, 1]} : vector<4x96xf32> to vector<4x32xf32>
    %108 = arith.addf %106, %107 : vector<4x32xf32>
    %109 = arith.negf %108 : vector<4x32xf32>
    %110 = math.exp %109 : vector<4x32xf32>
    %cst_74 = arith.constant 1.000000e+00 : f32
    %111 = vector.broadcast %cst_74 : f32 to vector<4x32xf32>
    %112 = arith.addf %111, %110 : vector<4x32xf32>
    %113 = arith.divf %111, %112 : vector<4x32xf32>
    %114 = vector.extract_strided_slice %102 {offsets = [0, 32], sizes = [4, 32], strides = [1, 1]} : vector<4x96xf32> to vector<4x32xf32>
    %115 = vector.extract_strided_slice %105 {offsets = [0, 32], sizes = [4, 32], strides = [1, 1]} : vector<4x96xf32> to vector<4x32xf32>
    %116 = arith.addf %114, %115 : vector<4x32xf32>
    %117 = arith.negf %116 : vector<4x32xf32>
    %118 = math.exp %117 : vector<4x32xf32>
    %cst_75 = arith.constant 1.000000e+00 : f32
    %119 = vector.broadcast %cst_75 : f32 to vector<4x32xf32>
    %120 = arith.addf %119, %118 : vector<4x32xf32>
    %121 = arith.divf %119, %120 : vector<4x32xf32>
    %122 = vector.extract_strided_slice %102 {offsets = [0, 64], sizes = [4, 32], strides = [1, 1]} : vector<4x96xf32> to vector<4x32xf32>
    %123 = vector.extract_strided_slice %105 {offsets = [0, 64], sizes = [4, 32], strides = [1, 1]} : vector<4x96xf32> to vector<4x32xf32>
    %124 = arith.mulf %113, %123 : vector<4x32xf32>
    %125 = arith.addf %122, %124 : vector<4x32xf32>
    %126 = math.tanh %125 : vector<4x32xf32>
    %cst_76 = arith.constant 1.000000e+00 : f32
    %127 = vector.broadcast %cst_76 : f32 to vector<4x32xf32>
    %128 = arith.subf %127, %121 : vector<4x32xf32>
    %129 = arith.mulf %128, %126 : vector<4x32xf32>
    %130 = arith.mulf %121, %62 : vector<4x32xf32>
    %131 = arith.addf %129, %130 : vector<4x32xf32>
    %cst_77 = arith.constant dense<0.000000e+00> : vector<4x3xf32>
    %132 = tpu.matmul %131, %8, %cst_77 {dimension_numbers = #tpu.dot_dimension_numbers<[1], [0], [0], [1], [0, 0, 1, 1], [], []>} : vector<4x32xf32>, vector<32x3xf32>, vector<4x3xf32> -> vector<4x3xf32>
    %133 = vector.broadcast %9 : vector<1x3xf32> to vector<4x3xf32>
    %134 = arith.addf %132, %133 : vector<4x3xf32>
    %c0_78 = arith.constant 0 : index
    %c0_79 = arith.constant 0 : index
    %c0_80 = arith.constant 0 : index
    %135 = vector.load %arg4[%c0_78, %c0_79, %c0_80] : memref<8x4x3xf32, #tpu.memory_space<vmem>>, vector<1x4x3xf32>
    %136 = vector.shape_cast %135 : vector<1x4x3xf32> to vector<4x3xf32>
    %137 = arith.addf %134, %136 : vector<4x3xf32>
    %cst_81 = arith.constant 1.000000e+03 : f32
    %138 = vector.broadcast %cst_81 : f32 to vector<4x3xf32>
    %139 = arith.mulf %137, %138 : vector<4x3xf32>
    %cst_82 = arith.constant dense<0xFF800000> : vector<4xf32>
    %140 = vector.multi_reduction <maximumf>, %139, %cst_82 [1] : vector<4x3xf32> to vector<4xf32>
    %141 = vector.shape_cast %140 : vector<4xf32> to vector<4x1xf32>
    %142 = vector.broadcast %141 : vector<4x1xf32> to vector<4x3xf32>
    %143 = arith.subf %139, %142 : vector<4x3xf32>
    %144 = math.exp %143 : vector<4x3xf32>
    %cst_83 = arith.constant dense<0.000000e+00> : vector<4xf32>
    %145 = vector.multi_reduction <add>, %144, %cst_83 [1] : vector<4x3xf32> to vector<4xf32>
    %146 = vector.shape_cast %145 : vector<4xf32> to vector<4x1xf32>
    %147 = tpu.reciprocal %146 {approx = true} : vector<4x1xf32> -> vector<4x1xf32>
    %148 = vector.broadcast %147 : vector<4x1xf32> to vector<4x3xf32>
    %149 = arith.mulf %144, %148 : vector<4x3xf32>
    %150 = vector.extract_strided_slice %149 {offsets = [0, 0], sizes = [4, 1], strides = [1, 1]} : vector<4x3xf32> to vector<4x1xf32>
    %151 = vector.extract_strided_slice %149 {offsets = [0, 1], sizes = [4, 1], strides = [1, 1]} : vector<4x3xf32> to vector<4x1xf32>
    %152 = vector.extract_strided_slice %149 {offsets = [0, 2], sizes = [4, 1], strides = [1, 1]} : vector<4x3xf32> to vector<4x1xf32>
    %cst_84 = arith.constant dense<0.000000e+00> : vector<4x96xf32>
    %153 = tpu.matmul %131, %10, %cst_84 {dimension_numbers = #tpu.dot_dimension_numbers<[1], [0], [0], [1], [0, 0, 1, 1], [], []>} : vector<4x32xf32>, vector<32x96xf32>, vector<4x96xf32> -> vector<4x96xf32>
    %154 = vector.extract_strided_slice %153 {offsets = [0, 0], sizes = [4, 32], strides = [1, 1]} : vector<4x96xf32> to vector<4x32xf32>
    %155 = vector.broadcast %14 : vector<1x32xf32> to vector<4x32xf32>
    %156 = arith.addf %154, %155 : vector<4x32xf32>
    %157 = vector.broadcast %150 : vector<4x1xf32> to vector<4x32xf32>
    %158 = arith.mulf %157, %156 : vector<4x32xf32>
    %159 = vector.extract_strided_slice %153 {offsets = [0, 32], sizes = [4, 32], strides = [1, 1]} : vector<4x96xf32> to vector<4x32xf32>
    %160 = vector.broadcast %16 : vector<1x32xf32> to vector<4x32xf32>
    %161 = arith.addf %159, %160 : vector<4x32xf32>
    %162 = vector.broadcast %151 : vector<4x1xf32> to vector<4x32xf32>
    %163 = arith.mulf %162, %161 : vector<4x32xf32>
    %164 = arith.addf %158, %163 : vector<4x32xf32>
    %165 = vector.extract_strided_slice %153 {offsets = [0, 64], sizes = [4, 32], strides = [1, 1]} : vector<4x96xf32> to vector<4x32xf32>
    %166 = vector.broadcast %18 : vector<1x32xf32> to vector<4x32xf32>
    %167 = arith.addf %165, %166 : vector<4x32xf32>
    %168 = vector.broadcast %152 : vector<4x1xf32> to vector<4x32xf32>
    %169 = arith.mulf %168, %167 : vector<4x32xf32>
    %170 = arith.addf %164, %169 : vector<4x32xf32>
    %cst_85 = arith.constant dense<0.000000e+00> : vector<4x128xf32>
    %171 = tpu.matmul %170, %11, %cst_85 {dimension_numbers = #tpu.dot_dimension_numbers<[1], [0], [0], [1], [0, 0, 1, 1], [], []>} : vector<4x32xf32>, vector<32x128xf32>, vector<4x128xf32> -> vector<4x128xf32>
    %172 = vector.broadcast %12 : vector<1x128xf32> to vector<4x128xf32>
    %173 = arith.addf %171, %172 : vector<4x128xf32>
    %c0_86 = arith.constant 0 : index
    %c0_87 = arith.constant 0 : index
    %c0_88 = arith.constant 0 : index
    %174 = vector.load %arg18[%c0_86, %c0_87, %c0_88] : memref<4x8x128xf32, #tpu.memory_space<vmem>>, vector<4x1x128xf32>
    %175 = vector.shape_cast %174 : vector<4x1x128xf32> to vector<4x128xf32>
    %176 = vector.shape_cast %173 : vector<4x128xf32> to vector<4x1x128xf32>
    tpu.vector_store %arg18[%c0_86, %c0_87, %c0_88], %176 {strides = array<i32>} : memref<4x8x128xf32, #tpu.memory_space<vmem>>, vector<4x1x128xf32>,
    %177 = vector.broadcast %150 : vector<4x1xf32> to vector<4x32xf32>
    %178 = arith.mulf %177, %44 : vector<4x32xf32>
    %179 = vector.broadcast %151 : vector<4x1xf32> to vector<4x32xf32>
    %180 = arith.mulf %179, %47 : vector<4x32xf32>
    %181 = arith.addf %178, %180 : vector<4x32xf32>
    %182 = vector.broadcast %152 : vector<4x1xf32> to vector<4x32xf32>
    %183 = arith.mulf %182, %50 : vector<4x32xf32>
    %184 = arith.addf %181, %183 : vector<4x32xf32>
    %185 = vector.broadcast %150 : vector<4x1xf32> to vector<4x32xf32>
    %186 = arith.mulf %185, %53 : vector<4x32xf32>
    %187 = vector.broadcast %151 : vector<4x1xf32> to vector<4x32xf32>
    %188 = arith.mulf %187, %56 : vector<4x32xf32>
    %189 = arith.addf %186, %188 : vector<4x32xf32>
    %190 = vector.broadcast %152 : vector<4x1xf32> to vector<4x32xf32>
    %191 = arith.mulf %190, %60 : vector<4x32xf32>
    %192 = arith.addf %189, %191 : vector<4x32xf32>
    %193 = arith.addf %184, %192 : vector<4x32xf32>
    %cst_89 = arith.constant dense<0.000000e+00> : vector<4x96xf32>
    %194 = tpu.matmul %193, %26, %cst_89 {dimension_numbers = #tpu.dot_dimension_numbers<[1], [0], [0], [1], [0, 0, 1, 1], [], []>} : vector<4x32xf32>, vector<32x96xf32>, vector<4x96xf32> -> vector<4x96xf32>
    %195 = vector.broadcast %34 : vector<1x96xf32> to vector<4x96xf32>
    %196 = arith.addf %194, %195 : vector<4x96xf32>
    %cst_90 = arith.constant dense<0.000000e+00> : vector<4x96xf32>
    %197 = tpu.matmul %99, %30, %cst_90 {dimension_numbers = #tpu.dot_dimension_numbers<[1], [0], [0], [1], [0, 0, 1, 1], [], []>} : vector<4x32xf32>, vector<32x96xf32>, vector<4x96xf32> -> vector<4x96xf32>
    %198 = vector.broadcast %38 : vector<1x96xf32> to vector<4x96xf32>
    %199 = arith.addf %197, %198 : vector<4x96xf32>
    %200 = vector.extract_strided_slice %196 {offsets = [0, 0], sizes = [4, 32], strides = [1, 1]} : vector<4x96xf32> to vector<4x32xf32>
    %201 = vector.extract_strided_slice %199 {offsets = [0, 0], sizes = [4, 32], strides = [1, 1]} : vector<4x96xf32> to vector<4x32xf32>
    %202 = arith.addf %200, %201 : vector<4x32xf32>
    %203 = arith.negf %202 : vector<4x32xf32>
    %204 = math.exp %203 : vector<4x32xf32>
    %cst_91 = arith.constant 1.000000e+00 : f32
    %205 = vector.broadcast %cst_91 : f32 to vector<4x32xf32>
    %206 = arith.addf %205, %204 : vector<4x32xf32>
    %207 = arith.divf %205, %206 : vector<4x32xf32>
    %208 = vector.extract_strided_slice %196 {offsets = [0, 32], sizes = [4, 32], strides = [1, 1]} : vector<4x96xf32> to vector<4x32xf32>
    %209 = vector.extract_strided_slice %199 {offsets = [0, 32], sizes = [4, 32], strides = [1, 1]} : vector<4x96xf32> to vector<4x32xf32>
    %210 = arith.addf %208, %209 : vector<4x32xf32>
    %211 = arith.negf %210 : vector<4x32xf32>
    %212 = math.exp %211 : vector<4x32xf32>
    %cst_92 = arith.constant 1.000000e+00 : f32
    %213 = vector.broadcast %cst_92 : f32 to vector<4x32xf32>
    %214 = arith.addf %213, %212 : vector<4x32xf32>
    %215 = arith.divf %213, %214 : vector<4x32xf32>
    %216 = vector.extract_strided_slice %196 {offsets = [0, 64], sizes = [4, 32], strides = [1, 1]} : vector<4x96xf32> to vector<4x32xf32>
    %217 = vector.extract_strided_slice %199 {offsets = [0, 64], sizes = [4, 32], strides = [1, 1]} : vector<4x96xf32> to vector<4x32xf32>
    %218 = arith.mulf %207, %217 : vector<4x32xf32>
    %219 = arith.addf %216, %218 : vector<4x32xf32>
    %220 = math.tanh %219 : vector<4x32xf32>
    %cst_93 = arith.constant 1.000000e+00 : f32
    %221 = vector.broadcast %cst_93 : f32 to vector<4x32xf32>
    %222 = arith.subf %221, %215 : vector<4x32xf32>
    %223 = arith.mulf %222, %220 : vector<4x32xf32>
    %224 = arith.mulf %215, %99 : vector<4x32xf32>
    %225 = arith.addf %223, %224 : vector<4x32xf32>
    %cst_94 = arith.constant dense<0.000000e+00> : vector<4x96xf32>
    %226 = tpu.matmul %225, %28, %cst_94 {dimension_numbers = #tpu.dot_dimension_numbers<[1], [0], [0], [1], [0, 0, 1, 1], [], []>} : vector<4x32xf32>, vector<32x96xf32>, vector<4x96xf32> -> vector<4x96xf32>
    %227 = vector.broadcast %36 : vector<1x96xf32> to vector<4x96xf32>
    %228 = arith.addf %226, %227 : vector<4x96xf32>
    %cst_95 = arith.constant dense<0.000000e+00> : vector<4x96xf32>
    %229 = tpu.matmul %131, %32, %cst_95 {dimension_numbers = #tpu.dot_dimension_numbers<[1], [0], [0], [1], [0, 0, 1, 1], [], []>} : vector<4x32xf32>, vector<32x96xf32>, vector<4x96xf32> -> vector<4x96xf32>
    %230 = vector.broadcast %40 : vector<1x96xf32> to vector<4x96xf32>
    %231 = arith.addf %229, %230 : vector<4x96xf32>
    %232 = vector.extract_strided_slice %228 {offsets = [0, 0], sizes = [4, 32], strides = [1, 1]} : vector<4x96xf32> to vector<4x32xf32>
    %233 = vector.extract_strided_slice %231 {offsets = [0, 0], sizes = [4, 32], strides = [1, 1]} : vector<4x96xf32> to vector<4x32xf32>
    %234 = arith.addf %232, %233 : vector<4x32xf32>
    %235 = arith.negf %234 : vector<4x32xf32>
    %236 = math.exp %235 : vector<4x32xf32>
    %cst_96 = arith.constant 1.000000e+00 : f32
    %237 = vector.broadcast %cst_96 : f32 to vector<4x32xf32>
    %238 = arith.addf %237, %236 : vector<4x32xf32>
    %239 = arith.divf %237, %238 : vector<4x32xf32>
    %240 = vector.extract_strided_slice %228 {offsets = [0, 32], sizes = [4, 32], strides = [1, 1]} : vector<4x96xf32> to vector<4x32xf32>
    %241 = vector.extract_strided_slice %231 {offsets = [0, 32], sizes = [4, 32], strides = [1, 1]} : vector<4x96xf32> to vector<4x32xf32>
    %242 = arith.addf %240, %241 : vector<4x32xf32>
    %243 = arith.negf %242 : vector<4x32xf32>
    %244 = math.exp %243 : vector<4x32xf32>
    %cst_97 = arith.constant 1.000000e+00 : f32
    %245 = vector.broadcast %cst_97 : f32 to vector<4x32xf32>
    %246 = arith.addf %245, %244 : vector<4x32xf32>
    %247 = arith.divf %245, %246 : vector<4x32xf32>
    %248 = vector.extract_strided_slice %228 {offsets = [0, 64], sizes = [4, 32], strides = [1, 1]} : vector<4x96xf32> to vector<4x32xf32>
    %249 = vector.extract_strided_slice %231 {offsets = [0, 64], sizes = [4, 32], strides = [1, 1]} : vector<4x96xf32> to vector<4x32xf32>
    %250 = arith.mulf %239, %249 : vector<4x32xf32>
    %251 = arith.addf %248, %250 : vector<4x32xf32>
    %252 = math.tanh %251 : vector<4x32xf32>
    %cst_98 = arith.constant 1.000000e+00 : f32
    %253 = vector.broadcast %cst_98 : f32 to vector<4x32xf32>
    %254 = arith.subf %253, %247 : vector<4x32xf32>
    %255 = arith.mulf %254, %252 : vector<4x32xf32>
    %256 = arith.mulf %247, %131 : vector<4x32xf32>
    %257 = arith.addf %255, %256 : vector<4x32xf32>
    %cst_99 = arith.constant dense<0.000000e+00> : vector<4x3xf32>
    %258 = tpu.matmul %257, %8, %cst_99 {dimension_numbers = #tpu.dot_dimension_numbers<[1], [0], [0], [1], [0, 0, 1, 1], [], []>} : vector<4x32xf32>, vector<32x3xf32>, vector<4x3xf32> -> vector<4x3xf32>
    %259 = vector.broadcast %9 : vector<1x3xf32> to vector<4x3xf32>
    %260 = arith.addf %258, %259 : vector<4x3xf32>
    %c1_100 = arith.constant 1 : index
    %c0_101 = arith.constant 0 : index
    %c0_102 = arith.constant 0 : index
    %261 = vector.load %arg4[%c1_100, %c0_101, %c0_102] : memref<8x4x3xf32, #tpu.memory_space<vmem>>, vector<1x4x3xf32>
    %262 = vector.shape_cast %261 : vector<1x4x3xf32> to vector<4x3xf32>
    %263 = arith.addf %260, %262 : vector<4x3xf32>
    %cst_103 = arith.constant 1.000000e+03 : f32
    %264 = vector.broadcast %cst_103 : f32 to vector<4x3xf32>
    %265 = arith.mulf %263, %264 : vector<4x3xf32>
    %cst_104 = arith.constant dense<0xFF800000> : vector<4xf32>
    %266 = vector.multi_reduction <maximumf>, %265, %cst_104 [1] : vector<4x3xf32> to vector<4xf32>
    %267 = vector.shape_cast %266 : vector<4xf32> to vector<4x1xf32>
    %268 = vector.broadcast %267 : vector<4x1xf32> to vector<4x3xf32>
    %269 = arith.subf %265, %268 : vector<4x3xf32>
    %270 = math.exp %269 : vector<4x3xf32>
    %cst_105 = arith.constant dense<0.000000e+00> : vector<4xf32>
    %271 = vector.multi_reduction <add>, %270, %cst_105 [1] : vector<4x3xf32> to vector<4xf32>
    %272 = vector.shape_cast %271 : vector<4xf32> to vector<4x1xf32>
    %273 = tpu.reciprocal %272 {approx = true} : vector<4x1xf32> -> vector<4x1xf32>
    %274 = vector.broadcast %273 : vector<4x1xf32> to vector<4x3xf32>
    %275 = arith.mulf %270, %274 : vector<4x3xf32>
    %276 = vector.extract_strided_slice %275 {offsets = [0, 0], sizes = [4, 1], strides = [1, 1]} : vector<4x3xf32> to vector<4x1xf32>
    %277 = vector.extract_strided_slice %275 {offsets = [0, 1], sizes = [4, 1], strides = [1, 1]} : vector<4x3xf32> to vector<4x1xf32>
    %278 = vector.extract_strided_slice %275 {offsets = [0, 2], sizes = [4, 1], strides = [1, 1]} : vector<4x3xf32> to vector<4x1xf32>
    %cst_106 = arith.constant dense<0.000000e+00> : vector<4x96xf32>
    %279 = tpu.matmul %257, %10, %cst_106 {dimension_numbers = #tpu.dot_dimension_numbers<[1], [0], [0], [1], [0, 0, 1, 1], [], []>} : vector<4x32xf32>, vector<32x96xf32>, vector<4x96xf32> -> vector<4x96xf32>
    %280 = vector.extract_strided_slice %279 {offsets = [0, 0], sizes = [4, 32], strides = [1, 1]} : vector<4x96xf32> to vector<4x32xf32>
    %281 = vector.broadcast %14 : vector<1x32xf32> to vector<4x32xf32>
    %282 = arith.addf %280, %281 : vector<4x32xf32>
    %283 = vector.broadcast %276 : vector<4x1xf32> to vector<4x32xf32>
    %284 = arith.mulf %283, %282 : vector<4x32xf32>
    %285 = vector.extract_strided_slice %279 {offsets = [0, 32], sizes = [4, 32], strides = [1, 1]} : vector<4x96xf32> to vector<4x32xf32>
    %286 = vector.broadcast %16 : vector<1x32xf32> to vector<4x32xf32>
    %287 = arith.addf %285, %286 : vector<4x32xf32>
    %288 = vector.broadcast %277 : vector<4x1xf32> to vector<4x32xf32>
    %289 = arith.mulf %288, %287 : vector<4x32xf32>
    %290 = arith.addf %284, %289 : vector<4x32xf32>
    %291 = vector.extract_strided_slice %279 {offsets = [0, 64], sizes = [4, 32], strides = [1, 1]} : vector<4x96xf32> to vector<4x32xf32>
    %292 = vector.broadcast %18 : vector<1x32xf32> to vector<4x32xf32>
    %293 = arith.addf %291, %292 : vector<4x32xf32>
    %294 = vector.broadcast %278 : vector<4x1xf32> to vector<4x32xf32>
    %295 = arith.mulf %294, %293 : vector<4x32xf32>
    %296 = arith.addf %290, %295 : vector<4x32xf32>
    %cst_107 = arith.constant dense<0.000000e+00> : vector<4x128xf32>
    %297 = tpu.matmul %296, %11, %cst_107 {dimension_numbers = #tpu.dot_dimension_numbers<[1], [0], [0], [1], [0, 0, 1, 1], [], []>} : vector<4x32xf32>, vector<32x128xf32>, vector<4x128xf32> -> vector<4x128xf32>
    %298 = vector.broadcast %12 : vector<1x128xf32> to vector<4x128xf32>
    %299 = arith.addf %297, %298 : vector<4x128xf32>
    %c0_108 = arith.constant 0 : index
    %c1_109 = arith.constant 1 : index
    %c0_110 = arith.constant 0 : index
    %300 = vector.load %arg18[%c0_108, %c1_109, %c0_110] : memref<4x8x128xf32, #tpu.memory_space<vmem>>, vector<4x1x128xf32>
    %301 = vector.shape_cast %300 : vector<4x1x128xf32> to vector<4x128xf32>
    %302 = vector.shape_cast %299 : vector<4x128xf32> to vector<4x1x128xf32>
    tpu.vector_store %arg18[%c0_108, %c1_109, %c0_110], %302 {strides = array<i32>} : memref<4x8x128xf32, #tpu.memory_space<vmem>>, vector<4x1x128xf32>,
    %303 = vector.broadcast %276 : vector<4x1xf32> to vector<4x32xf32>
    %304 = arith.mulf %303, %44 : vector<4x32xf32>
    %305 = vector.broadcast %277 : vector<4x1xf32> to vector<4x32xf32>
    %306 = arith.mulf %305, %47 : vector<4x32xf32>
    %307 = arith.addf %304, %306 : vector<4x32xf32>
    %308 = vector.broadcast %278 : vector<4x1xf32> to vector<4x32xf32>
    %309 = arith.mulf %308, %50 : vector<4x32xf32>
    %310 = arith.addf %307, %309 : vector<4x32xf32>
    %311 = vector.broadcast %276 : vector<4x1xf32> to vector<4x32xf32>
    %312 = arith.mulf %311, %53 : vector<4x32xf32>
    %313 = vector.broadcast %277 : vector<4x1xf32> to vector<4x32xf32>
    %314 = arith.mulf %313, %56 : vector<4x32xf32>
    %315 = arith.addf %312, %314 : vector<4x32xf32>
    %316 = vector.broadcast %278 : vector<4x1xf32> to vector<4x32xf32>
    %317 = arith.mulf %316, %60 : vector<4x32xf32>
    %318 = arith.addf %315, %317 : vector<4x32xf32>
    %319 = arith.addf %310, %318 : vector<4x32xf32>
    %cst_111 = arith.constant dense<0.000000e+00> : vector<4x96xf32>
    %320 = tpu.matmul %319, %26, %cst_111 {dimension_numbers = #tpu.dot_dimension_numbers<[1], [0], [0], [1], [0, 0, 1, 1], [], []>} : vector<4x32xf32>, vector<32x96xf32>, vector<4x96xf32> -> vector<4x96xf32>
    %321 = vector.broadcast %34 : vector<1x96xf32> to vector<4x96xf32>
    %322 = arith.addf %320, %321 : vector<4x96xf32>
    %cst_112 = arith.constant dense<0.000000e+00> : vector<4x96xf32>
    %323 = tpu.matmul %225, %30, %cst_112 {dimension_numbers = #tpu.dot_dimension_numbers<[1], [0], [0], [1], [0, 0, 1, 1], [], []>} : vector<4x32xf32>, vector<32x96xf32>, vector<4x96xf32> -> vector<4x96xf32>
    %324 = vector.broadcast %38 : vector<1x96xf32> to vector<4x96xf32>
    %325 = arith.addf %323, %324 : vector<4x96xf32>
    %326 = vector.extract_strided_slice %322 {offsets = [0, 0], sizes = [4, 32], strides = [1, 1]} : vector<4x96xf32> to vector<4x32xf32>
    %327 = vector.extract_strided_slice %325 {offsets = [0, 0], sizes = [4, 32], strides = [1, 1]} : vector<4x96xf32> to vector<4x32xf32>
    %328 = arith.addf %326, %327 : vector<4x32xf32>
    %329 = arith.negf %328 : vector<4x32xf32>
    %330 = math.exp %329 : vector<4x32xf32>
    %cst_113 = arith.constant 1.000000e+00 : f32
    %331 = vector.broadcast %cst_113 : f32 to vector<4x32xf32>
    %332 = arith.addf %331, %330 : vector<4x32xf32>
    %333 = arith.divf %331, %332 : vector<4x32xf32>
    %334 = vector.extract_strided_slice %322 {offsets = [0, 32], sizes = [4, 32], strides = [1, 1]} : vector<4x96xf32> to vector<4x32xf32>
    %335 = vector.extract_strided_slice %325 {offsets = [0, 32], sizes = [4, 32], strides = [1, 1]} : vector<4x96xf32> to vector<4x32xf32>
    %336 = arith.addf %334, %335 : vector<4x32xf32>
    %337 = arith.negf %336 : vector<4x32xf32>
    %338 = math.exp %337 : vector<4x32xf32>
    %cst_114 = arith.constant 1.000000e+00 : f32
    %339 = vector.broadcast %cst_114 : f32 to vector<4x32xf32>
    %340 = arith.addf %339, %338 : vector<4x32xf32>
    %341 = arith.divf %339, %340 : vector<4x32xf32>
    %342 = vector.extract_strided_slice %322 {offsets = [0, 64], sizes = [4, 32], strides = [1, 1]} : vector<4x96xf32> to vector<4x32xf32>
    %343 = vector.extract_strided_slice %325 {offsets = [0, 64], sizes = [4, 32], strides = [1, 1]} : vector<4x96xf32> to vector<4x32xf32>
    %344 = arith.mulf %333, %343 : vector<4x32xf32>
    %345 = arith.addf %342, %344 : vector<4x32xf32>
    %346 = math.tanh %345 : vector<4x32xf32>
    %cst_115 = arith.constant 1.000000e+00 : f32
    %347 = vector.broadcast %cst_115 : f32 to vector<4x32xf32>
    %348 = arith.subf %347, %341 : vector<4x32xf32>
    %349 = arith.mulf %348, %346 : vector<4x32xf32>
    %350 = arith.mulf %341, %225 : vector<4x32xf32>
    %351 = arith.addf %349, %350 : vector<4x32xf32>
    %cst_116 = arith.constant dense<0.000000e+00> : vector<4x96xf32>
    %352 = tpu.matmul %351, %28, %cst_116 {dimension_numbers = #tpu.dot_dimension_numbers<[1], [0], [0], [1], [0, 0, 1, 1], [], []>} : vector<4x32xf32>, vector<32x96xf32>, vector<4x96xf32> -> vector<4x96xf32>
    %353 = vector.broadcast %36 : vector<1x96xf32> to vector<4x96xf32>
    %354 = arith.addf %352, %353 : vector<4x96xf32>
    %cst_117 = arith.constant dense<0.000000e+00> : vector<4x96xf32>
    %355 = tpu.matmul %257, %32, %cst_117 {dimension_numbers = #tpu.dot_dimension_numbers<[1], [0], [0], [1], [0, 0, 1, 1], [], []>} : vector<4x32xf32>, vector<32x96xf32>, vector<4x96xf32> -> vector<4x96xf32>
    %356 = vector.broadcast %40 : vector<1x96xf32> to vector<4x96xf32>
    %357 = arith.addf %355, %356 : vector<4x96xf32>
    %358 = vector.extract_strided_slice %354 {offsets = [0, 0], sizes = [4, 32], strides = [1, 1]} : vector<4x96xf32> to vector<4x32xf32>
    %359 = vector.extract_strided_slice %357 {offsets = [0, 0], sizes = [4, 32], strides = [1, 1]} : vector<4x96xf32> to vector<4x32xf32>
    %360 = arith.addf %358, %359 : vector<4x32xf32>
    %361 = arith.negf %360 : vector<4x32xf32>
    %362 = math.exp %361 : vector<4x32xf32>
    %cst_118 = arith.constant 1.000000e+00 : f32
    %363 = vector.broadcast %cst_118 : f32 to vector<4x32xf32>
    %364 = arith.addf %363, %362 : vector<4x32xf32>
    %365 = arith.divf %363, %364 : vector<4x32xf32>
    %366 = vector.extract_strided_slice %354 {offsets = [0, 32], sizes = [4, 32], strides = [1, 1]} : vector<4x96xf32> to vector<4x32xf32>
    %367 = vector.extract_strided_slice %357 {offsets = [0, 32], sizes = [4, 32], strides = [1, 1]} : vector<4x96xf32> to vector<4x32xf32>
    %368 = arith.addf %366, %367 : vector<4x32xf32>
    %369 = arith.negf %368 : vector<4x32xf32>
    %370 = math.exp %369 : vector<4x32xf32>
    %cst_119 = arith.constant 1.000000e+00 : f32
    %371 = vector.broadcast %cst_119 : f32 to vector<4x32xf32>
    %372 = arith.addf %371, %370 : vector<4x32xf32>
    %373 = arith.divf %371, %372 : vector<4x32xf32>
    %374 = vector.extract_strided_slice %354 {offsets = [0, 64], sizes = [4, 32], strides = [1, 1]} : vector<4x96xf32> to vector<4x32xf32>
    %375 = vector.extract_strided_slice %357 {offsets = [0, 64], sizes = [4, 32], strides = [1, 1]} : vector<4x96xf32> to vector<4x32xf32>
    %376 = arith.mulf %365, %375 : vector<4x32xf32>
    %377 = arith.addf %374, %376 : vector<4x32xf32>
    %378 = math.tanh %377 : vector<4x32xf32>
    %cst_120 = arith.constant 1.000000e+00 : f32
    %379 = vector.broadcast %cst_120 : f32 to vector<4x32xf32>
    %380 = arith.subf %379, %373 : vector<4x32xf32>
    %381 = arith.mulf %380, %378 : vector<4x32xf32>
    %382 = arith.mulf %373, %257 : vector<4x32xf32>
    %383 = arith.addf %381, %382 : vector<4x32xf32>
    %cst_121 = arith.constant dense<0.000000e+00> : vector<4x3xf32>
    %384 = tpu.matmul %383, %8, %cst_121 {dimension_numbers = #tpu.dot_dimension_numbers<[1], [0], [0], [1], [0, 0, 1, 1], [], []>} : vector<4x32xf32>, vector<32x3xf32>, vector<4x3xf32> -> vector<4x3xf32>
    %385 = vector.broadcast %9 : vector<1x3xf32> to vector<4x3xf32>
    %386 = arith.addf %384, %385 : vector<4x3xf32>
    %c2_122 = arith.constant 2 : index
    %c0_123 = arith.constant 0 : index
    %c0_124 = arith.constant 0 : index
    %387 = vector.load %arg4[%c2_122, %c0_123, %c0_124] : memref<8x4x3xf32, #tpu.memory_space<vmem>>, vector<1x4x3xf32>
    %388 = vector.shape_cast %387 : vector<1x4x3xf32> to vector<4x3xf32>
    %389 = arith.addf %386, %388 : vector<4x3xf32>
    %cst_125 = arith.constant 1.000000e+03 : f32
    %390 = vector.broadcast %cst_125 : f32 to vector<4x3xf32>
    %391 = arith.mulf %389, %390 : vector<4x3xf32>
    %cst_126 = arith.constant dense<0xFF800000> : vector<4xf32>
    %392 = vector.multi_reduction <maximumf>, %391, %cst_126 [1] : vector<4x3xf32> to vector<4xf32>
    %393 = vector.shape_cast %392 : vector<4xf32> to vector<4x1xf32>
    %394 = vector.broadcast %393 : vector<4x1xf32> to vector<4x3xf32>
    %395 = arith.subf %391, %394 : vector<4x3xf32>
    %396 = math.exp %395 : vector<4x3xf32>
    %cst_127 = arith.constant dense<0.000000e+00> : vector<4xf32>
    %397 = vector.multi_reduction <add>, %396, %cst_127 [1] : vector<4x3xf32> to vector<4xf32>
    %398 = vector.shape_cast %397 : vector<4xf32> to vector<4x1xf32>
    %399 = tpu.reciprocal %398 {approx = true} : vector<4x1xf32> -> vector<4x1xf32>
    %400 = vector.broadcast %399 : vector<4x1xf32> to vector<4x3xf32>
    %401 = arith.mulf %396, %400 : vector<4x3xf32>
    %402 = vector.extract_strided_slice %401 {offsets = [0, 0], sizes = [4, 1], strides = [1, 1]} : vector<4x3xf32> to vector<4x1xf32>
    %403 = vector.extract_strided_slice %401 {offsets = [0, 1], sizes = [4, 1], strides = [1, 1]} : vector<4x3xf32> to vector<4x1xf32>
    %404 = vector.extract_strided_slice %401 {offsets = [0, 2], sizes = [4, 1], strides = [1, 1]} : vector<4x3xf32> to vector<4x1xf32>
    %cst_128 = arith.constant dense<0.000000e+00> : vector<4x96xf32>
    %405 = tpu.matmul %383, %10, %cst_128 {dimension_numbers = #tpu.dot_dimension_numbers<[1], [0], [0], [1], [0, 0, 1, 1], [], []>} : vector<4x32xf32>, vector<32x96xf32>, vector<4x96xf32> -> vector<4x96xf32>
    %406 = vector.extract_strided_slice %405 {offsets = [0, 0], sizes = [4, 32], strides = [1, 1]} : vector<4x96xf32> to vector<4x32xf32>
    %407 = vector.broadcast %14 : vector<1x32xf32> to vector<4x32xf32>
    %408 = arith.addf %406, %407 : vector<4x32xf32>
    %409 = vector.broadcast %402 : vector<4x1xf32> to vector<4x32xf32>
    %410 = arith.mulf %409, %408 : vector<4x32xf32>
    %411 = vector.extract_strided_slice %405 {offsets = [0, 32], sizes = [4, 32], strides = [1, 1]} : vector<4x96xf32> to vector<4x32xf32>
    %412 = vector.broadcast %16 : vector<1x32xf32> to vector<4x32xf32>
    %413 = arith.addf %411, %412 : vector<4x32xf32>
    %414 = vector.broadcast %403 : vector<4x1xf32> to vector<4x32xf32>
    %415 = arith.mulf %414, %413 : vector<4x32xf32>
    %416 = arith.addf %410, %415 : vector<4x32xf32>
    %417 = vector.extract_strided_slice %405 {offsets = [0, 64], sizes = [4, 32], strides = [1, 1]} : vector<4x96xf32> to vector<4x32xf32>
    %418 = vector.broadcast %18 : vector<1x32xf32> to vector<4x32xf32>
    %419 = arith.addf %417, %418 : vector<4x32xf32>
    %420 = vector.broadcast %404 : vector<4x1xf32> to vector<4x32xf32>
    %421 = arith.mulf %420, %419 : vector<4x32xf32>
    %422 = arith.addf %416, %421 : vector<4x32xf32>
    %cst_129 = arith.constant dense<0.000000e+00> : vector<4x128xf32>
    %423 = tpu.matmul %422, %11, %cst_129 {dimension_numbers = #tpu.dot_dimension_numbers<[1], [0], [0], [1], [0, 0, 1, 1], [], []>} : vector<4x32xf32>, vector<32x128xf32>, vector<4x128xf32> -> vector<4x128xf32>
    %424 = vector.broadcast %12 : vector<1x128xf32> to vector<4x128xf32>
    %425 = arith.addf %423, %424 : vector<4x128xf32>
    %c0_130 = arith.constant 0 : index
    %c2_131 = arith.constant 2 : index
    %c0_132 = arith.constant 0 : index
    %426 = vector.load %arg18[%c0_130, %c2_131, %c0_132] : memref<4x8x128xf32, #tpu.memory_space<vmem>>, vector<4x1x128xf32>
    %427 = vector.shape_cast %426 : vector<4x1x128xf32> to vector<4x128xf32>
    %428 = vector.shape_cast %425 : vector<4x128xf32> to vector<4x1x128xf32>
    tpu.vector_store %arg18[%c0_130, %c2_131, %c0_132], %428 {strides = array<i32>} : memref<4x8x128xf32, #tpu.memory_space<vmem>>, vector<4x1x128xf32>,
    %429 = vector.broadcast %402 : vector<4x1xf32> to vector<4x32xf32>
    %430 = arith.mulf %429, %44 : vector<4x32xf32>
    %431 = vector.broadcast %403 : vector<4x1xf32> to vector<4x32xf32>
    %432 = arith.mulf %431, %47 : vector<4x32xf32>
    %433 = arith.addf %430, %432 : vector<4x32xf32>
    %434 = vector.broadcast %404 : vector<4x1xf32> to vector<4x32xf32>
    %435 = arith.mulf %434, %50 : vector<4x32xf32>
    %436 = arith.addf %433, %435 : vector<4x32xf32>
    %437 = vector.broadcast %402 : vector<4x1xf32> to vector<4x32xf32>
    %438 = arith.mulf %437, %53 : vector<4x32xf32>
    %439 = vector.broadcast %403 : vector<4x1xf32> to vector<4x32xf32>
    %440 = arith.mulf %439, %56 : vector<4x32xf32>
    %441 = arith.addf %438, %440 : vector<4x32xf32>
    %442 = vector.broadcast %404 : vector<4x1xf32> to vector<4x32xf32>
    %443 = arith.mulf %442, %60 : vector<4x32xf32>
    %444 = arith.addf %441, %443 : vector<4x32xf32>
    %445 = arith.addf %436, %444 : vector<4x32xf32>
    %cst_133 = arith.constant dense<0.000000e+00> : vector<4x96xf32>
    %446 = tpu.matmul %445, %26, %cst_133 {dimension_numbers = #tpu.dot_dimension_numbers<[1], [0], [0], [1], [0, 0, 1, 1], [], []>} : vector<4x32xf32>, vector<32x96xf32>, vector<4x96xf32> -> vector<4x96xf32>
    %447 = vector.broadcast %34 : vector<1x96xf32> to vector<4x96xf32>
    %448 = arith.addf %446, %447 : vector<4x96xf32>
    %cst_134 = arith.constant dense<0.000000e+00> : vector<4x96xf32>
    %449 = tpu.matmul %351, %30, %cst_134 {dimension_numbers = #tpu.dot_dimension_numbers<[1], [0], [0], [1], [0, 0, 1, 1], [], []>} : vector<4x32xf32>, vector<32x96xf32>, vector<4x96xf32> -> vector<4x96xf32>
    %450 = vector.broadcast %38 : vector<1x96xf32> to vector<4x96xf32>
    %451 = arith.addf %449, %450 : vector<4x96xf32>
    %452 = vector.extract_strided_slice %448 {offsets = [0, 0], sizes = [4, 32], strides = [1, 1]} : vector<4x96xf32> to vector<4x32xf32>
    %453 = vector.extract_strided_slice %451 {offsets = [0, 0], sizes = [4, 32], strides = [1, 1]} : vector<4x96xf32> to vector<4x32xf32>
    %454 = arith.addf %452, %453 : vector<4x32xf32>
    %455 = arith.negf %454 : vector<4x32xf32>
    %456 = math.exp %455 : vector<4x32xf32>
    %cst_135 = arith.constant 1.000000e+00 : f32
    %457 = vector.broadcast %cst_135 : f32 to vector<4x32xf32>
    %458 = arith.addf %457, %456 : vector<4x32xf32>
    %459 = arith.divf %457, %458 : vector<4x32xf32>
    %460 = vector.extract_strided_slice %448 {offsets = [0, 32], sizes = [4, 32], strides = [1, 1]} : vector<4x96xf32> to vector<4x32xf32>
    %461 = vector.extract_strided_slice %451 {offsets = [0, 32], sizes = [4, 32], strides = [1, 1]} : vector<4x96xf32> to vector<4x32xf32>
    %462 = arith.addf %460, %461 : vector<4x32xf32>
    %463 = arith.negf %462 : vector<4x32xf32>
    %464 = math.exp %463 : vector<4x32xf32>
    %cst_136 = arith.constant 1.000000e+00 : f32
    %465 = vector.broadcast %cst_136 : f32 to vector<4x32xf32>
    %466 = arith.addf %465, %464 : vector<4x32xf32>
    %467 = arith.divf %465, %466 : vector<4x32xf32>
    %468 = vector.extract_strided_slice %448 {offsets = [0, 64], sizes = [4, 32], strides = [1, 1]} : vector<4x96xf32> to vector<4x32xf32>
    %469 = vector.extract_strided_slice %451 {offsets = [0, 64], sizes = [4, 32], strides = [1, 1]} : vector<4x96xf32> to vector<4x32xf32>
    %470 = arith.mulf %459, %469 : vector<4x32xf32>
    %471 = arith.addf %468, %470 : vector<4x32xf32>
    %472 = math.tanh %471 : vector<4x32xf32>
    %cst_137 = arith.constant 1.000000e+00 : f32
    %473 = vector.broadcast %cst_137 : f32 to vector<4x32xf32>
    %474 = arith.subf %473, %467 : vector<4x32xf32>
    %475 = arith.mulf %474, %472 : vector<4x32xf32>
    %476 = arith.mulf %467, %351 : vector<4x32xf32>
    %477 = arith.addf %475, %476 : vector<4x32xf32>
    %cst_138 = arith.constant dense<0.000000e+00> : vector<4x96xf32>
    %478 = tpu.matmul %477, %28, %cst_138 {dimension_numbers = #tpu.dot_dimension_numbers<[1], [0], [0], [1], [0, 0, 1, 1], [], []>} : vector<4x32xf32>, vector<32x96xf32>, vector<4x96xf32> -> vector<4x96xf32>
    %479 = vector.broadcast %36 : vector<1x96xf32> to vector<4x96xf32>
    %480 = arith.addf %478, %479 : vector<4x96xf32>
    %cst_139 = arith.constant dense<0.000000e+00> : vector<4x96xf32>
    %481 = tpu.matmul %383, %32, %cst_139 {dimension_numbers = #tpu.dot_dimension_numbers<[1], [0], [0], [1], [0, 0, 1, 1], [], []>} : vector<4x32xf32>, vector<32x96xf32>, vector<4x96xf32> -> vector<4x96xf32>
    %482 = vector.broadcast %40 : vector<1x96xf32> to vector<4x96xf32>
    %483 = arith.addf %481, %482 : vector<4x96xf32>
    %484 = vector.extract_strided_slice %480 {offsets = [0, 0], sizes = [4, 32], strides = [1, 1]} : vector<4x96xf32> to vector<4x32xf32>
    %485 = vector.extract_strided_slice %483 {offsets = [0, 0], sizes = [4, 32], strides = [1, 1]} : vector<4x96xf32> to vector<4x32xf32>
    %486 = arith.addf %484, %485 : vector<4x32xf32>
    %487 = arith.negf %486 : vector<4x32xf32>
    %488 = math.exp %487 : vector<4x32xf32>
    %cst_140 = arith.constant 1.000000e+00 : f32
    %489 = vector.broadcast %cst_140 : f32 to vector<4x32xf32>
    %490 = arith.addf %489, %488 : vector<4x32xf32>
    %491 = arith.divf %489, %490 : vector<4x32xf32>
    %492 = vector.extract_strided_slice %480 {offsets = [0, 32], sizes = [4, 32], strides = [1, 1]} : vector<4x96xf32> to vector<4x32xf32>
    %493 = vector.extract_strided_slice %483 {offsets = [0, 32], sizes = [4, 32], strides = [1, 1]} : vector<4x96xf32> to vector<4x32xf32>
    %494 = arith.addf %492, %493 : vector<4x32xf32>
    %495 = arith.negf %494 : vector<4x32xf32>
    %496 = math.exp %495 : vector<4x32xf32>
    %cst_141 = arith.constant 1.000000e+00 : f32
    %497 = vector.broadcast %cst_141 : f32 to vector<4x32xf32>
    %498 = arith.addf %497, %496 : vector<4x32xf32>
    %499 = arith.divf %497, %498 : vector<4x32xf32>
    %500 = vector.extract_strided_slice %480 {offsets = [0, 64], sizes = [4, 32], strides = [1, 1]} : vector<4x96xf32> to vector<4x32xf32>
    %501 = vector.extract_strided_slice %483 {offsets = [0, 64], sizes = [4, 32], strides = [1, 1]} : vector<4x96xf32> to vector<4x32xf32>
    %502 = arith.mulf %491, %501 : vector<4x32xf32>
    %503 = arith.addf %500, %502 : vector<4x32xf32>
    %504 = math.tanh %503 : vector<4x32xf32>
    %cst_142 = arith.constant 1.000000e+00 : f32
    %505 = vector.broadcast %cst_142 : f32 to vector<4x32xf32>
    %506 = arith.subf %505, %499 : vector<4x32xf32>
    %507 = arith.mulf %506, %504 : vector<4x32xf32>
    %508 = arith.mulf %499, %383 : vector<4x32xf32>
    %509 = arith.addf %507, %508 : vector<4x32xf32>
    %cst_143 = arith.constant dense<0.000000e+00> : vector<4x3xf32>
    %510 = tpu.matmul %509, %8, %cst_143 {dimension_numbers = #tpu.dot_dimension_numbers<[1], [0], [0], [1], [0, 0, 1, 1], [], []>} : vector<4x32xf32>, vector<32x3xf32>, vector<4x3xf32> -> vector<4x3xf32>
    %511 = vector.broadcast %9 : vector<1x3xf32> to vector<4x3xf32>
    %512 = arith.addf %510, %511 : vector<4x3xf32>
    %c3 = arith.constant 3 : index
    %c0_144 = arith.constant 0 : index
    %c0_145 = arith.constant 0 : index
    %513 = vector.load %arg4[%c3, %c0_144, %c0_145] : memref<8x4x3xf32, #tpu.memory_space<vmem>>, vector<1x4x3xf32>
    %514 = vector.shape_cast %513 : vector<1x4x3xf32> to vector<4x3xf32>
    %515 = arith.addf %512, %514 : vector<4x3xf32>
    %cst_146 = arith.constant 1.000000e+03 : f32
    %516 = vector.broadcast %cst_146 : f32 to vector<4x3xf32>
    %517 = arith.mulf %515, %516 : vector<4x3xf32>
    %cst_147 = arith.constant dense<0xFF800000> : vector<4xf32>
    %518 = vector.multi_reduction <maximumf>, %517, %cst_147 [1] : vector<4x3xf32> to vector<4xf32>
    %519 = vector.shape_cast %518 : vector<4xf32> to vector<4x1xf32>
    %520 = vector.broadcast %519 : vector<4x1xf32> to vector<4x3xf32>
    %521 = arith.subf %517, %520 : vector<4x3xf32>
    %522 = math.exp %521 : vector<4x3xf32>
    %cst_148 = arith.constant dense<0.000000e+00> : vector<4xf32>
    %523 = vector.multi_reduction <add>, %522, %cst_148 [1] : vector<4x3xf32> to vector<4xf32>
    %524 = vector.shape_cast %523 : vector<4xf32> to vector<4x1xf32>
    %525 = tpu.reciprocal %524 {approx = true} : vector<4x1xf32> -> vector<4x1xf32>
    %526 = vector.broadcast %525 : vector<4x1xf32> to vector<4x3xf32>
    %527 = arith.mulf %522, %526 : vector<4x3xf32>
    %528 = vector.extract_strided_slice %527 {offsets = [0, 0], sizes = [4, 1], strides = [1, 1]} : vector<4x3xf32> to vector<4x1xf32>
    %529 = vector.extract_strided_slice %527 {offsets = [0, 1], sizes = [4, 1], strides = [1, 1]} : vector<4x3xf32> to vector<4x1xf32>
    %530 = vector.extract_strided_slice %527 {offsets = [0, 2], sizes = [4, 1], strides = [1, 1]} : vector<4x3xf32> to vector<4x1xf32>
    %cst_149 = arith.constant dense<0.000000e+00> : vector<4x96xf32>
    %531 = tpu.matmul %509, %10, %cst_149 {dimension_numbers = #tpu.dot_dimension_numbers<[1], [0], [0], [1], [0, 0, 1, 1], [], []>} : vector<4x32xf32>, vector<32x96xf32>, vector<4x96xf32> -> vector<4x96xf32>
    %532 = vector.extract_strided_slice %531 {offsets = [0, 0], sizes = [4, 32], strides = [1, 1]} : vector<4x96xf32> to vector<4x32xf32>
    %533 = vector.broadcast %14 : vector<1x32xf32> to vector<4x32xf32>
    %534 = arith.addf %532, %533 : vector<4x32xf32>
    %535 = vector.broadcast %528 : vector<4x1xf32> to vector<4x32xf32>
    %536 = arith.mulf %535, %534 : vector<4x32xf32>
    %537 = vector.extract_strided_slice %531 {offsets = [0, 32], sizes = [4, 32], strides = [1, 1]} : vector<4x96xf32> to vector<4x32xf32>
    %538 = vector.broadcast %16 : vector<1x32xf32> to vector<4x32xf32>
    %539 = arith.addf %537, %538 : vector<4x32xf32>
    %540 = vector.broadcast %529 : vector<4x1xf32> to vector<4x32xf32>
    %541 = arith.mulf %540, %539 : vector<4x32xf32>
    %542 = arith.addf %536, %541 : vector<4x32xf32>
    %543 = vector.extract_strided_slice %531 {offsets = [0, 64], sizes = [4, 32], strides = [1, 1]} : vector<4x96xf32> to vector<4x32xf32>
    %544 = vector.broadcast %18 : vector<1x32xf32> to vector<4x32xf32>
    %545 = arith.addf %543, %544 : vector<4x32xf32>
    %546 = vector.broadcast %530 : vector<4x1xf32> to vector<4x32xf32>
    %547 = arith.mulf %546, %545 : vector<4x32xf32>
    %548 = arith.addf %542, %547 : vector<4x32xf32>
    %cst_150 = arith.constant dense<0.000000e+00> : vector<4x128xf32>
    %549 = tpu.matmul %548, %11, %cst_150 {dimension_numbers = #tpu.dot_dimension_numbers<[1], [0], [0], [1], [0, 0, 1, 1], [], []>} : vector<4x32xf32>, vector<32x128xf32>, vector<4x128xf32> -> vector<4x128xf32>
    %550 = vector.broadcast %12 : vector<1x128xf32> to vector<4x128xf32>
    %551 = arith.addf %549, %550 : vector<4x128xf32>
    %c0_151 = arith.constant 0 : index
    %c3_152 = arith.constant 3 : index
    %c0_153 = arith.constant 0 : index
    %552 = vector.load %arg18[%c0_151, %c3_152, %c0_153] : memref<4x8x128xf32, #tpu.memory_space<vmem>>, vector<4x1x128xf32>
    %553 = vector.shape_cast %552 : vector<4x1x128xf32> to vector<4x128xf32>
    %554 = vector.shape_cast %551 : vector<4x128xf32> to vector<4x1x128xf32>
    tpu.vector_store %arg18[%c0_151, %c3_152, %c0_153], %554 {strides = array<i32>} : memref<4x8x128xf32, #tpu.memory_space<vmem>>, vector<4x1x128xf32>,
    %555 = vector.broadcast %528 : vector<4x1xf32> to vector<4x32xf32>
    %556 = arith.mulf %555, %44 : vector<4x32xf32>
    %557 = vector.broadcast %529 : vector<4x1xf32> to vector<4x32xf32>
    %558 = arith.mulf %557, %47 : vector<4x32xf32>
    %559 = arith.addf %556, %558 : vector<4x32xf32>
    %560 = vector.broadcast %530 : vector<4x1xf32> to vector<4x32xf32>
    %561 = arith.mulf %560, %50 : vector<4x32xf32>
    %562 = arith.addf %559, %561 : vector<4x32xf32>
    %563 = vector.broadcast %528 : vector<4x1xf32> to vector<4x32xf32>
    %564 = arith.mulf %563, %53 : vector<4x32xf32>
    %565 = vector.broadcast %529 : vector<4x1xf32> to vector<4x32xf32>
    %566 = arith.mulf %565, %56 : vector<4x32xf32>
    %567 = arith.addf %564, %566 : vector<4x32xf32>
    %568 = vector.broadcast %530 : vector<4x1xf32> to vector<4x32xf32>
    %569 = arith.mulf %568, %60 : vector<4x32xf32>
    %570 = arith.addf %567, %569 : vector<4x32xf32>
    %571 = arith.addf %562, %570 : vector<4x32xf32>
    %cst_154 = arith.constant dense<0.000000e+00> : vector<4x96xf32>
    %572 = tpu.matmul %571, %26, %cst_154 {dimension_numbers = #tpu.dot_dimension_numbers<[1], [0], [0], [1], [0, 0, 1, 1], [], []>} : vector<4x32xf32>, vector<32x96xf32>, vector<4x96xf32> -> vector<4x96xf32>
    %573 = vector.broadcast %34 : vector<1x96xf32> to vector<4x96xf32>
    %574 = arith.addf %572, %573 : vector<4x96xf32>
    %cst_155 = arith.constant dense<0.000000e+00> : vector<4x96xf32>
    %575 = tpu.matmul %477, %30, %cst_155 {dimension_numbers = #tpu.dot_dimension_numbers<[1], [0], [0], [1], [0, 0, 1, 1], [], []>} : vector<4x32xf32>, vector<32x96xf32>, vector<4x96xf32> -> vector<4x96xf32>
    %576 = vector.broadcast %38 : vector<1x96xf32> to vector<4x96xf32>
    %577 = arith.addf %575, %576 : vector<4x96xf32>
    %578 = vector.extract_strided_slice %574 {offsets = [0, 0], sizes = [4, 32], strides = [1, 1]} : vector<4x96xf32> to vector<4x32xf32>
    %579 = vector.extract_strided_slice %577 {offsets = [0, 0], sizes = [4, 32], strides = [1, 1]} : vector<4x96xf32> to vector<4x32xf32>
    %580 = arith.addf %578, %579 : vector<4x32xf32>
    %581 = arith.negf %580 : vector<4x32xf32>
    %582 = math.exp %581 : vector<4x32xf32>
    %cst_156 = arith.constant 1.000000e+00 : f32
    %583 = vector.broadcast %cst_156 : f32 to vector<4x32xf32>
    %584 = arith.addf %583, %582 : vector<4x32xf32>
    %585 = arith.divf %583, %584 : vector<4x32xf32>
    %586 = vector.extract_strided_slice %574 {offsets = [0, 32], sizes = [4, 32], strides = [1, 1]} : vector<4x96xf32> to vector<4x32xf32>
    %587 = vector.extract_strided_slice %577 {offsets = [0, 32], sizes = [4, 32], strides = [1, 1]} : vector<4x96xf32> to vector<4x32xf32>
    %588 = arith.addf %586, %587 : vector<4x32xf32>
    %589 = arith.negf %588 : vector<4x32xf32>
    %590 = math.exp %589 : vector<4x32xf32>
    %cst_157 = arith.constant 1.000000e+00 : f32
    %591 = vector.broadcast %cst_157 : f32 to vector<4x32xf32>
    %592 = arith.addf %591, %590 : vector<4x32xf32>
    %593 = arith.divf %591, %592 : vector<4x32xf32>
    %594 = vector.extract_strided_slice %574 {offsets = [0, 64], sizes = [4, 32], strides = [1, 1]} : vector<4x96xf32> to vector<4x32xf32>
    %595 = vector.extract_strided_slice %577 {offsets = [0, 64], sizes = [4, 32], strides = [1, 1]} : vector<4x96xf32> to vector<4x32xf32>
    %596 = arith.mulf %585, %595 : vector<4x32xf32>
    %597 = arith.addf %594, %596 : vector<4x32xf32>
    %598 = math.tanh %597 : vector<4x32xf32>
    %cst_158 = arith.constant 1.000000e+00 : f32
    %599 = vector.broadcast %cst_158 : f32 to vector<4x32xf32>
    %600 = arith.subf %599, %593 : vector<4x32xf32>
    %601 = arith.mulf %600, %598 : vector<4x32xf32>
    %602 = arith.mulf %593, %477 : vector<4x32xf32>
    %603 = arith.addf %601, %602 : vector<4x32xf32>
    %cst_159 = arith.constant dense<0.000000e+00> : vector<4x96xf32>
    %604 = tpu.matmul %603, %28, %cst_159 {dimension_numbers = #tpu.dot_dimension_numbers<[1], [0], [0], [1], [0, 0, 1, 1], [], []>} : vector<4x32xf32>, vector<32x96xf32>, vector<4x96xf32> -> vector<4x96xf32>
    %605 = vector.broadcast %36 : vector<1x96xf32> to vector<4x96xf32>
    %606 = arith.addf %604, %605 : vector<4x96xf32>
    %cst_160 = arith.constant dense<0.000000e+00> : vector<4x96xf32>
    %607 = tpu.matmul %509, %32, %cst_160 {dimension_numbers = #tpu.dot_dimension_numbers<[1], [0], [0], [1], [0, 0, 1, 1], [], []>} : vector<4x32xf32>, vector<32x96xf32>, vector<4x96xf32> -> vector<4x96xf32>
    %608 = vector.broadcast %40 : vector<1x96xf32> to vector<4x96xf32>
    %609 = arith.addf %607, %608 : vector<4x96xf32>
    %610 = vector.extract_strided_slice %606 {offsets = [0, 0], sizes = [4, 32], strides = [1, 1]} : vector<4x96xf32> to vector<4x32xf32>
    %611 = vector.extract_strided_slice %609 {offsets = [0, 0], sizes = [4, 32], strides = [1, 1]} : vector<4x96xf32> to vector<4x32xf32>
    %612 = arith.addf %610, %611 : vector<4x32xf32>
    %613 = arith.negf %612 : vector<4x32xf32>
    %614 = math.exp %613 : vector<4x32xf32>
    %cst_161 = arith.constant 1.000000e+00 : f32
    %615 = vector.broadcast %cst_161 : f32 to vector<4x32xf32>
    %616 = arith.addf %615, %614 : vector<4x32xf32>
    %617 = arith.divf %615, %616 : vector<4x32xf32>
    %618 = vector.extract_strided_slice %606 {offsets = [0, 32], sizes = [4, 32], strides = [1, 1]} : vector<4x96xf32> to vector<4x32xf32>
    %619 = vector.extract_strided_slice %609 {offsets = [0, 32], sizes = [4, 32], strides = [1, 1]} : vector<4x96xf32> to vector<4x32xf32>
    %620 = arith.addf %618, %619 : vector<4x32xf32>
    %621 = arith.negf %620 : vector<4x32xf32>
    %622 = math.exp %621 : vector<4x32xf32>
    %cst_162 = arith.constant 1.000000e+00 : f32
    %623 = vector.broadcast %cst_162 : f32 to vector<4x32xf32>
    %624 = arith.addf %623, %622 : vector<4x32xf32>
    %625 = arith.divf %623, %624 : vector<4x32xf32>
    %626 = vector.extract_strided_slice %606 {offsets = [0, 64], sizes = [4, 32], strides = [1, 1]} : vector<4x96xf32> to vector<4x32xf32>
    %627 = vector.extract_strided_slice %609 {offsets = [0, 64], sizes = [4, 32], strides = [1, 1]} : vector<4x96xf32> to vector<4x32xf32>
    %628 = arith.mulf %617, %627 : vector<4x32xf32>
    %629 = arith.addf %626, %628 : vector<4x32xf32>
    %630 = math.tanh %629 : vector<4x32xf32>
    %cst_163 = arith.constant 1.000000e+00 : f32
    %631 = vector.broadcast %cst_163 : f32 to vector<4x32xf32>
    %632 = arith.subf %631, %625 : vector<4x32xf32>
    %633 = arith.mulf %632, %630 : vector<4x32xf32>
    %634 = arith.mulf %625, %509 : vector<4x32xf32>
    %635 = arith.addf %633, %634 : vector<4x32xf32>
    %cst_164 = arith.constant dense<0.000000e+00> : vector<4x3xf32>
    %636 = tpu.matmul %635, %8, %cst_164 {dimension_numbers = #tpu.dot_dimension_numbers<[1], [0], [0], [1], [0, 0, 1, 1], [], []>} : vector<4x32xf32>, vector<32x3xf32>, vector<4x3xf32> -> vector<4x3xf32>
    %637 = vector.broadcast %9 : vector<1x3xf32> to vector<4x3xf32>
    %638 = arith.addf %636, %637 : vector<4x3xf32>
    %c4 = arith.constant 4 : index
    %c0_165 = arith.constant 0 : index
    %c0_166 = arith.constant 0 : index
    %639 = vector.load %arg4[%c4, %c0_165, %c0_166] : memref<8x4x3xf32, #tpu.memory_space<vmem>>, vector<1x4x3xf32>
    %640 = vector.shape_cast %639 : vector<1x4x3xf32> to vector<4x3xf32>
    %641 = arith.addf %638, %640 : vector<4x3xf32>
    %cst_167 = arith.constant 1.000000e+03 : f32
    %642 = vector.broadcast %cst_167 : f32 to vector<4x3xf32>
    %643 = arith.mulf %641, %642 : vector<4x3xf32>
    %cst_168 = arith.constant dense<0xFF800000> : vector<4xf32>
    %644 = vector.multi_reduction <maximumf>, %643, %cst_168 [1] : vector<4x3xf32> to vector<4xf32>
    %645 = vector.shape_cast %644 : vector<4xf32> to vector<4x1xf32>
    %646 = vector.broadcast %645 : vector<4x1xf32> to vector<4x3xf32>
    %647 = arith.subf %643, %646 : vector<4x3xf32>
    %648 = math.exp %647 : vector<4x3xf32>
    %cst_169 = arith.constant dense<0.000000e+00> : vector<4xf32>
    %649 = vector.multi_reduction <add>, %648, %cst_169 [1] : vector<4x3xf32> to vector<4xf32>
    %650 = vector.shape_cast %649 : vector<4xf32> to vector<4x1xf32>
    %651 = tpu.reciprocal %650 {approx = true} : vector<4x1xf32> -> vector<4x1xf32>
    %652 = vector.broadcast %651 : vector<4x1xf32> to vector<4x3xf32>
    %653 = arith.mulf %648, %652 : vector<4x3xf32>
    %654 = vector.extract_strided_slice %653 {offsets = [0, 0], sizes = [4, 1], strides = [1, 1]} : vector<4x3xf32> to vector<4x1xf32>
    %655 = vector.extract_strided_slice %653 {offsets = [0, 1], sizes = [4, 1], strides = [1, 1]} : vector<4x3xf32> to vector<4x1xf32>
    %656 = vector.extract_strided_slice %653 {offsets = [0, 2], sizes = [4, 1], strides = [1, 1]} : vector<4x3xf32> to vector<4x1xf32>
    %cst_170 = arith.constant dense<0.000000e+00> : vector<4x96xf32>
    %657 = tpu.matmul %635, %10, %cst_170 {dimension_numbers = #tpu.dot_dimension_numbers<[1], [0], [0], [1], [0, 0, 1, 1], [], []>} : vector<4x32xf32>, vector<32x96xf32>, vector<4x96xf32> -> vector<4x96xf32>
    %658 = vector.extract_strided_slice %657 {offsets = [0, 0], sizes = [4, 32], strides = [1, 1]} : vector<4x96xf32> to vector<4x32xf32>
    %659 = vector.broadcast %14 : vector<1x32xf32> to vector<4x32xf32>
    %660 = arith.addf %658, %659 : vector<4x32xf32>
    %661 = vector.broadcast %654 : vector<4x1xf32> to vector<4x32xf32>
    %662 = arith.mulf %661, %660 : vector<4x32xf32>
    %663 = vector.extract_strided_slice %657 {offsets = [0, 32], sizes = [4, 32], strides = [1, 1]} : vector<4x96xf32> to vector<4x32xf32>
    %664 = vector.broadcast %16 : vector<1x32xf32> to vector<4x32xf32>
    %665 = arith.addf %663, %664 : vector<4x32xf32>
    %666 = vector.broadcast %655 : vector<4x1xf32> to vector<4x32xf32>
    %667 = arith.mulf %666, %665 : vector<4x32xf32>
    %668 = arith.addf %662, %667 : vector<4x32xf32>
    %669 = vector.extract_strided_slice %657 {offsets = [0, 64], sizes = [4, 32], strides = [1, 1]} : vector<4x96xf32> to vector<4x32xf32>
    %670 = vector.broadcast %18 : vector<1x32xf32> to vector<4x32xf32>
    %671 = arith.addf %669, %670 : vector<4x32xf32>
    %672 = vector.broadcast %656 : vector<4x1xf32> to vector<4x32xf32>
    %673 = arith.mulf %672, %671 : vector<4x32xf32>
    %674 = arith.addf %668, %673 : vector<4x32xf32>
    %cst_171 = arith.constant dense<0.000000e+00> : vector<4x128xf32>
    %675 = tpu.matmul %674, %11, %cst_171 {dimension_numbers = #tpu.dot_dimension_numbers<[1], [0], [0], [1], [0, 0, 1, 1], [], []>} : vector<4x32xf32>, vector<32x128xf32>, vector<4x128xf32> -> vector<4x128xf32>
    %676 = vector.broadcast %12 : vector<1x128xf32> to vector<4x128xf32>
    %677 = arith.addf %675, %676 : vector<4x128xf32>
    %c0_172 = arith.constant 0 : index
    %c4_173 = arith.constant 4 : index
    %c0_174 = arith.constant 0 : index
    %678 = vector.load %arg18[%c0_172, %c4_173, %c0_174] : memref<4x8x128xf32, #tpu.memory_space<vmem>>, vector<4x1x128xf32>
    %679 = vector.shape_cast %678 : vector<4x1x128xf32> to vector<4x128xf32>
    %680 = vector.shape_cast %677 : vector<4x128xf32> to vector<4x1x128xf32>
    tpu.vector_store %arg18[%c0_172, %c4_173, %c0_174], %680 {strides = array<i32>} : memref<4x8x128xf32, #tpu.memory_space<vmem>>, vector<4x1x128xf32>,
    %681 = vector.broadcast %654 : vector<4x1xf32> to vector<4x32xf32>
    %682 = arith.mulf %681, %44 : vector<4x32xf32>
    %683 = vector.broadcast %655 : vector<4x1xf32> to vector<4x32xf32>
    %684 = arith.mulf %683, %47 : vector<4x32xf32>
    %685 = arith.addf %682, %684 : vector<4x32xf32>
    %686 = vector.broadcast %656 : vector<4x1xf32> to vector<4x32xf32>
    %687 = arith.mulf %686, %50 : vector<4x32xf32>
    %688 = arith.addf %685, %687 : vector<4x32xf32>
    %689 = vector.broadcast %654 : vector<4x1xf32> to vector<4x32xf32>
    %690 = arith.mulf %689, %53 : vector<4x32xf32>
    %691 = vector.broadcast %655 : vector<4x1xf32> to vector<4x32xf32>
    %692 = arith.mulf %691, %56 : vector<4x32xf32>
    %693 = arith.addf %690, %692 : vector<4x32xf32>
    %694 = vector.broadcast %656 : vector<4x1xf32> to vector<4x32xf32>
    %695 = arith.mulf %694, %60 : vector<4x32xf32>
    %696 = arith.addf %693, %695 : vector<4x32xf32>
    %697 = arith.addf %688, %696 : vector<4x32xf32>
    %cst_175 = arith.constant dense<0.000000e+00> : vector<4x96xf32>
    %698 = tpu.matmul %697, %26, %cst_175 {dimension_numbers = #tpu.dot_dimension_numbers<[1], [0], [0], [1], [0, 0, 1, 1], [], []>} : vector<4x32xf32>, vector<32x96xf32>, vector<4x96xf32> -> vector<4x96xf32>
    %699 = vector.broadcast %34 : vector<1x96xf32> to vector<4x96xf32>
    %700 = arith.addf %698, %699 : vector<4x96xf32>
    %cst_176 = arith.constant dense<0.000000e+00> : vector<4x96xf32>
    %701 = tpu.matmul %603, %30, %cst_176 {dimension_numbers = #tpu.dot_dimension_numbers<[1], [0], [0], [1], [0, 0, 1, 1], [], []>} : vector<4x32xf32>, vector<32x96xf32>, vector<4x96xf32> -> vector<4x96xf32>
    %702 = vector.broadcast %38 : vector<1x96xf32> to vector<4x96xf32>
    %703 = arith.addf %701, %702 : vector<4x96xf32>
    %704 = vector.extract_strided_slice %700 {offsets = [0, 0], sizes = [4, 32], strides = [1, 1]} : vector<4x96xf32> to vector<4x32xf32>
    %705 = vector.extract_strided_slice %703 {offsets = [0, 0], sizes = [4, 32], strides = [1, 1]} : vector<4x96xf32> to vector<4x32xf32>
    %706 = arith.addf %704, %705 : vector<4x32xf32>
    %707 = arith.negf %706 : vector<4x32xf32>
    %708 = math.exp %707 : vector<4x32xf32>
    %cst_177 = arith.constant 1.000000e+00 : f32
    %709 = vector.broadcast %cst_177 : f32 to vector<4x32xf32>
    %710 = arith.addf %709, %708 : vector<4x32xf32>
    %711 = arith.divf %709, %710 : vector<4x32xf32>
    %712 = vector.extract_strided_slice %700 {offsets = [0, 32], sizes = [4, 32], strides = [1, 1]} : vector<4x96xf32> to vector<4x32xf32>
    %713 = vector.extract_strided_slice %703 {offsets = [0, 32], sizes = [4, 32], strides = [1, 1]} : vector<4x96xf32> to vector<4x32xf32>
    %714 = arith.addf %712, %713 : vector<4x32xf32>
    %715 = arith.negf %714 : vector<4x32xf32>
    %716 = math.exp %715 : vector<4x32xf32>
    %cst_178 = arith.constant 1.000000e+00 : f32
    %717 = vector.broadcast %cst_178 : f32 to vector<4x32xf32>
    %718 = arith.addf %717, %716 : vector<4x32xf32>
    %719 = arith.divf %717, %718 : vector<4x32xf32>
    %720 = vector.extract_strided_slice %700 {offsets = [0, 64], sizes = [4, 32], strides = [1, 1]} : vector<4x96xf32> to vector<4x32xf32>
    %721 = vector.extract_strided_slice %703 {offsets = [0, 64], sizes = [4, 32], strides = [1, 1]} : vector<4x96xf32> to vector<4x32xf32>
    %722 = arith.mulf %711, %721 : vector<4x32xf32>
    %723 = arith.addf %720, %722 : vector<4x32xf32>
    %724 = math.tanh %723 : vector<4x32xf32>
    %cst_179 = arith.constant 1.000000e+00 : f32
    %725 = vector.broadcast %cst_179 : f32 to vector<4x32xf32>
    %726 = arith.subf %725, %719 : vector<4x32xf32>
    %727 = arith.mulf %726, %724 : vector<4x32xf32>
    %728 = arith.mulf %719, %603 : vector<4x32xf32>
    %729 = arith.addf %727, %728 : vector<4x32xf32>
    %cst_180 = arith.constant dense<0.000000e+00> : vector<4x96xf32>
    %730 = tpu.matmul %729, %28, %cst_180 {dimension_numbers = #tpu.dot_dimension_numbers<[1], [0], [0], [1], [0, 0, 1, 1], [], []>} : vector<4x32xf32>, vector<32x96xf32>, vector<4x96xf32> -> vector<4x96xf32>
    %731 = vector.broadcast %36 : vector<1x96xf32> to vector<4x96xf32>
    %732 = arith.addf %730, %731 : vector<4x96xf32>
    %cst_181 = arith.constant dense<0.000000e+00> : vector<4x96xf32>
    %733 = tpu.matmul %635, %32, %cst_181 {dimension_numbers = #tpu.dot_dimension_numbers<[1], [0], [0], [1], [0, 0, 1, 1], [], []>} : vector<4x32xf32>, vector<32x96xf32>, vector<4x96xf32> -> vector<4x96xf32>
    %734 = vector.broadcast %40 : vector<1x96xf32> to vector<4x96xf32>
    %735 = arith.addf %733, %734 : vector<4x96xf32>
    %736 = vector.extract_strided_slice %732 {offsets = [0, 0], sizes = [4, 32], strides = [1, 1]} : vector<4x96xf32> to vector<4x32xf32>
    %737 = vector.extract_strided_slice %735 {offsets = [0, 0], sizes = [4, 32], strides = [1, 1]} : vector<4x96xf32> to vector<4x32xf32>
    %738 = arith.addf %736, %737 : vector<4x32xf32>
    %739 = arith.negf %738 : vector<4x32xf32>
    %740 = math.exp %739 : vector<4x32xf32>
    %cst_182 = arith.constant 1.000000e+00 : f32
    %741 = vector.broadcast %cst_182 : f32 to vector<4x32xf32>
    %742 = arith.addf %741, %740 : vector<4x32xf32>
    %743 = arith.divf %741, %742 : vector<4x32xf32>
    %744 = vector.extract_strided_slice %732 {offsets = [0, 32], sizes = [4, 32], strides = [1, 1]} : vector<4x96xf32> to vector<4x32xf32>
    %745 = vector.extract_strided_slice %735 {offsets = [0, 32], sizes = [4, 32], strides = [1, 1]} : vector<4x96xf32> to vector<4x32xf32>
    %746 = arith.addf %744, %745 : vector<4x32xf32>
    %747 = arith.negf %746 : vector<4x32xf32>
    %748 = math.exp %747 : vector<4x32xf32>
    %cst_183 = arith.constant 1.000000e+00 : f32
    %749 = vector.broadcast %cst_183 : f32 to vector<4x32xf32>
    %750 = arith.addf %749, %748 : vector<4x32xf32>
    %751 = arith.divf %749, %750 : vector<4x32xf32>
    %752 = vector.extract_strided_slice %732 {offsets = [0, 64], sizes = [4, 32], strides = [1, 1]} : vector<4x96xf32> to vector<4x32xf32>
    %753 = vector.extract_strided_slice %735 {offsets = [0, 64], sizes = [4, 32], strides = [1, 1]} : vector<4x96xf32> to vector<4x32xf32>
    %754 = arith.mulf %743, %753 : vector<4x32xf32>
    %755 = arith.addf %752, %754 : vector<4x32xf32>
    %756 = math.tanh %755 : vector<4x32xf32>
    %cst_184 = arith.constant 1.000000e+00 : f32
    %757 = vector.broadcast %cst_184 : f32 to vector<4x32xf32>
    %758 = arith.subf %757, %751 : vector<4x32xf32>
    %759 = arith.mulf %758, %756 : vector<4x32xf32>
    %760 = arith.mulf %751, %635 : vector<4x32xf32>
    %761 = arith.addf %759, %760 : vector<4x32xf32>
    %cst_185 = arith.constant dense<0.000000e+00> : vector<4x3xf32>
    %762 = tpu.matmul %761, %8, %cst_185 {dimension_numbers = #tpu.dot_dimension_numbers<[1], [0], [0], [1], [0, 0, 1, 1], [], []>} : vector<4x32xf32>, vector<32x3xf32>, vector<4x3xf32> -> vector<4x3xf32>
    %763 = vector.broadcast %9 : vector<1x3xf32> to vector<4x3xf32>
    %764 = arith.addf %762, %763 : vector<4x3xf32>
    %c5 = arith.constant 5 : index
    %c0_186 = arith.constant 0 : index
    %c0_187 = arith.constant 0 : index
    %765 = vector.load %arg4[%c5, %c0_186, %c0_187] : memref<8x4x3xf32, #tpu.memory_space<vmem>>, vector<1x4x3xf32>
    %766 = vector.shape_cast %765 : vector<1x4x3xf32> to vector<4x3xf32>
    %767 = arith.addf %764, %766 : vector<4x3xf32>
    %cst_188 = arith.constant 1.000000e+03 : f32
    %768 = vector.broadcast %cst_188 : f32 to vector<4x3xf32>
    %769 = arith.mulf %767, %768 : vector<4x3xf32>
    %cst_189 = arith.constant dense<0xFF800000> : vector<4xf32>
    %770 = vector.multi_reduction <maximumf>, %769, %cst_189 [1] : vector<4x3xf32> to vector<4xf32>
    %771 = vector.shape_cast %770 : vector<4xf32> to vector<4x1xf32>
    %772 = vector.broadcast %771 : vector<4x1xf32> to vector<4x3xf32>
    %773 = arith.subf %769, %772 : vector<4x3xf32>
    %774 = math.exp %773 : vector<4x3xf32>
    %cst_190 = arith.constant dense<0.000000e+00> : vector<4xf32>
    %775 = vector.multi_reduction <add>, %774, %cst_190 [1] : vector<4x3xf32> to vector<4xf32>
    %776 = vector.shape_cast %775 : vector<4xf32> to vector<4x1xf32>
    %777 = tpu.reciprocal %776 {approx = true} : vector<4x1xf32> -> vector<4x1xf32>
    %778 = vector.broadcast %777 : vector<4x1xf32> to vector<4x3xf32>
    %779 = arith.mulf %774, %778 : vector<4x3xf32>
    %780 = vector.extract_strided_slice %779 {offsets = [0, 0], sizes = [4, 1], strides = [1, 1]} : vector<4x3xf32> to vector<4x1xf32>
    %781 = vector.extract_strided_slice %779 {offsets = [0, 1], sizes = [4, 1], strides = [1, 1]} : vector<4x3xf32> to vector<4x1xf32>
    %782 = vector.extract_strided_slice %779 {offsets = [0, 2], sizes = [4, 1], strides = [1, 1]} : vector<4x3xf32> to vector<4x1xf32>
    %cst_191 = arith.constant dense<0.000000e+00> : vector<4x96xf32>
    %783 = tpu.matmul %761, %10, %cst_191 {dimension_numbers = #tpu.dot_dimension_numbers<[1], [0], [0], [1], [0, 0, 1, 1], [], []>} : vector<4x32xf32>, vector<32x96xf32>, vector<4x96xf32> -> vector<4x96xf32>
    %784 = vector.extract_strided_slice %783 {offsets = [0, 0], sizes = [4, 32], strides = [1, 1]} : vector<4x96xf32> to vector<4x32xf32>
    %785 = vector.broadcast %14 : vector<1x32xf32> to vector<4x32xf32>
    %786 = arith.addf %784, %785 : vector<4x32xf32>
    %787 = vector.broadcast %780 : vector<4x1xf32> to vector<4x32xf32>
    %788 = arith.mulf %787, %786 : vector<4x32xf32>
    %789 = vector.extract_strided_slice %783 {offsets = [0, 32], sizes = [4, 32], strides = [1, 1]} : vector<4x96xf32> to vector<4x32xf32>
    %790 = vector.broadcast %16 : vector<1x32xf32> to vector<4x32xf32>
    %791 = arith.addf %789, %790 : vector<4x32xf32>
    %792 = vector.broadcast %781 : vector<4x1xf32> to vector<4x32xf32>
    %793 = arith.mulf %792, %791 : vector<4x32xf32>
    %794 = arith.addf %788, %793 : vector<4x32xf32>
    %795 = vector.extract_strided_slice %783 {offsets = [0, 64], sizes = [4, 32], strides = [1, 1]} : vector<4x96xf32> to vector<4x32xf32>
    %796 = vector.broadcast %18 : vector<1x32xf32> to vector<4x32xf32>
    %797 = arith.addf %795, %796 : vector<4x32xf32>
    %798 = vector.broadcast %782 : vector<4x1xf32> to vector<4x32xf32>
    %799 = arith.mulf %798, %797 : vector<4x32xf32>
    %800 = arith.addf %794, %799 : vector<4x32xf32>
    %cst_192 = arith.constant dense<0.000000e+00> : vector<4x128xf32>
    %801 = tpu.matmul %800, %11, %cst_192 {dimension_numbers = #tpu.dot_dimension_numbers<[1], [0], [0], [1], [0, 0, 1, 1], [], []>} : vector<4x32xf32>, vector<32x128xf32>, vector<4x128xf32> -> vector<4x128xf32>
    %802 = vector.broadcast %12 : vector<1x128xf32> to vector<4x128xf32>
    %803 = arith.addf %801, %802 : vector<4x128xf32>
    %c0_193 = arith.constant 0 : index
    %c5_194 = arith.constant 5 : index
    %c0_195 = arith.constant 0 : index
    %804 = vector.load %arg18[%c0_193, %c5_194, %c0_195] : memref<4x8x128xf32, #tpu.memory_space<vmem>>, vector<4x1x128xf32>
    %805 = vector.shape_cast %804 : vector<4x1x128xf32> to vector<4x128xf32>
    %806 = vector.shape_cast %803 : vector<4x128xf32> to vector<4x1x128xf32>
    tpu.vector_store %arg18[%c0_193, %c5_194, %c0_195], %806 {strides = array<i32>} : memref<4x8x128xf32, #tpu.memory_space<vmem>>, vector<4x1x128xf32>,
    %807 = vector.broadcast %780 : vector<4x1xf32> to vector<4x32xf32>
    %808 = arith.mulf %807, %44 : vector<4x32xf32>
    %809 = vector.broadcast %781 : vector<4x1xf32> to vector<4x32xf32>
    %810 = arith.mulf %809, %47 : vector<4x32xf32>
    %811 = arith.addf %808, %810 : vector<4x32xf32>
    %812 = vector.broadcast %782 : vector<4x1xf32> to vector<4x32xf32>
    %813 = arith.mulf %812, %50 : vector<4x32xf32>
    %814 = arith.addf %811, %813 : vector<4x32xf32>
    %815 = vector.broadcast %780 : vector<4x1xf32> to vector<4x32xf32>
    %816 = arith.mulf %815, %53 : vector<4x32xf32>
    %817 = vector.broadcast %781 : vector<4x1xf32> to vector<4x32xf32>
    %818 = arith.mulf %817, %56 : vector<4x32xf32>
    %819 = arith.addf %816, %818 : vector<4x32xf32>
    %820 = vector.broadcast %782 : vector<4x1xf32> to vector<4x32xf32>
    %821 = arith.mulf %820, %60 : vector<4x32xf32>
    %822 = arith.addf %819, %821 : vector<4x32xf32>
    %823 = arith.addf %814, %822 : vector<4x32xf32>
    %cst_196 = arith.constant dense<0.000000e+00> : vector<4x96xf32>
    %824 = tpu.matmul %823, %26, %cst_196 {dimension_numbers = #tpu.dot_dimension_numbers<[1], [0], [0], [1], [0, 0, 1, 1], [], []>} : vector<4x32xf32>, vector<32x96xf32>, vector<4x96xf32> -> vector<4x96xf32>
    %825 = vector.broadcast %34 : vector<1x96xf32> to vector<4x96xf32>
    %826 = arith.addf %824, %825 : vector<4x96xf32>
    %cst_197 = arith.constant dense<0.000000e+00> : vector<4x96xf32>
    %827 = tpu.matmul %729, %30, %cst_197 {dimension_numbers = #tpu.dot_dimension_numbers<[1], [0], [0], [1], [0, 0, 1, 1], [], []>} : vector<4x32xf32>, vector<32x96xf32>, vector<4x96xf32> -> vector<4x96xf32>
    %828 = vector.broadcast %38 : vector<1x96xf32> to vector<4x96xf32>
    %829 = arith.addf %827, %828 : vector<4x96xf32>
    %830 = vector.extract_strided_slice %826 {offsets = [0, 0], sizes = [4, 32], strides = [1, 1]} : vector<4x96xf32> to vector<4x32xf32>
    %831 = vector.extract_strided_slice %829 {offsets = [0, 0], sizes = [4, 32], strides = [1, 1]} : vector<4x96xf32> to vector<4x32xf32>
    %832 = arith.addf %830, %831 : vector<4x32xf32>
    %833 = arith.negf %832 : vector<4x32xf32>
    %834 = math.exp %833 : vector<4x32xf32>
    %cst_198 = arith.constant 1.000000e+00 : f32
    %835 = vector.broadcast %cst_198 : f32 to vector<4x32xf32>
    %836 = arith.addf %835, %834 : vector<4x32xf32>
    %837 = arith.divf %835, %836 : vector<4x32xf32>
    %838 = vector.extract_strided_slice %826 {offsets = [0, 32], sizes = [4, 32], strides = [1, 1]} : vector<4x96xf32> to vector<4x32xf32>
    %839 = vector.extract_strided_slice %829 {offsets = [0, 32], sizes = [4, 32], strides = [1, 1]} : vector<4x96xf32> to vector<4x32xf32>
    %840 = arith.addf %838, %839 : vector<4x32xf32>
    %841 = arith.negf %840 : vector<4x32xf32>
    %842 = math.exp %841 : vector<4x32xf32>
    %cst_199 = arith.constant 1.000000e+00 : f32
    %843 = vector.broadcast %cst_199 : f32 to vector<4x32xf32>
    %844 = arith.addf %843, %842 : vector<4x32xf32>
    %845 = arith.divf %843, %844 : vector<4x32xf32>
    %846 = vector.extract_strided_slice %826 {offsets = [0, 64], sizes = [4, 32], strides = [1, 1]} : vector<4x96xf32> to vector<4x32xf32>
    %847 = vector.extract_strided_slice %829 {offsets = [0, 64], sizes = [4, 32], strides = [1, 1]} : vector<4x96xf32> to vector<4x32xf32>
    %848 = arith.mulf %837, %847 : vector<4x32xf32>
    %849 = arith.addf %846, %848 : vector<4x32xf32>
    %850 = math.tanh %849 : vector<4x32xf32>
    %cst_200 = arith.constant 1.000000e+00 : f32
    %851 = vector.broadcast %cst_200 : f32 to vector<4x32xf32>
    %852 = arith.subf %851, %845 : vector<4x32xf32>
    %853 = arith.mulf %852, %850 : vector<4x32xf32>
    %854 = arith.mulf %845, %729 : vector<4x32xf32>
    %855 = arith.addf %853, %854 : vector<4x32xf32>
    %cst_201 = arith.constant dense<0.000000e+00> : vector<4x96xf32>
    %856 = tpu.matmul %855, %28, %cst_201 {dimension_numbers = #tpu.dot_dimension_numbers<[1], [0], [0], [1], [0, 0, 1, 1], [], []>} : vector<4x32xf32>, vector<32x96xf32>, vector<4x96xf32> -> vector<4x96xf32>
    %857 = vector.broadcast %36 : vector<1x96xf32> to vector<4x96xf32>
    %858 = arith.addf %856, %857 : vector<4x96xf32>
    %cst_202 = arith.constant dense<0.000000e+00> : vector<4x96xf32>
    %859 = tpu.matmul %761, %32, %cst_202 {dimension_numbers = #tpu.dot_dimension_numbers<[1], [0], [0], [1], [0, 0, 1, 1], [], []>} : vector<4x32xf32>, vector<32x96xf32>, vector<4x96xf32> -> vector<4x96xf32>
    %860 = vector.broadcast %40 : vector<1x96xf32> to vector<4x96xf32>
    %861 = arith.addf %859, %860 : vector<4x96xf32>
    %862 = vector.extract_strided_slice %858 {offsets = [0, 0], sizes = [4, 32], strides = [1, 1]} : vector<4x96xf32> to vector<4x32xf32>
    %863 = vector.extract_strided_slice %861 {offsets = [0, 0], sizes = [4, 32], strides = [1, 1]} : vector<4x96xf32> to vector<4x32xf32>
    %864 = arith.addf %862, %863 : vector<4x32xf32>
    %865 = arith.negf %864 : vector<4x32xf32>
    %866 = math.exp %865 : vector<4x32xf32>
    %cst_203 = arith.constant 1.000000e+00 : f32
    %867 = vector.broadcast %cst_203 : f32 to vector<4x32xf32>
    %868 = arith.addf %867, %866 : vector<4x32xf32>
    %869 = arith.divf %867, %868 : vector<4x32xf32>
    %870 = vector.extract_strided_slice %858 {offsets = [0, 32], sizes = [4, 32], strides = [1, 1]} : vector<4x96xf32> to vector<4x32xf32>
    %871 = vector.extract_strided_slice %861 {offsets = [0, 32], sizes = [4, 32], strides = [1, 1]} : vector<4x96xf32> to vector<4x32xf32>
    %872 = arith.addf %870, %871 : vector<4x32xf32>
    %873 = arith.negf %872 : vector<4x32xf32>
    %874 = math.exp %873 : vector<4x32xf32>
    %cst_204 = arith.constant 1.000000e+00 : f32
    %875 = vector.broadcast %cst_204 : f32 to vector<4x32xf32>
    %876 = arith.addf %875, %874 : vector<4x32xf32>
    %877 = arith.divf %875, %876 : vector<4x32xf32>
    %878 = vector.extract_strided_slice %858 {offsets = [0, 64], sizes = [4, 32], strides = [1, 1]} : vector<4x96xf32> to vector<4x32xf32>
    %879 = vector.extract_strided_slice %861 {offsets = [0, 64], sizes = [4, 32], strides = [1, 1]} : vector<4x96xf32> to vector<4x32xf32>
    %880 = arith.mulf %869, %879 : vector<4x32xf32>
    %881 = arith.addf %878, %880 : vector<4x32xf32>
    %882 = math.tanh %881 : vector<4x32xf32>
    %cst_205 = arith.constant 1.000000e+00 : f32
    %883 = vector.broadcast %cst_205 : f32 to vector<4x32xf32>
    %884 = arith.subf %883, %877 : vector<4x32xf32>
    %885 = arith.mulf %884, %882 : vector<4x32xf32>
    %886 = arith.mulf %877, %761 : vector<4x32xf32>
    %887 = arith.addf %885, %886 : vector<4x32xf32>
    %cst_206 = arith.constant dense<0.000000e+00> : vector<4x3xf32>
    %888 = tpu.matmul %887, %8, %cst_206 {dimension_numbers = #tpu.dot_dimension_numbers<[1], [0], [0], [1], [0, 0, 1, 1], [], []>} : vector<4x32xf32>, vector<32x3xf32>, vector<4x3xf32> -> vector<4x3xf32>
    %889 = vector.broadcast %9 : vector<1x3xf32> to vector<4x3xf32>
    %890 = arith.addf %888, %889 : vector<4x3xf32>
    %c6 = arith.constant 6 : index
    %c0_207 = arith.constant 0 : index
    %c0_208 = arith.constant 0 : index
    %891 = vector.load %arg4[%c6, %c0_207, %c0_208] : memref<8x4x3xf32, #tpu.memory_space<vmem>>, vector<1x4x3xf32>
    %892 = vector.shape_cast %891 : vector<1x4x3xf32> to vector<4x3xf32>
    %893 = arith.addf %890, %892 : vector<4x3xf32>
    %cst_209 = arith.constant 1.000000e+03 : f32
    %894 = vector.broadcast %cst_209 : f32 to vector<4x3xf32>
    %895 = arith.mulf %893, %894 : vector<4x3xf32>
    %cst_210 = arith.constant dense<0xFF800000> : vector<4xf32>
    %896 = vector.multi_reduction <maximumf>, %895, %cst_210 [1] : vector<4x3xf32> to vector<4xf32>
    %897 = vector.shape_cast %896 : vector<4xf32> to vector<4x1xf32>
    %898 = vector.broadcast %897 : vector<4x1xf32> to vector<4x3xf32>
    %899 = arith.subf %895, %898 : vector<4x3xf32>
    %900 = math.exp %899 : vector<4x3xf32>
    %cst_211 = arith.constant dense<0.000000e+00> : vector<4xf32>
    %901 = vector.multi_reduction <add>, %900, %cst_211 [1] : vector<4x3xf32> to vector<4xf32>
    %902 = vector.shape_cast %901 : vector<4xf32> to vector<4x1xf32>
    %903 = tpu.reciprocal %902 {approx = true} : vector<4x1xf32> -> vector<4x1xf32>
    %904 = vector.broadcast %903 : vector<4x1xf32> to vector<4x3xf32>
    %905 = arith.mulf %900, %904 : vector<4x3xf32>
    %906 = vector.extract_strided_slice %905 {offsets = [0, 0], sizes = [4, 1], strides = [1, 1]} : vector<4x3xf32> to vector<4x1xf32>
    %907 = vector.extract_strided_slice %905 {offsets = [0, 1], sizes = [4, 1], strides = [1, 1]} : vector<4x3xf32> to vector<4x1xf32>
    %908 = vector.extract_strided_slice %905 {offsets = [0, 2], sizes = [4, 1], strides = [1, 1]} : vector<4x3xf32> to vector<4x1xf32>
    %cst_212 = arith.constant dense<0.000000e+00> : vector<4x96xf32>
    %909 = tpu.matmul %887, %10, %cst_212 {dimension_numbers = #tpu.dot_dimension_numbers<[1], [0], [0], [1], [0, 0, 1, 1], [], []>} : vector<4x32xf32>, vector<32x96xf32>, vector<4x96xf32> -> vector<4x96xf32>
    %910 = vector.extract_strided_slice %909 {offsets = [0, 0], sizes = [4, 32], strides = [1, 1]} : vector<4x96xf32> to vector<4x32xf32>
    %911 = vector.broadcast %14 : vector<1x32xf32> to vector<4x32xf32>
    %912 = arith.addf %910, %911 : vector<4x32xf32>
    %913 = vector.broadcast %906 : vector<4x1xf32> to vector<4x32xf32>
    %914 = arith.mulf %913, %912 : vector<4x32xf32>
    %915 = vector.extract_strided_slice %909 {offsets = [0, 32], sizes = [4, 32], strides = [1, 1]} : vector<4x96xf32> to vector<4x32xf32>
    %916 = vector.broadcast %16 : vector<1x32xf32> to vector<4x32xf32>
    %917 = arith.addf %915, %916 : vector<4x32xf32>
    %918 = vector.broadcast %907 : vector<4x1xf32> to vector<4x32xf32>
    %919 = arith.mulf %918, %917 : vector<4x32xf32>
    %920 = arith.addf %914, %919 : vector<4x32xf32>
    %921 = vector.extract_strided_slice %909 {offsets = [0, 64], sizes = [4, 32], strides = [1, 1]} : vector<4x96xf32> to vector<4x32xf32>
    %922 = vector.broadcast %18 : vector<1x32xf32> to vector<4x32xf32>
    %923 = arith.addf %921, %922 : vector<4x32xf32>
    %924 = vector.broadcast %908 : vector<4x1xf32> to vector<4x32xf32>
    %925 = arith.mulf %924, %923 : vector<4x32xf32>
    %926 = arith.addf %920, %925 : vector<4x32xf32>
    %cst_213 = arith.constant dense<0.000000e+00> : vector<4x128xf32>
    %927 = tpu.matmul %926, %11, %cst_213 {dimension_numbers = #tpu.dot_dimension_numbers<[1], [0], [0], [1], [0, 0, 1, 1], [], []>} : vector<4x32xf32>, vector<32x128xf32>, vector<4x128xf32> -> vector<4x128xf32>
    %928 = vector.broadcast %12 : vector<1x128xf32> to vector<4x128xf32>
    %929 = arith.addf %927, %928 : vector<4x128xf32>
    %c0_214 = arith.constant 0 : index
    %c6_215 = arith.constant 6 : index
    %c0_216 = arith.constant 0 : index
    %930 = vector.load %arg18[%c0_214, %c6_215, %c0_216] : memref<4x8x128xf32, #tpu.memory_space<vmem>>, vector<4x1x128xf32>
    %931 = vector.shape_cast %930 : vector<4x1x128xf32> to vector<4x128xf32>
    %932 = vector.shape_cast %929 : vector<4x128xf32> to vector<4x1x128xf32>
    tpu.vector_store %arg18[%c0_214, %c6_215, %c0_216], %932 {strides = array<i32>} : memref<4x8x128xf32, #tpu.memory_space<vmem>>, vector<4x1x128xf32>,
    %933 = vector.broadcast %906 : vector<4x1xf32> to vector<4x32xf32>
    %934 = arith.mulf %933, %44 : vector<4x32xf32>
    %935 = vector.broadcast %907 : vector<4x1xf32> to vector<4x32xf32>
    %936 = arith.mulf %935, %47 : vector<4x32xf32>
    %937 = arith.addf %934, %936 : vector<4x32xf32>
    %938 = vector.broadcast %908 : vector<4x1xf32> to vector<4x32xf32>
    %939 = arith.mulf %938, %50 : vector<4x32xf32>
    %940 = arith.addf %937, %939 : vector<4x32xf32>
    %941 = vector.broadcast %906 : vector<4x1xf32> to vector<4x32xf32>
    %942 = arith.mulf %941, %53 : vector<4x32xf32>
    %943 = vector.broadcast %907 : vector<4x1xf32> to vector<4x32xf32>
    %944 = arith.mulf %943, %56 : vector<4x32xf32>
    %945 = arith.addf %942, %944 : vector<4x32xf32>
    %946 = vector.broadcast %908 : vector<4x1xf32> to vector<4x32xf32>
    %947 = arith.mulf %946, %60 : vector<4x32xf32>
    %948 = arith.addf %945, %947 : vector<4x32xf32>
    %949 = arith.addf %940, %948 : vector<4x32xf32>
    %cst_217 = arith.constant dense<0.000000e+00> : vector<4x96xf32>
    %950 = tpu.matmul %949, %26, %cst_217 {dimension_numbers = #tpu.dot_dimension_numbers<[1], [0], [0], [1], [0, 0, 1, 1], [], []>} : vector<4x32xf32>, vector<32x96xf32>, vector<4x96xf32> -> vector<4x96xf32>
    %951 = vector.broadcast %34 : vector<1x96xf32> to vector<4x96xf32>
    %952 = arith.addf %950, %951 : vector<4x96xf32>
    %cst_218 = arith.constant dense<0.000000e+00> : vector<4x96xf32>
    %953 = tpu.matmul %855, %30, %cst_218 {dimension_numbers = #tpu.dot_dimension_numbers<[1], [0], [0], [1], [0, 0, 1, 1], [], []>} : vector<4x32xf32>, vector<32x96xf32>, vector<4x96xf32> -> vector<4x96xf32>
    %954 = vector.broadcast %38 : vector<1x96xf32> to vector<4x96xf32>
    %955 = arith.addf %953, %954 : vector<4x96xf32>
    %956 = vector.extract_strided_slice %952 {offsets = [0, 0], sizes = [4, 32], strides = [1, 1]} : vector<4x96xf32> to vector<4x32xf32>
    %957 = vector.extract_strided_slice %955 {offsets = [0, 0], sizes = [4, 32], strides = [1, 1]} : vector<4x96xf32> to vector<4x32xf32>
    %958 = arith.addf %956, %957 : vector<4x32xf32>
    %959 = arith.negf %958 : vector<4x32xf32>
    %960 = math.exp %959 : vector<4x32xf32>
    %cst_219 = arith.constant 1.000000e+00 : f32
    %961 = vector.broadcast %cst_219 : f32 to vector<4x32xf32>
    %962 = arith.addf %961, %960 : vector<4x32xf32>
    %963 = arith.divf %961, %962 : vector<4x32xf32>
    %964 = vector.extract_strided_slice %952 {offsets = [0, 32], sizes = [4, 32], strides = [1, 1]} : vector<4x96xf32> to vector<4x32xf32>
    %965 = vector.extract_strided_slice %955 {offsets = [0, 32], sizes = [4, 32], strides = [1, 1]} : vector<4x96xf32> to vector<4x32xf32>
    %966 = arith.addf %964, %965 : vector<4x32xf32>
    %967 = arith.negf %966 : vector<4x32xf32>
    %968 = math.exp %967 : vector<4x32xf32>
    %cst_220 = arith.constant 1.000000e+00 : f32
    %969 = vector.broadcast %cst_220 : f32 to vector<4x32xf32>
    %970 = arith.addf %969, %968 : vector<4x32xf32>
    %971 = arith.divf %969, %970 : vector<4x32xf32>
    %972 = vector.extract_strided_slice %952 {offsets = [0, 64], sizes = [4, 32], strides = [1, 1]} : vector<4x96xf32> to vector<4x32xf32>
    %973 = vector.extract_strided_slice %955 {offsets = [0, 64], sizes = [4, 32], strides = [1, 1]} : vector<4x96xf32> to vector<4x32xf32>
    %974 = arith.mulf %963, %973 : vector<4x32xf32>
    %975 = arith.addf %972, %974 : vector<4x32xf32>
    %976 = math.tanh %975 : vector<4x32xf32>
    %cst_221 = arith.constant 1.000000e+00 : f32
    %977 = vector.broadcast %cst_221 : f32 to vector<4x32xf32>
    %978 = arith.subf %977, %971 : vector<4x32xf32>
    %979 = arith.mulf %978, %976 : vector<4x32xf32>
    %980 = arith.mulf %971, %855 : vector<4x32xf32>
    %981 = arith.addf %979, %980 : vector<4x32xf32>
    %cst_222 = arith.constant dense<0.000000e+00> : vector<4x96xf32>
    %982 = tpu.matmul %981, %28, %cst_222 {dimension_numbers = #tpu.dot_dimension_numbers<[1], [0], [0], [1], [0, 0, 1, 1], [], []>} : vector<4x32xf32>, vector<32x96xf32>, vector<4x96xf32> -> vector<4x96xf32>
    %983 = vector.broadcast %36 : vector<1x96xf32> to vector<4x96xf32>
    %984 = arith.addf %982, %983 : vector<4x96xf32>
    %cst_223 = arith.constant dense<0.000000e+00> : vector<4x96xf32>
    %985 = tpu.matmul %887, %32, %cst_223 {dimension_numbers = #tpu.dot_dimension_numbers<[1], [0], [0], [1], [0, 0, 1, 1], [], []>} : vector<4x32xf32>, vector<32x96xf32>, vector<4x96xf32> -> vector<4x96xf32>
    %986 = vector.broadcast %40 : vector<1x96xf32> to vector<4x96xf32>
    %987 = arith.addf %985, %986 : vector<4x96xf32>
    %988 = vector.extract_strided_slice %984 {offsets = [0, 0], sizes = [4, 32], strides = [1, 1]} : vector<4x96xf32> to vector<4x32xf32>
    %989 = vector.extract_strided_slice %987 {offsets = [0, 0], sizes = [4, 32], strides = [1, 1]} : vector<4x96xf32> to vector<4x32xf32>
    %990 = arith.addf %988, %989 : vector<4x32xf32>
    %991 = arith.negf %990 : vector<4x32xf32>
    %992 = math.exp %991 : vector<4x32xf32>
    %cst_224 = arith.constant 1.000000e+00 : f32
    %993 = vector.broadcast %cst_224 : f32 to vector<4x32xf32>
    %994 = arith.addf %993, %992 : vector<4x32xf32>
    %995 = arith.divf %993, %994 : vector<4x32xf32>
    %996 = vector.extract_strided_slice %984 {offsets = [0, 32], sizes = [4, 32], strides = [1, 1]} : vector<4x96xf32> to vector<4x32xf32>
    %997 = vector.extract_strided_slice %987 {offsets = [0, 32], sizes = [4, 32], strides = [1, 1]} : vector<4x96xf32> to vector<4x32xf32>
    %998 = arith.addf %996, %997 : vector<4x32xf32>
    %999 = arith.negf %998 : vector<4x32xf32>
    %1000 = math.exp %999 : vector<4x32xf32>
    %cst_225 = arith.constant 1.000000e+00 : f32
    %1001 = vector.broadcast %cst_225 : f32 to vector<4x32xf32>
    %1002 = arith.addf %1001, %1000 : vector<4x32xf32>
    %1003 = arith.divf %1001, %1002 : vector<4x32xf32>
    %1004 = vector.extract_strided_slice %984 {offsets = [0, 64], sizes = [4, 32], strides = [1, 1]} : vector<4x96xf32> to vector<4x32xf32>
    %1005 = vector.extract_strided_slice %987 {offsets = [0, 64], sizes = [4, 32], strides = [1, 1]} : vector<4x96xf32> to vector<4x32xf32>
    %1006 = arith.mulf %995, %1005 : vector<4x32xf32>
    %1007 = arith.addf %1004, %1006 : vector<4x32xf32>
    %1008 = math.tanh %1007 : vector<4x32xf32>
    %cst_226 = arith.constant 1.000000e+00 : f32
    %1009 = vector.broadcast %cst_226 : f32 to vector<4x32xf32>
    %1010 = arith.subf %1009, %1003 : vector<4x32xf32>
    %1011 = arith.mulf %1010, %1008 : vector<4x32xf32>
    %1012 = arith.mulf %1003, %887 : vector<4x32xf32>
    %1013 = arith.addf %1011, %1012 : vector<4x32xf32>
    %cst_227 = arith.constant dense<0.000000e+00> : vector<4x3xf32>
    %1014 = tpu.matmul %1013, %8, %cst_227 {dimension_numbers = #tpu.dot_dimension_numbers<[1], [0], [0], [1], [0, 0, 1, 1], [], []>} : vector<4x32xf32>, vector<32x3xf32>, vector<4x3xf32> -> vector<4x3xf32>
    %1015 = vector.broadcast %9 : vector<1x3xf32> to vector<4x3xf32>
    %1016 = arith.addf %1014, %1015 : vector<4x3xf32>
    %c7 = arith.constant 7 : index
    %c0_228 = arith.constant 0 : index
    %c0_229 = arith.constant 0 : index
    %1017 = vector.load %arg4[%c7, %c0_228, %c0_229] : memref<8x4x3xf32, #tpu.memory_space<vmem>>, vector<1x4x3xf32>
    %1018 = vector.shape_cast %1017 : vector<1x4x3xf32> to vector<4x3xf32>
    %1019 = arith.addf %1016, %1018 : vector<4x3xf32>
    %cst_230 = arith.constant 1.000000e+03 : f32
    %1020 = vector.broadcast %cst_230 : f32 to vector<4x3xf32>
    %1021 = arith.mulf %1019, %1020 : vector<4x3xf32>
    %cst_231 = arith.constant dense<0xFF800000> : vector<4xf32>
    %1022 = vector.multi_reduction <maximumf>, %1021, %cst_231 [1] : vector<4x3xf32> to vector<4xf32>
    %1023 = vector.shape_cast %1022 : vector<4xf32> to vector<4x1xf32>
    %1024 = vector.broadcast %1023 : vector<4x1xf32> to vector<4x3xf32>
    %1025 = arith.subf %1021, %1024 : vector<4x3xf32>
    %1026 = math.exp %1025 : vector<4x3xf32>
    %cst_232 = arith.constant dense<0.000000e+00> : vector<4xf32>
    %1027 = vector.multi_reduction <add>, %1026, %cst_232 [1] : vector<4x3xf32> to vector<4xf32>
    %1028 = vector.shape_cast %1027 : vector<4xf32> to vector<4x1xf32>
    %1029 = tpu.reciprocal %1028 {approx = true} : vector<4x1xf32> -> vector<4x1xf32>
    %1030 = vector.broadcast %1029 : vector<4x1xf32> to vector<4x3xf32>
    %1031 = arith.mulf %1026, %1030 : vector<4x3xf32>
    %1032 = vector.extract_strided_slice %1031 {offsets = [0, 0], sizes = [4, 1], strides = [1, 1]} : vector<4x3xf32> to vector<4x1xf32>
    %1033 = vector.extract_strided_slice %1031 {offsets = [0, 1], sizes = [4, 1], strides = [1, 1]} : vector<4x3xf32> to vector<4x1xf32>
    %1034 = vector.extract_strided_slice %1031 {offsets = [0, 2], sizes = [4, 1], strides = [1, 1]} : vector<4x3xf32> to vector<4x1xf32>
    %cst_233 = arith.constant dense<0.000000e+00> : vector<4x96xf32>
    %1035 = tpu.matmul %1013, %10, %cst_233 {dimension_numbers = #tpu.dot_dimension_numbers<[1], [0], [0], [1], [0, 0, 1, 1], [], []>} : vector<4x32xf32>, vector<32x96xf32>, vector<4x96xf32> -> vector<4x96xf32>
    %1036 = vector.extract_strided_slice %1035 {offsets = [0, 0], sizes = [4, 32], strides = [1, 1]} : vector<4x96xf32> to vector<4x32xf32>
    %1037 = vector.broadcast %14 : vector<1x32xf32> to vector<4x32xf32>
    %1038 = arith.addf %1036, %1037 : vector<4x32xf32>
    %1039 = vector.broadcast %1032 : vector<4x1xf32> to vector<4x32xf32>
    %1040 = arith.mulf %1039, %1038 : vector<4x32xf32>
    %1041 = vector.extract_strided_slice %1035 {offsets = [0, 32], sizes = [4, 32], strides = [1, 1]} : vector<4x96xf32> to vector<4x32xf32>
    %1042 = vector.broadcast %16 : vector<1x32xf32> to vector<4x32xf32>
    %1043 = arith.addf %1041, %1042 : vector<4x32xf32>
    %1044 = vector.broadcast %1033 : vector<4x1xf32> to vector<4x32xf32>
    %1045 = arith.mulf %1044, %1043 : vector<4x32xf32>
    %1046 = arith.addf %1040, %1045 : vector<4x32xf32>
    %1047 = vector.extract_strided_slice %1035 {offsets = [0, 64], sizes = [4, 32], strides = [1, 1]} : vector<4x96xf32> to vector<4x32xf32>
    %1048 = vector.broadcast %18 : vector<1x32xf32> to vector<4x32xf32>
    %1049 = arith.addf %1047, %1048 : vector<4x32xf32>
    %1050 = vector.broadcast %1034 : vector<4x1xf32> to vector<4x32xf32>
    %1051 = arith.mulf %1050, %1049 : vector<4x32xf32>
    %1052 = arith.addf %1046, %1051 : vector<4x32xf32>
    %cst_234 = arith.constant dense<0.000000e+00> : vector<4x128xf32>
    %1053 = tpu.matmul %1052, %11, %cst_234 {dimension_numbers = #tpu.dot_dimension_numbers<[1], [0], [0], [1], [0, 0, 1, 1], [], []>} : vector<4x32xf32>, vector<32x128xf32>, vector<4x128xf32> -> vector<4x128xf32>
    %1054 = vector.broadcast %12 : vector<1x128xf32> to vector<4x128xf32>
    %1055 = arith.addf %1053, %1054 : vector<4x128xf32>
    %c0_235 = arith.constant 0 : index
    %c7_236 = arith.constant 7 : index
    %c0_237 = arith.constant 0 : index
    %1056 = vector.load %arg18[%c0_235, %c7_236, %c0_237] : memref<4x8x128xf32, #tpu.memory_space<vmem>>, vector<4x1x128xf32>
    %1057 = vector.shape_cast %1056 : vector<4x1x128xf32> to vector<4x128xf32>
    %1058 = vector.shape_cast %1055 : vector<4x128xf32> to vector<4x1x128xf32>
    tpu.vector_store %arg18[%c0_235, %c7_236, %c0_237], %1058 {strides = array<i32>} : memref<4x8x128xf32, #tpu.memory_space<vmem>>, vector<4x1x128xf32>,
    return
  }
}

</mosaic_0001>

<llo_original>
// kernel: tpu_custom_call.1
$region0: #{tpu_custom_call.1}
  #allocation0 [shape = 'u32[]', space=smem, size = 0x4, offset = 0x4, fixed_abs, tag = 'smem constant byte address 0x4 - core index']
  #allocation1 [shape = 'u32[72,128]{1,0:T(1,128)}', space=vmem, size = 0x9000, scoped, tag = 'internal scratch']
  %s0 = inlined_call_operand.hbm [shape: f32[4,32], index: 0, kind: input, shape index: {}]
  %s1 = inlined_call_operand.hbm [shape: f32[4,16], index: 1, kind: input, shape index: {}]
  %s2 = inlined_call_operand.hbm [shape: f32[4,16], index: 2, kind: input, shape index: {}]
  %s3 = inlined_call_operand.hbm [shape: f32[1,16], index: 3, kind: input, shape index: {}]
  %s4 = inlined_call_operand.vmem [shape: f32[8,4,3], index: 4, kind: input, shape index: {}]
  %s5 = inlined_call_operand.vmem [shape: f32[16,32], index: 5, kind: input, shape index: {}]
  %s6 = inlined_call_operand.hbm [shape: f32[1,32], index: 6, kind: input, shape index: {}]
  %s7 = inlined_call_operand.vmem [shape: f32[2,32,96], index: 7, kind: input, shape index: {}]
  %s8 = inlined_call_operand.hbm [shape: f32[2,32,96], index: 8, kind: input, shape index: {}]
  %s9 = inlined_call_operand.hbm [shape: f32[2,1,96], index: 9, kind: input, shape index: {}]
  %s10 = inlined_call_operand.hbm [shape: f32[2,1,96], index: 10, kind: input, shape index: {}]
  %s11 = inlined_call_operand.vmem [shape: f32[32,3], index: 11, kind: input, shape index: {}]
  %s12 = inlined_call_operand.vmem [shape: f32[1,3], index: 12, kind: input, shape index: {}]
  %s13 = inlined_call_operand.hbm [shape: f32[32,96], index: 13, kind: input, shape index: {}]
  %s14 = inlined_call_operand.vmem [shape: f32[3,1,32], index: 14, kind: input, shape index: {}]
  %s15 = inlined_call_operand.vmem [shape: f32[3,1,32], index: 15, kind: input, shape index: {}]
  %s16 = inlined_call_operand.hbm [shape: f32[32,128], index: 16, kind: input, shape index: {}]
  %s17 = inlined_call_operand.vmem [shape: f32[1,128], index: 17, kind: input, shape index: {}]
  %s18 = inlined_call_operand.hbm [shape: f32[4,8,128], index: 18, kind: output, shape index: {}]
  %s19 = sld [smem:[#allocation0]]
  $region122: #{tpu_custom_call.1} parent=0
    _
  %s21 = ssub.s32 1, %s19
  %s22 = scalar_select 0, %s21, %s19
  $region1: #{tpu_custom_call.1} parent=0
    #allocation2 [shape = 'u8[2048]{0}', space=vmem, size = 0x800, scoped, tag = 'input window, operand 0, single buffered']
    #allocation3 [shape = 's32[1]{0}', space=sflag, size = 0x4, scoped, tag = 'scoped memory for tpu_custom_call.1']
    #allocation4 [shape = 's32[1]{0}', space=sflag, size = 0x4, scoped, tag = 'scoped memory for tpu_custom_call.1']
    #allocation5 [shape = 'u8[2048]{0}', space=vmem, size = 0x800, scoped, tag = 'input window, operand 1, single buffered']
    #allocation6 [shape = 's32[1]{0}', space=sflag, size = 0x4, scoped, tag = 'scoped memory for tpu_custom_call.1']
    #allocation7 [shape = 'u8[2048]{0}', space=vmem, size = 0x800, scoped, tag = 'input window, operand 2, single buffered']
    #allocation8 [shape = 'u8[512]{0}', space=vmem, size = 0x400, scoped, tag = 'input window, operand 3, single buffered']
    #allocation9 [shape = 's32[1]{0}', space=sflag, size = 0x4, scoped, tag = 'scoped memory for tpu_custom_call.1']
    #allocation10 [shape = 'u8[512]{0}', space=vmem, size = 0x400, scoped, tag = 'input window, operand 6, single buffered']
    #allocation11 [shape = 'u8[32768]{0}', space=vmem, size = 0x8000, scoped, tag = 'input window, operand 8, single buffered']
    #allocation12 [shape = 's32[1]{0}', space=sflag, size = 0x4, scoped, tag = 'scoped memory for tpu_custom_call.1']
    #allocation13 [shape = 'u8[1024]{0}', space=vmem, size = 0x400, scoped, tag = 'input window, operand 9, single buffered']
    #allocation14 [shape = 'u8[1024]{0}', space=vmem, size = 0x400, scoped, tag = 'input window, operand 10, single buffered']
    #allocation15 [shape = 's32[1]{0}', space=sflag, size = 0x4, scoped, tag = 'scoped memory for tpu_custom_call.1']
    #allocation16 [shape = 'u8[16384]{0}', space=vmem, size = 0x4000, scoped, tag = 'input window, operand 13, single buffered']
    #allocation17 [shape = 'u8[16384]{0}', space=vmem, size = 0x4000, scoped, tag = 'input window, operand 16, single buffered']
    #allocation18 [shape = 's32[1]{0}', space=sflag, size = 0x4, scoped, tag = 'scoped memory for tpu_custom_call.1']
    #allocation19 [shape = 'u8[16384]{0}', space=vmem, size = 0x4000, scoped, tag = 'output window, operand 0, single buffered']
    %23 = vsyncpa [#allocation3], 0
    %24 = vsyncpa [#allocation6], 0
    %25 = vsyncpa [#allocation9], 0
    %26 = vsyncpa [#allocation12], 0
    %27 = vsyncpa [#allocation15], 0
    %28 = vsyncpa [#allocation18], 0
    %29 = vsyncpa [#allocation4], 0
    // Predicated region
    $region2: #{tpu_custom_call.1} parent=1 // pred_check
      _
    $region3: #{tpu_custom_call.1} parent=1 // pred_check_branch
      %31 = sbr.rel (0) target = $region5
    $region4: #{tpu_custom_call.1} parent=1 // pred_region
      %33 = vsyncadd [#allocation3], 0
      %s35 = sshll.u32 %s0, 4
      %s36 = int_to_ptr.hbm [resolvable:$true] %s35
      %s37 = sshll.u32 [#allocation2], 4
      %s38 = int_to_ptr.vmem [resolvable:$true] %s37
      %40 = dma.hbm_to_vmem [thread:$0]  %s36, 64, %s38, [#allocation3]
    $region5: #{tpu_custom_call.1} parent=1 // pred_fallthru
      _
    // Predicated region
    $region6: #{tpu_custom_call.1} parent=1 // pred_check
      _
    $region7: #{tpu_custom_call.1} parent=1 // pred_check_branch
      %42 = sbr.rel (0) target = $region9
    $region8: #{tpu_custom_call.1} parent=1 // pred_region
      %44 = vsyncadd [#allocation6], 0
      %s46 = sshll.u32 %s1, 4
      %s47 = int_to_ptr.hbm [resolvable:$true] %s46
      %s48 = sshll.u32 [#allocation5], 4
      %s49 = int_to_ptr.vmem [resolvable:$true] %s48
      %51 = dma.hbm_to_vmem [thread:$0]  %s47, 64, %s49, [#allocation6]
    $region9: #{tpu_custom_call.1} parent=1 // pred_fallthru
      _
    // Predicated region
    $region10: #{tpu_custom_call.1} parent=1 // pred_check
      _
    $region11: #{tpu_custom_call.1} parent=1 // pred_check_branch
      %53 = sbr.rel (0) target = $region13
    $region12: #{tpu_custom_call.1} parent=1 // pred_region
      %55 = vsyncadd [#allocation6], 0
      %s57 = sshll.u32 %s2, 4
      %s58 = int_to_ptr.hbm [resolvable:$true] %s57
      %s59 = sshll.u32 [#allocation7], 4
      %s60 = int_to_ptr.vmem [resolvable:$true] %s59
      %62 = dma.hbm_to_vmem [thread:$0]  %s58, 64, %s60, [#allocation6]
    $region13: #{tpu_custom_call.1} parent=1 // pred_fallthru
      _
    // Predicated region
    $region14: #{tpu_custom_call.1} parent=1 // pred_check
      _
    $region15: #{tpu_custom_call.1} parent=1 // pred_check_branch
      %64 = sbr.rel (0) target = $region17
    $region16: #{tpu_custom_call.1} parent=1 // pred_region
      %66 = vsyncadd [#allocation9], 0
      %s68 = sshll.u32 %s3, 4
      %s69 = int_to_ptr.hbm [resolvable:$true] %s68
      %s70 = sshll.u32 [#allocation8], 4
      %s71 = int_to_ptr.vmem [resolvable:$true] %s70
      %73 = dma.hbm_to_vmem [thread:$0]  %s69, 16, %s71, [#allocation9]
    $region17: #{tpu_custom_call.1} parent=1 // pred_fallthru
      _
    // Predicated region
    $region18: #{tpu_custom_call.1} parent=1 // pred_check
      _
    $region19: #{tpu_custom_call.1} parent=1 // pred_check_branch
      %75 = sbr.rel (0) target = $region21
    $region20: #{tpu_custom_call.1} parent=1 // pred_region
      _
    $region21: #{tpu_custom_call.1} parent=1 // pred_fallthru
      _
    // Predicated region
    $region22: #{tpu_custom_call.1} parent=1 // pred_check
      _
    $region23: #{tpu_custom_call.1} parent=1 // pred_check_branch
      %77 = sbr.rel (0) target = $region25
    $region24: #{tpu_custom_call.1} parent=1 // pred_region
      _
    $region25: #{tpu_custom_call.1} parent=1 // pred_fallthru
      _
    // Predicated region
    $region26: #{tpu_custom_call.1} parent=1 // pred_check
      _
    $region27: #{tpu_custom_call.1} parent=1 // pred_check_branch
      %79 = sbr.rel (0) target = $region29
    $region28: #{tpu_custom_call.1} parent=1 // pred_region
      %81 = vsyncadd [#allocation9], 0
      %s83 = sshll.u32 %s6, 4
      %s84 = int_to_ptr.hbm [resolvable:$true] %s83
      %s85 = sshll.u32 [#allocation10], 4
      %s86 = int_to_ptr.vmem [resolvable:$true] %s85
      %88 = dma.hbm_to_vmem [thread:$0]  %s84, 16, %s86, [#allocation9]
    $region29: #{tpu_custom_call.1} parent=1 // pred_fallthru
      _
    // Predicated region
    $region30: #{tpu_custom_call.1} parent=1 // pred_check
      _
    $region31: #{tpu_custom_call.1} parent=1 // pred_check_branch
      %90 = sbr.rel (0) target = $region33
    $region32: #{tpu_custom_call.1} parent=1 // pred_region
      _
    $region33: #{tpu_custom_call.1} parent=1 // pred_fallthru
      _
    // Predicated region
    $region34: #{tpu_custom_call.1} parent=1 // pred_check
      _
    $region35: #{tpu_custom_call.1} parent=1 // pred_check_branch
      %92 = sbr.rel (0) target = $region37
    $region36: #{tpu_custom_call.1} parent=1 // pred_region
      %94 = vsyncadd [#allocation12], 0
      %s95 = sshll.u32 %s8, 4
      %s96 = int_to_ptr.hbm [resolvable:$true] %s95
      %s97 = sshll.u32 [#allocation11], 4
      %s98 = int_to_ptr.vmem [resolvable:$true] %s97
      %103 = dma.hbm_to_vmem [thread:$0]  %s96, 1024, %s98, [#allocation12], 128, 128, 8
    $region37: #{tpu_custom_call.1} parent=1 // pred_fallthru
      _
    // Predicated region
    $region38: #{tpu_custom_call.1} parent=1 // pred_check
      _
    $region39: #{tpu_custom_call.1} parent=1 // pred_check_branch
      %105 = sbr.rel (0) target = $region41
    $region40: #{tpu_custom_call.1} parent=1 // pred_region
      %107 = vsyncadd [#allocation12], 0
      %s108 = sshll.u32 %s9, 4
      %s109 = int_to_ptr.hbm [resolvable:$true] %s108
      %s110 = sshll.u32 [#allocation13], 4
      %s111 = int_to_ptr.vmem [resolvable:$true] %s110
      %116 = dma.hbm_to_vmem [thread:$0]  %s109, 32, %s111, [#allocation12], 16, 16, 1
    $region41: #{tpu_custom_call.1} parent=1 // pred_fallthru
      _
    // Predicated region
    $region42: #{tpu_custom_call.1} parent=1 // pred_check
      _
    $region43: #{tpu_custom_call.1} parent=1 // pred_check_branch
      %118 = sbr.rel (0) target = $region45
    $region44: #{tpu_custom_call.1} parent=1 // pred_region
      %120 = vsyncadd [#allocation15], 0
      %s121 = sshll.u32 %s10, 4
      %s122 = int_to_ptr.hbm [resolvable:$true] %s121
      %s123 = sshll.u32 [#allocation14], 4
      %s124 = int_to_ptr.vmem [resolvable:$true] %s123
      %129 = dma.hbm_to_vmem [thread:$0]  %s122, 32, %s124, [#allocation15], 16, 16, 1
    $region45: #{tpu_custom_call.1} parent=1 // pred_fallthru
      _
    // Predicated region
    $region46: #{tpu_custom_call.1} parent=1 // pred_check
      _
    $region47: #{tpu_custom_call.1} parent=1 // pred_check_branch
      %131 = sbr.rel (0) target = $region49
    $region48: #{tpu_custom_call.1} parent=1 // pred_region
      _
    $region49: #{tpu_custom_call.1} parent=1 // pred_fallthru
      _
    // Predicated region
    $region50: #{tpu_custom_call.1} parent=1 // pred_check
      _
    $region51: #{tpu_custom_call.1} parent=1 // pred_check_branch
      %133 = sbr.rel (0) target = $region53
    $region52: #{tpu_custom_call.1} parent=1 // pred_region
      _
    $region53: #{tpu_custom_call.1} parent=1 // pred_fallthru
      _
    // Predicated region
    $region54: #{tpu_custom_call.1} parent=1 // pred_check
      _
    $region55: #{tpu_custom_call.1} parent=1 // pred_check_branch
      %135 = sbr.rel (0) target = $region57
    $region56: #{tpu_custom_call.1} parent=1 // pred_region
      %137 = vsyncadd [#allocation15], 0
      %s138 = sshll.u32 %s13, 4
      %s139 = int_to_ptr.hbm [resolvable:$true] %s138
      %s140 = sshll.u32 [#allocation16], 4
      %s141 = int_to_ptr.vmem [resolvable:$true] %s140
      %146 = dma.hbm_to_vmem [thread:$0]  %s139, 512, %s141, [#allocation15], 128, 128, 8
    $region57: #{tpu_custom_call.1} parent=1 // pred_fallthru
      _
    // Predicated region
    $region58: #{tpu_custom_call.1} parent=1 // pred_check
      _
    $region59: #{tpu_custom_call.1} parent=1 // pred_check_branch
      %148 = sbr.rel (0) target = $region61
    $region60: #{tpu_custom_call.1} parent=1 // pred_region
      _
    $region61: #{tpu_custom_call.1} parent=1 // pred_fallthru
      _
    // Predicated region
    $region62: #{tpu_custom_call.1} parent=1 // pred_check
      _
    $region63: #{tpu_custom_call.1} parent=1 // pred_check_branch
      %150 = sbr.rel (0) target = $region65
    $region64: #{tpu_custom_call.1} parent=1 // pred_region
      _
    $region65: #{tpu_custom_call.1} parent=1 // pred_fallthru
      _
    // Predicated region
    $region66: #{tpu_custom_call.1} parent=1 // pred_check
      _
    $region67: #{tpu_custom_call.1} parent=1 // pred_check_branch
      %152 = sbr.rel (0) target = $region69
    $region68: #{tpu_custom_call.1} parent=1 // pred_region
      %154 = vsyncadd [#allocation18], 0
      %s155 = sshll.u32 %s16, 4
      %s156 = int_to_ptr.hbm [resolvable:$true] %s155
      %s157 = sshll.u32 [#allocation17], 4
      %s158 = int_to_ptr.vmem [resolvable:$true] %s157
      %163 = dma.hbm_to_vmem [thread:$0]  %s156, 512, %s158, [#allocation18], 128, 128, 8
    $region69: #{tpu_custom_call.1} parent=1 // pred_fallthru
      _
    // Predicated region
    $region70: #{tpu_custom_call.1} parent=1 // pred_check
      _
    $region71: #{tpu_custom_call.1} parent=1 // pred_check_branch
      %165 = sbr.rel (0) target = $region73
    $region72: #{tpu_custom_call.1} parent=1 // pred_region
      _
    $region73: #{tpu_custom_call.1} parent=1 // pred_fallthru
      _
    // Predicated region
    $region74: #{tpu_custom_call.1} parent=1 // pred_check
      _
    $region75: #{tpu_custom_call.1} parent=1 // pred_check_branch
      %167 = sbr.rel (0) target = $region77
    $region76: #{tpu_custom_call.1} parent=1 // pred_region
      %169 = dma.done [#allocation3], 64
    $region77: #{tpu_custom_call.1} parent=1 // pred_fallthru
      _
    // Predicated region
    $region78: #{tpu_custom_call.1} parent=1 // pred_check
      _
    $region79: #{tpu_custom_call.1} parent=1 // pred_check_branch
      %171 = sbr.rel (0) target = $region81
    $region80: #{tpu_custom_call.1} parent=1 // pred_region
      %173 = dma.done [#allocation6], 64
    $region81: #{tpu_custom_call.1} parent=1 // pred_fallthru
      _
    // Predicated region
    $region82: #{tpu_custom_call.1} parent=1 // pred_check
      _
    $region83: #{tpu_custom_call.1} parent=1 // pred_check_branch
      %175 = sbr.rel (0) target = $region85
    $region84: #{tpu_custom_call.1} parent=1 // pred_region
      %177 = dma.done [#allocation6], 64
    $region85: #{tpu_custom_call.1} parent=1 // pred_fallthru
      _
    // Predicated region
    $region86: #{tpu_custom_call.1} parent=1 // pred_check
      _
    $region87: #{tpu_custom_call.1} parent=1 // pred_check_branch
      %179 = sbr.rel (0) target = $region89
    $region88: #{tpu_custom_call.1} parent=1 // pred_region
      %181 = dma.done [#allocation9], 16
    $region89: #{tpu_custom_call.1} parent=1 // pred_fallthru
      _
    // Predicated region
    $region90: #{tpu_custom_call.1} parent=1 // pred_check
      _
    $region91: #{tpu_custom_call.1} parent=1 // pred_check_branch
      %183 = sbr.rel (0) target = $region93
    $region92: #{tpu_custom_call.1} parent=1 // pred_region
      %185 = dma.done [#allocation9], 16
    $region93: #{tpu_custom_call.1} parent=1 // pred_fallthru
      _
    // Predicated region
    $region94: #{tpu_custom_call.1} parent=1 // pred_check
      _
    $region95: #{tpu_custom_call.1} parent=1 // pred_check_branch
      %187 = sbr.rel (0) target = $region97
    $region96: #{tpu_custom_call.1} parent=1 // pred_region
      %189 = dma.done [#allocation12], 1024
    $region97: #{tpu_custom_call.1} parent=1 // pred_fallthru
      _
    // Predicated region
    $region98: #{tpu_custom_call.1} parent=1 // pred_check
      _
    $region99: #{tpu_custom_call.1} parent=1 // pred_check_branch
      %191 = sbr.rel (0) target = $region101
    $region100: #{tpu_custom_call.1} parent=1 // pred_region
      %193 = dma.done [#allocation12], 32
    $region101: #{tpu_custom_call.1} parent=1 // pred_fallthru
      _
    // Predicated region
    $region102: #{tpu_custom_call.1} parent=1 // pred_check
      _
    $region103: #{tpu_custom_call.1} parent=1 // pred_check_branch
      %195 = sbr.rel (0) target = $region105
    $region104: #{tpu_custom_call.1} parent=1 // pred_region
      %197 = dma.done [#allocation15], 32
    $region105: #{tpu_custom_call.1} parent=1 // pred_fallthru
      _
    // Predicated region
    $region106: #{tpu_custom_call.1} parent=1 // pred_check
      _
    $region107: #{tpu_custom_call.1} parent=1 // pred_check_branch
      %199 = sbr.rel (0) target = $region109
    $region108: #{tpu_custom_call.1} parent=1 // pred_region
      %201 = dma.done [#allocation15], 512
    $region109: #{tpu_custom_call.1} parent=1 // pred_fallthru
      _
    // Predicated region
    $region110: #{tpu_custom_call.1} parent=1 // pred_check
      _
    $region111: #{tpu_custom_call.1} parent=1 // pred_check_branch
      %203 = sbr.rel (0) target = $region113
    $region112: #{tpu_custom_call.1} parent=1 // pred_region
      %205 = dma.done [#allocation18], 512
    $region113: #{tpu_custom_call.1} parent=1 // pred_fallthru
      _
    %v206 = vld [vmem:[#allocation2] sm:$0xf]
    %v207 = vld [vmem:[#allocation5] sm:$0xf]
    %v208 = vld [vmem:[#allocation7] sm:$0xf]
    %v209 = vld [vmem:[#allocation8] sm:$0x1]
    %v211 = vperm.slane %v209, 0
    %v212 = vld [vmem:[%s5] sm:$0xff]
    %v213 = vld [vmem:[%s5 + $0x8] sm:$0xff]
    %v214 = vld [vmem:[#allocation10] sm:$0x1]
    %v215 = vld [vmem:[%s11] sm:$0xff]
    %v216 = vld [vmem:[%s11 + $0x8] sm:$0xff]
    %v217 = vld [vmem:[%s11 + $0x10] sm:$0xff]
    %v218 = vld [vmem:[%s11 + $0x18] sm:$0xff]
    %v219 = vld [vmem:[%s12] sm:$0x1]
    %v220 = vld [vmem:[#allocation16] sm:$0xff]
    %v221 = vld [vmem:[#allocation16 + $0x8] sm:$0xff]
    %v222 = vld [vmem:[#allocation16 + $0x10] sm:$0xff]
    %v223 = vld [vmem:[#allocation16 + $0x18] sm:$0xff]
    %v224 = vld [vmem:[#allocation17] sm:$0xff]
    %v225 = vld [vmem:[#allocation17 + $0x8] sm:$0xff]
    %v226 = vld [vmem:[#allocation17 + $0x10] sm:$0xff]
    %v227 = vld [vmem:[#allocation17 + $0x18] sm:$0xff]
    %v228 = vld [vmem:[%s17] sm:$0x1]
    %v229 = vld [vmem:[%s14] sm:$0x1]
    %s230 = scalar_lea.vmem %s14, 1
    %v231 = vld [vmem:[%s230] sm:$0x1]
    %s232 = scalar_lea.vmem %s14, 2
    %v233 = vld [vmem:[%s232] sm:$0x1]
    %v234 = vld [vmem:[%s15] sm:$0x1]
    %s235 = scalar_lea.vmem %s15, 1
    %v236 = vld [vmem:[%s235] sm:$0x1]
    %s237 = scalar_lea.vmem %s15, 2
    %v238 = vld [vmem:[%s237] sm:$0x1]
    %v239 = vld [vmem:[%s7] sm:$0xff]
    %v240 = vld [vmem:[%s7 + $0x8] sm:$0xff]
    %v241 = vld [vmem:[%s7 + $0x10] sm:$0xff]
    %v242 = vld [vmem:[%s7 + $0x18] sm:$0xff]
    %s243 = scalar_lea.vmem %s7, 32
    %v244 = vld [vmem:[%s243] sm:$0xff]
    %v245 = vld [vmem:[%s243 + $0x8] sm:$0xff]
    %v246 = vld [vmem:[%s243 + $0x10] sm:$0xff]
    %v247 = vld [vmem:[%s243 + $0x18] sm:$0xff]
    %v248 = vld [vmem:[#allocation11] sm:$0xff]
    %v249 = vld [vmem:[#allocation11 + $0x8] sm:$0xff]
    %v250 = vld [vmem:[#allocation11 + $0x10] sm:$0xff]
    %v251 = vld [vmem:[#allocation11 + $0x18] sm:$0xff]
    %s252 = scalar_lea.vmem [#allocation11], 32
    %v253 = vld [vmem:[%s252] sm:$0xff]
    %v254 = vld [vmem:[%s252 + $0x8] sm:$0xff]
    %v255 = vld [vmem:[%s252 + $0x10] sm:$0xff]
    %v256 = vld [vmem:[%s252 + $0x18] sm:$0xff]
    %v257 = vld [vmem:[#allocation13] sm:$0x1]
    %s258 = scalar_lea.vmem [#allocation13], 1
    %v259 = vld [vmem:[%s258] sm:$0x1]
    %v260 = vld [vmem:[#allocation14] sm:$0x1]
    %s261 = scalar_lea.vmem [#allocation14], 1
    %v262 = vld [vmem:[%s261] sm:$0x1]
    %vm263 = vcmask 261120
    %v265 = vsel %vm263, %v206, 0
    %267 = vmatpush.msra.mxu0 0.0
    %268 = vmatpush.msra.mxu0 0.0
    %269 = vmatpush.msra.mxu0 0.0
    %270 = vmatpush.msra.mxu0 0.0
    %271 = vmatpush.msra.mxu0 0.0
    %272 = vmatpush.msra.mxu0 0.0
    %273 = vmatpush.msra.mxu0 0.0
    %274 = vmatpush.msra.mxu0 0.0
    %275 = vmatpush.msra.mxu0 0.0
    %276 = vmatpush.msra.mxu0 0.0
    %277 = vmatpush.msra.mxu0 0.0
    %278 = vmatpush.msra.mxu0 0.0
    %279 = vmatpush.msra.mxu0 %v223
    %280 = vmatpush.msra.mxu0 %v222
    %281 = vmatpush.msra.mxu0 %v221
    %282 = vmatpush.msra.mxu0 %v220
    %283 = vmatmul.f32.gmra.mxu0 %v265
    %v284 = vpop.f32.mrf.mxu0
    %v285 = vadd.f32 0.0, %v284
    %286 = vdwg.mxu0
    %v288 = vperm.slane %v234, 0
    %v290 = vadd.f32 %v285, %v288
    %v292 = vperm.slane %v236, 0
    %293 = vrot.lane.b32.xlu0 %v292, 32
    %v294 = vpop.permute.xlu0 %293
    %v296 = vadd.f32 %v285, %v294
    %v298 = vperm.slane %v238, 0
    %299 = vrot.lane.b32.xlu0 %v298, 64
    %v300 = vpop.permute.xlu0 %299
    %v302 = vadd.f32 %v285, %v300
    %v304 = vperm.slane %v214, 0
    %vm306 = vcmask 130048
    %v307 = vsel %vm306, %v211, 0
    %309 = vmatpush.msra.mxu0 0.0
    %310 = vmatpush.msra.mxu0 0.0
    %311 = vmatpush.msra.mxu0 0.0
    %312 = vmatpush.msra.mxu0 0.0
    %313 = vmatpush.msra.mxu0 0.0
    %314 = vmatpush.msra.mxu0 0.0
    %315 = vmatpush.msra.mxu0 0.0
    %316 = vmatpush.msra.mxu0 0.0
    %317 = vmatpush.msra.mxu0 0.0
    %318 = vmatpush.msra.mxu0 0.0
    %319 = vmatpush.msra.mxu0 0.0
    %320 = vmatpush.msra.mxu0 0.0
    %321 = vmatpush.msra.mxu0 0.0
    %322 = vmatpush.msra.mxu0 0.0
    %323 = vmatpush.msra.mxu0 %v213
    %324 = vmatpush.msra.mxu0 %v212
    %325 = vmatmul.f32.gmra.mxu0 %v307
    %v326 = vpop.f32.mrf.mxu0
    %v327 = vadd.f32 %v304, %v326
    %328 = vdwg.mxu0
    %v330 = vsel %vm306, %v208, 0
    %332 = vmatpush.msra.mxu0 0.0
    %333 = vmatpush.msra.mxu0 0.0
    %334 = vmatpush.msra.mxu0 0.0
    %335 = vmatpush.msra.mxu0 0.0
    %336 = vmatpush.msra.mxu0 0.0
    %337 = vmatpush.msra.mxu0 0.0
    %338 = vmatpush.msra.mxu0 0.0
    %339 = vmatpush.msra.mxu0 0.0
    %340 = vmatpush.msra.mxu0 0.0
    %341 = vmatpush.msra.mxu0 0.0
    %342 = vmatpush.msra.mxu0 0.0
    %343 = vmatpush.msra.mxu0 0.0
    %344 = vmatpush.msra.mxu0 0.0
    %345 = vmatpush.msra.mxu0 0.0
    %346 = vmatpush.msra.mxu0 %v213
    %347 = vmatpush.msra.mxu0 %v212
    %348 = vmatmul.f32.gmra.mxu0 %v330
    %v349 = vpop.f32.mrf.mxu0
    %v350 = vadd.f32 %v304, %v349
    %351 = vdwg.mxu0
    %v352 = vadd.f32 %v208, %v207
    %v354 = vsel %vm306, %v352, 0
    %356 = vmatpush.msra.mxu0 0.0
    %357 = vmatpush.msra.mxu0 0.0
    %358 = vmatpush.msra.mxu0 0.0
    %359 = vmatpush.msra.mxu0 0.0
    %360 = vmatpush.msra.mxu0 0.0
    %361 = vmatpush.msra.mxu0 0.0
    %362 = vmatpush.msra.mxu0 0.0
    %363 = vmatpush.msra.mxu0 0.0
    %364 = vmatpush.msra.mxu0 0.0
    %365 = vmatpush.msra.mxu0 0.0
    %366 = vmatpush.msra.mxu0 0.0
    %367 = vmatpush.msra.mxu0 0.0
    %368 = vmatpush.msra.mxu0 0.0
    %369 = vmatpush.msra.mxu0 0.0
    %370 = vmatpush.msra.mxu0 %v213
    %371 = vmatpush.msra.mxu0 %v212
    %372 = vmatmul.f32.gmra.mxu0 %v354
    %v373 = vpop.f32.mrf.mxu0
    %v374 = vadd.f32 %v304, %v373
    %375 = vdwg.mxu0
    %v376 = vadd.f32 %v206, %v374
    %v378 = vperm.slane %v257, 0
    %v381 = vsel %vm263, %v376, 0
    %383 = vmatpush.msra.mxu0 0.0
    %384 = vmatpush.msra.mxu0 0.0
    %385 = vmatpush.msra.mxu0 0.0
    %386 = vmatpush.msra.mxu0 0.0
    %387 = vmatpush.msra.mxu0 0.0
    %388 = vmatpush.msra.mxu0 0.0
    %389 = vmatpush.msra.mxu0 0.0
    %390 = vmatpush.msra.mxu0 0.0
    %391 = vmatpush.msra.mxu0 0.0
    %392 = vmatpush.msra.mxu0 0.0
    %393 = vmatpush.msra.mxu0 0.0
    %394 = vmatpush.msra.mxu0 0.0
    %395 = vmatpush.msra.mxu0 %v242
    %396 = vmatpush.msra.mxu0 %v241
    %397 = vmatpush.msra.mxu0 %v240
    %398 = vmatpush.msra.mxu0 %v239
    %399 = vmatmul.f32.gmra.mxu0 %v381
    %v400 = vpop.f32.mrf.mxu0
    %v401 = vadd.f32 %v378, %v400
    %402 = vdwg.mxu0
    %v404 = vperm.slane %v260, 0
    %v407 = vsel %vm263, 0.0, 0
    %409 = vmatpush.msra.mxu0 0.0
    %410 = vmatpush.msra.mxu0 0.0
    %411 = vmatpush.msra.mxu0 0.0
    %412 = vmatpush.msra.mxu0 0.0
    %413 = vmatpush.msra.mxu0 0.0
    %414 = vmatpush.msra.mxu0 0.0
    %415 = vmatpush.msra.mxu0 0.0
    %416 = vmatpush.msra.mxu0 0.0
    %417 = vmatpush.msra.mxu0 0.0
    %418 = vmatpush.msra.mxu0 0.0
    %419 = vmatpush.msra.mxu0 0.0
    %420 = vmatpush.msra.mxu0 0.0
    %421 = vmatpush.msra.mxu0 %v251
    %422 = vmatpush.msra.mxu0 %v250
    %423 = vmatpush.msra.mxu0 %v249
    %424 = vmatpush.msra.mxu0 %v248
    %425 = vmatmul.f32.gmra.mxu0 %v407
    %v426 = vpop.f32.mrf.mxu0
    %v427 = vadd.f32 %v404, %v426
    %428 = vdwg.mxu0
    %v429 = vadd.f32 %v401, %v427
    %v430 = vxor.u32 %v429, 2147483648
    %v431 = vmul.f32 %v430, 1.442695
    %v432 = vpow.pop %v431
    %v433 = vadd.f32 %v432, 1.0
    %v434 = vrcp.pop %v433
    %v435 = vmul.f32 %v433, %v434
    %v436 = vsub.f32 1.0, %v435
    %v437 = vmul.f32 %v434, %v436
    %v438 = vadd.f32 %v434, %v437
    %vm439 = vweird.f32 %v433
    %vm440 = vweird.f32 %v434
    %vm441 = vmor %vm439, %vm440
    %v442 = vsel %vm441, %v434, %v438
    %v443 = vand.u32 2147483647, %v433
    %vm444 = vcmp.eq.f32.partialorder %v443, 8.507059e+37
    %v445 = vand.u32 %v433, 2147483648
    %v446 = vor.u32 1.1754944e-38, %v445
    %v447 = vsel %vm444, %v446, %v442
    %v448 = vmul.f32 1.0, %v447
    %450 = vrot.lane.b32.xlu0 %v427, 64
    %v451 = vpop.permute.xlu0 %450
    %v453 = vmul.f32 %v448, %v451
    %455 = vrot.lane.b32.xlu0 %v453, 64
    %v456 = vpop.permute.xlu0 %455
    %v458 = vadd.f32 %v401, %v456
    %v459 = vtanh.pop %v458
    %v460 = vsub.f32 1.0, %v448
    %462 = vrot.lane.b32.xlu0 %v459, 96
    %v463 = vpop.permute.xlu0 %462
    %v465 = vmul.f32 %v460, %v463
    %v466 = vmul.f32 %v448, 0.0
    %v467 = vadd.f32 %v465, %v466
    %v469 = vperm.slane %v259, 0
    %472 = vrot.lane.b32.xlu0 %v467, 96
    %v473 = vpop.permute.xlu0 %472
    %v474 = vsel %vm263, %v473, 0
    %476 = vmatpush.msra.mxu0 0.0
    %477 = vmatpush.msra.mxu0 0.0
    %478 = vmatpush.msra.mxu0 0.0
    %479 = vmatpush.msra.mxu0 0.0
    %480 = vmatpush.msra.mxu0 0.0
    %481 = vmatpush.msra.mxu0 0.0
    %482 = vmatpush.msra.mxu0 0.0
    %483 = vmatpush.msra.mxu0 0.0
    %484 = vmatpush.msra.mxu0 0.0
    %485 = vmatpush.msra.mxu0 0.0
    %486 = vmatpush.msra.mxu0 0.0
    %487 = vmatpush.msra.mxu0 0.0
    %488 = vmatpush.msra.mxu0 %v247
    %489 = vmatpush.msra.mxu0 %v246
    %490 = vmatpush.msra.mxu0 %v245
    %491 = vmatpush.msra.mxu0 %v244
    %492 = vmatmul.f32.gmra.mxu0 %v474
    %v493 = vpop.f32.mrf.mxu0
    %v494 = vadd.f32 %v469, %v493
    %495 = vdwg.mxu0
    %v497 = vperm.slane %v262, 0
    %499 = vmatpush.msra.mxu0 0.0
    %500 = vmatpush.msra.mxu0 0.0
    %501 = vmatpush.msra.mxu0 0.0
    %502 = vmatpush.msra.mxu0 0.0
    %503 = vmatpush.msra.mxu0 0.0
    %504 = vmatpush.msra.mxu0 0.0
    %505 = vmatpush.msra.mxu0 0.0
    %506 = vmatpush.msra.mxu0 0.0
    %507 = vmatpush.msra.mxu0 0.0
    %508 = vmatpush.msra.mxu0 0.0
    %509 = vmatpush.msra.mxu0 0.0
    %510 = vmatpush.msra.mxu0 0.0
    %511 = vmatpush.msra.mxu0 %v256
    %512 = vmatpush.msra.mxu0 %v255
    %513 = vmatpush.msra.mxu0 %v254
    %514 = vmatpush.msra.mxu0 %v253
    %515 = vmatmul.f32.gmra.mxu0 %v407
    %v516 = vpop.f32.mrf.mxu0
    %v517 = vadd.f32 %v497, %v516
    %518 = vdwg.mxu0
    %v519 = vadd.f32 %v494, %v517
    %v520 = vxor.u32 %v519, 2147483648
    %v521 = vmul.f32 %v520, 1.442695
    %v522 = vpow.pop %v521
    %v523 = vadd.f32 %v522, 1.0
    %v524 = vrcp.pop %v523
    %v525 = vmul.f32 %v523, %v524
    %v526 = vsub.f32 1.0, %v525
    %v527 = vmul.f32 %v524, %v526
    %v528 = vadd.f32 %v524, %v527
    %vm529 = vweird.f32 %v523
    %vm530 = vweird.f32 %v524
    %vm531 = vmor %vm529, %vm530
    %v532 = vsel %vm531, %v524, %v528
    %v533 = vand.u32 2147483647, %v523
    %vm534 = vcmp.eq.f32.partialorder %v533, 8.507059e+37
    %v535 = vand.u32 %v523, 2147483648
    %v536 = vor.u32 1.1754944e-38, %v535
    %v537 = vsel %vm534, %v536, %v532
    %v538 = vmul.f32 1.0, %v537
    %540 = vrot.lane.b32.xlu0 %v517, 64
    %v541 = vpop.permute.xlu0 %540
    %v543 = vmul.f32 %v538, %v541
    %545 = vrot.lane.b32.xlu0 %v543, 64
    %v546 = vpop.permute.xlu0 %545
    %v548 = vadd.f32 %v494, %v546
    %v549 = vtanh.pop %v548
    %v550 = vsub.f32 1.0, %v538
    %552 = vrot.lane.b32.xlu0 %v549, 96
    %v553 = vpop.permute.xlu0 %552
    %v555 = vmul.f32 %v550, %v553
    %v556 = vmul.f32 %v538, 0.0
    %v557 = vadd.f32 %v555, %v556
    %v559 = vperm.slane %v219, 0
    %562 = vrot.lane.b32.xlu0 %v557, 96
    %v563 = vpop.permute.xlu0 %562
    %v564 = vsel %vm263, %v563, 0
    %566 = vmatpush.msra.mxu0 0.0
    %567 = vmatpush.msra.mxu0 0.0
    %568 = vmatpush.msra.mxu0 0.0
    %569 = vmatpush.msra.mxu0 0.0
    %570 = vmatpush.msra.mxu0 0.0
    %571 = vmatpush.msra.mxu0 0.0
    %572 = vmatpush.msra.mxu0 0.0
    %573 = vmatpush.msra.mxu0 0.0
    %574 = vmatpush.msra.mxu0 0.0
    %575 = vmatpush.msra.mxu0 0.0
    %576 = vmatpush.msra.mxu0 0.0
    %577 = vmatpush.msra.mxu0 0.0
    %578 = vmatpush.msra.mxu0 %v218
    %579 = vmatpush.msra.mxu0 %v217
    %580 = vmatpush.msra.mxu0 %v216
    %581 = vmatpush.msra.mxu0 %v215
    %582 = vmatmul.f32.gmra.mxu0 %v564
    %v583 = vpop.f32.mrf.mxu0
    %v584 = vadd.f32 %v559, %v583
    %585 = vdwg.mxu0
    %v586 = vld [vmem:[%s4] sm:$0xf]
    %v587 = vadd.f32 %v584, %v586
    %v588 = vmul.f32 %v587, 1000.0
    %vm589 = vcmask 19456
    %v590 = vsel %vm589, %v588, -inf
    %591 = vmax.xlane.f32.xlu0 %v590
    %v592 = vpop.xlane.xlu0 %591
    %v593 = vsub.f32 %v588, %v592
    %v594 = vmul.f32 %v593, 1.442695
    %v595 = vpow.pop %v594
    %v596 = vsel %vm589, %v595, 0.0
    %597 = vadd.xlane.f32.xlu0 %v596
    %v598 = vpop.xlane.xlu0 %597
    %v599 = vrcp.pop %v598
    %v600 = vmul.f32 %v595, %v599
    %601 = vmatpush.msra.mxu0 0.0
    %602 = vmatpush.msra.mxu0 0.0
    %603 = vmatpush.msra.mxu0 0.0
    %604 = vmatpush.msra.mxu0 0.0
    %605 = vmatpush.msra.mxu0 0.0
    %606 = vmatpush.msra.mxu0 0.0
    %607 = vmatpush.msra.mxu0 0.0
    %608 = vmatpush.msra.mxu0 0.0
    %609 = vmatpush.msra.mxu0 0.0
    %610 = vmatpush.msra.mxu0 0.0
    %611 = vmatpush.msra.mxu0 0.0
    %612 = vmatpush.msra.mxu0 0.0
    %613 = vmatpush.msra.mxu0 %v223
    %614 = vmatpush.msra.mxu0 %v222
    %615 = vmatpush.msra.mxu0 %v221
    %616 = vmatpush.msra.mxu0 %v220
    %617 = vmatmul.f32.gmra.mxu0 %v564
    %v618 = vpop.f32.mrf.mxu0
    %v619 = vadd.f32 0.0, %v618
    %620 = vdwg.mxu0
    %v622 = vperm.slane %v229, 0
    %v624 = vadd.f32 %v619, %v622
    %626 = vset.pattern.permute.xlu0 0
    %627 = vperm.xlu0 %626, %v600
    %v628 = vpop.permute.xlu0 %627
    %v630 = vmul.f32 %v628, %v624
    %v632 = vperm.slane %v231, 0
    %633 = vrot.lane.b32.xlu0 %v632, 32
    %v634 = vpop.permute.xlu0 %633
    %v636 = vadd.f32 %v619, %v634
    %637 = vset.pattern.permute.xlu0 1
    %638 = vperm.xlu0 %637, %v600
    %v639 = vpop.permute.xlu0 %638
    %v641 = vmul.f32 %v639, %v636
    %643 = vrot.lane.b32.xlu0 %v641, 96
    %v644 = vpop.permute.xlu0 %643
    %v646 = vadd.f32 %v630, %v644
    %v648 = vperm.slane %v233, 0
    %649 = vrot.lane.b32.xlu0 %v648, 64
    %v650 = vpop.permute.xlu0 %649
    %v652 = vadd.f32 %v619, %v650
    %653 = vset.pattern.permute.xlu0 2
    %654 = vperm.xlu0 %653, %v600
    %v655 = vpop.permute.xlu0 %654
    %v657 = vmul.f32 %v655, %v652
    %659 = vrot.lane.b32.xlu0 %v657, 64
    %v660 = vpop.permute.xlu0 %659
    %v662 = vadd.f32 %v646, %v660
    %v664 = vperm.slane %v228, 0
    %v667 = vsel %vm263, %v662, 0
    %669 = vmatpush.msra.mxu0 0.0
    %670 = vmatpush.msra.mxu0 0.0
    %671 = vmatpush.msra.mxu0 0.0
    %672 = vmatpush.msra.mxu0 0.0
    %673 = vmatpush.msra.mxu0 0.0
    %674 = vmatpush.msra.mxu0 0.0
    %675 = vmatpush.msra.mxu0 0.0
    %676 = vmatpush.msra.mxu0 0.0
    %677 = vmatpush.msra.mxu0 0.0
    %678 = vmatpush.msra.mxu0 0.0
    %679 = vmatpush.msra.mxu0 0.0
    %680 = vmatpush.msra.mxu0 0.0
    %681 = vmatpush.msra.mxu0 %v227
    %682 = vmatpush.msra.mxu0 %v226
    %683 = vmatpush.msra.mxu0 %v225
    %684 = vmatpush.msra.mxu0 %v224
    %685 = vmatmul.f32.gmra.mxu0 %v667
    %v686 = vpop.f32.mrf.mxu0
    %v687 = vadd.f32 %v664, %v686
    %688 = vdwg.mxu0
    %v690 = vrot.slane %v687, 1
    %v691 = vrot.slane %v687, 2
    %v692 = vrot.slane %v687, 3
    %696 = vst [vmem:[#allocation19] sm:$0x1] %v687
    %697 = vst [vmem:[#allocation19 + $0x8] sm:$0x1] %v690
    %698 = vst [vmem:[#allocation19 + $0x10] sm:$0x1] %v691
    %699 = vst [vmem:[#allocation19 + $0x18] sm:$0x1] %v692
    %v700 = vmul.f32 %v628, %v290
    %v701 = vmul.f32 %v639, %v296
    %703 = vrot.lane.b32.xlu0 %v701, 96
    %v704 = vpop.permute.xlu0 %703
    %v706 = vadd.f32 %v700, %v704
    %v707 = vmul.f32 %v655, %v302
    %709 = vrot.lane.b32.xlu0 %v707, 64
    %v710 = vpop.permute.xlu0 %709
    %v712 = vadd.f32 %v706, %v710
    %v713 = vmul.f32 %v628, %v327
    %v714 = vmul.f32 %v639, %v350
    %v715 = vadd.f32 %v713, %v714
    %v716 = vmul.f32 %v655, %v374
    %v717 = vadd.f32 %v715, %v716
    %v718 = vadd.f32 %v712, %v717
    %v720 = vsel %vm263, %v718, 0
    %722 = vmatpush.msra.mxu0 0.0
    %723 = vmatpush.msra.mxu0 0.0
    %724 = vmatpush.msra.mxu0 0.0
    %725 = vmatpush.msra.mxu0 0.0
    %726 = vmatpush.msra.mxu0 0.0
    %727 = vmatpush.msra.mxu0 0.0
    %728 = vmatpush.msra.mxu0 0.0
    %729 = vmatpush.msra.mxu0 0.0
    %730 = vmatpush.msra.mxu0 0.0
    %731 = vmatpush.msra.mxu0 0.0
    %732 = vmatpush.msra.mxu0 0.0
    %733 = vmatpush.msra.mxu0 0.0
    %734 = vmatpush.msra.mxu0 %v242
    %735 = vmatpush.msra.mxu0 %v241
    %736 = vmatpush.msra.mxu0 %v240
    %737 = vmatpush.msra.mxu0 %v239
    %738 = vmatmul.f32.gmra.mxu0 %v720
    %v739 = vpop.f32.mrf.mxu0
    %v740 = vadd.f32 %v378, %v739
    %741 = vdwg.mxu0
    %742 = vmatpush.msra.mxu0 0.0
    %743 = vmatpush.msra.mxu0 0.0
    %744 = vmatpush.msra.mxu0 0.0
    %745 = vmatpush.msra.mxu0 0.0
    %746 = vmatpush.msra.mxu0 0.0
    %747 = vmatpush.msra.mxu0 0.0
    %748 = vmatpush.msra.mxu0 0.0
    %749 = vmatpush.msra.mxu0 0.0
    %750 = vmatpush.msra.mxu0 0.0
    %751 = vmatpush.msra.mxu0 0.0
    %752 = vmatpush.msra.mxu0 0.0
    %753 = vmatpush.msra.mxu0 0.0
    %754 = vmatpush.msra.mxu0 %v251
    %755 = vmatpush.msra.mxu0 %v250
    %756 = vmatpush.msra.mxu0 %v249
    %757 = vmatpush.msra.mxu0 %v248
    %758 = vmatmul.f32.gmra.mxu0 %v474
    %v759 = vpop.f32.mrf.mxu0
    %v760 = vadd.f32 %v404, %v759
    %761 = vdwg.mxu0
    %v762 = vadd.f32 %v740, %v760
    %v763 = vxor.u32 %v762, 2147483648
    %v764 = vmul.f32 %v763, 1.442695
    %v765 = vpow.pop %v764
    %v766 = vadd.f32 %v765, 1.0
    %v767 = vrcp.pop %v766
    %v768 = vmul.f32 %v766, %v767
    %v769 = vsub.f32 1.0, %v768
    %v770 = vmul.f32 %v767, %v769
    %v771 = vadd.f32 %v767, %v770
    %vm772 = vweird.f32 %v766
    %vm773 = vweird.f32 %v767
    %vm774 = vmor %vm772, %vm773
    %v775 = vsel %vm774, %v767, %v771
    %v776 = vand.u32 2147483647, %v766
    %vm777 = vcmp.eq.f32.partialorder %v776, 8.507059e+37
    %v778 = vand.u32 %v766, 2147483648
    %v779 = vor.u32 1.1754944e-38, %v778
    %v780 = vsel %vm777, %v779, %v775
    %v781 = vmul.f32 1.0, %v780
    %783 = vrot.lane.b32.xlu0 %v760, 64
    %v784 = vpop.permute.xlu0 %783
    %v786 = vmul.f32 %v781, %v784
    %788 = vrot.lane.b32.xlu0 %v786, 64
    %v789 = vpop.permute.xlu0 %788
    %v791 = vadd.f32 %v740, %v789
    %v792 = vtanh.pop %v791
    %v793 = vsub.f32 1.0, %v781
    %795 = vrot.lane.b32.xlu0 %v792, 96
    %v796 = vpop.permute.xlu0 %795
    %v798 = vmul.f32 %v793, %v796
    %v799 = vmul.f32 %v781, %v467
    %v800 = vadd.f32 %v798, %v799
    %802 = vrot.lane.b32.xlu0 %v800, 96
    %v803 = vpop.permute.xlu0 %802
    %v804 = vsel %vm263, %v803, 0
    %806 = vmatpush.msra.mxu0 0.0
    %807 = vmatpush.msra.mxu0 0.0
    %808 = vmatpush.msra.mxu0 0.0
    %809 = vmatpush.msra.mxu0 0.0
    %810 = vmatpush.msra.mxu0 0.0
    %811 = vmatpush.msra.mxu0 0.0
    %812 = vmatpush.msra.mxu0 0.0
    %813 = vmatpush.msra.mxu0 0.0
    %814 = vmatpush.msra.mxu0 0.0
    %815 = vmatpush.msra.mxu0 0.0
    %816 = vmatpush.msra.mxu0 0.0
    %817 = vmatpush.msra.mxu0 0.0
    %818 = vmatpush.msra.mxu0 %v247
    %819 = vmatpush.msra.mxu0 %v246
    %820 = vmatpush.msra.mxu0 %v245
    %821 = vmatpush.msra.mxu0 %v244
    %822 = vmatmul.f32.gmra.mxu0 %v804
    %v823 = vpop.f32.mrf.mxu0
    %v824 = vadd.f32 %v469, %v823
    %825 = vdwg.mxu0
    %826 = vmatpush.msra.mxu0 0.0
    %827 = vmatpush.msra.mxu0 0.0
    %828 = vmatpush.msra.mxu0 0.0
    %829 = vmatpush.msra.mxu0 0.0
    %830 = vmatpush.msra.mxu0 0.0
    %831 = vmatpush.msra.mxu0 0.0
    %832 = vmatpush.msra.mxu0 0.0
    %833 = vmatpush.msra.mxu0 0.0
    %834 = vmatpush.msra.mxu0 0.0
    %835 = vmatpush.msra.mxu0 0.0
    %836 = vmatpush.msra.mxu0 0.0
    %837 = vmatpush.msra.mxu0 0.0
    %838 = vmatpush.msra.mxu0 %v256
    %839 = vmatpush.msra.mxu0 %v255
    %840 = vmatpush.msra.mxu0 %v254
    %841 = vmatpush.msra.mxu0 %v253
    %842 = vmatmul.f32.gmra.mxu0 %v564
    %v843 = vpop.f32.mrf.mxu0
    %v844 = vadd.f32 %v497, %v843
    %845 = vdwg.mxu0
    %v846 = vadd.f32 %v824, %v844
    %v847 = vxor.u32 %v846, 2147483648
    %v848 = vmul.f32 %v847, 1.442695
    %v849 = vpow.pop %v848
    %v850 = vadd.f32 %v849, 1.0
    %v851 = vrcp.pop %v850
    %v852 = vmul.f32 %v850, %v851
    %v853 = vsub.f32 1.0, %v852
    %v854 = vmul.f32 %v851, %v853
    %v855 = vadd.f32 %v851, %v854
    %vm856 = vweird.f32 %v850
    %vm857 = vweird.f32 %v851
    %vm858 = vmor %vm856, %vm857
    %v859 = vsel %vm858, %v851, %v855
    %v860 = vand.u32 2147483647, %v850
    %vm861 = vcmp.eq.f32.partialorder %v860, 8.507059e+37
    %v862 = vand.u32 %v850, 2147483648
    %v863 = vor.u32 1.1754944e-38, %v862
    %v864 = vsel %vm861, %v863, %v859
    %v865 = vmul.f32 1.0, %v864
    %867 = vrot.lane.b32.xlu0 %v844, 64
    %v868 = vpop.permute.xlu0 %867
    %v870 = vmul.f32 %v865, %v868
    %872 = vrot.lane.b32.xlu0 %v870, 64
    %v873 = vpop.permute.xlu0 %872
    %v875 = vadd.f32 %v824, %v873
    %v876 = vtanh.pop %v875
    %v877 = vsub.f32 1.0, %v865
    %879 = vrot.lane.b32.xlu0 %v876, 96
    %v880 = vpop.permute.xlu0 %879
    %v882 = vmul.f32 %v877, %v880
    %v883 = vmul.f32 %v865, %v557
    %v884 = vadd.f32 %v882, %v883
    %886 = vrot.lane.b32.xlu0 %v884, 96
    %v887 = vpop.permute.xlu0 %886
    %v888 = vsel %vm263, %v887, 0
    %890 = vmatpush.msra.mxu0 0.0
    %891 = vmatpush.msra.mxu0 0.0
    %892 = vmatpush.msra.mxu0 0.0
    %893 = vmatpush.msra.mxu0 0.0
    %894 = vmatpush.msra.mxu0 0.0
    %895 = vmatpush.msra.mxu0 0.0
    %896 = vmatpush.msra.mxu0 0.0
    %897 = vmatpush.msra.mxu0 0.0
    %898 = vmatpush.msra.mxu0 0.0
    %899 = vmatpush.msra.mxu0 0.0
    %900 = vmatpush.msra.mxu0 0.0
    %901 = vmatpush.msra.mxu0 0.0
    %902 = vmatpush.msra.mxu0 %v218
    %903 = vmatpush.msra.mxu0 %v217
    %904 = vmatpush.msra.mxu0 %v216
    %905 = vmatpush.msra.mxu0 %v215
    %906 = vmatmul.f32.gmra.mxu0 %v888
    %v907 = vpop.f32.mrf.mxu0
    %v908 = vadd.f32 %v559, %v907
    %909 = vdwg.mxu0
    %s910 = scalar_lea.vmem %s4, 4
    %v911 = vld [vmem:[%s910] sm:$0xf]
    %v912 = vadd.f32 %v908, %v911
    %v913 = vmul.f32 %v912, 1000.0
    %v914 = vsel %vm589, %v913, -inf
    %915 = vmax.xlane.f32.xlu0 %v914
    %v916 = vpop.xlane.xlu0 %915
    %v917 = vsub.f32 %v913, %v916
    %v918 = vmul.f32 %v917, 1.442695
    %v919 = vpow.pop %v918
    %v920 = vsel %vm589, %v919, 0.0
    %921 = vadd.xlane.f32.xlu0 %v920
    %v922 = vpop.xlane.xlu0 %921
    %v923 = vrcp.pop %v922
    %v924 = vmul.f32 %v919, %v923
    %925 = vmatpush.msra.mxu0 0.0
    %926 = vmatpush.msra.mxu0 0.0
    %927 = vmatpush.msra.mxu0 0.0
    %928 = vmatpush.msra.mxu0 0.0
    %929 = vmatpush.msra.mxu0 0.0
    %930 = vmatpush.msra.mxu0 0.0
    %931 = vmatpush.msra.mxu0 0.0
    %932 = vmatpush.msra.mxu0 0.0
    %933 = vmatpush.msra.mxu0 0.0
    %934 = vmatpush.msra.mxu0 0.0
    %935 = vmatpush.msra.mxu0 0.0
    %936 = vmatpush.msra.mxu0 0.0
    %937 = vmatpush.msra.mxu0 %v223
    %938 = vmatpush.msra.mxu0 %v222
    %939 = vmatpush.msra.mxu0 %v221
    %940 = vmatpush.msra.mxu0 %v220
    %941 = vmatmul.f32.gmra.mxu0 %v888
    %v942 = vpop.f32.mrf.mxu0
    %v943 = vadd.f32 0.0, %v942
    %944 = vdwg.mxu0
    %v945 = vadd.f32 %v943, %v622
    %947 = vset.pattern.permute.xlu0 0
    %948 = vperm.xlu0 %947, %v924
    %v949 = vpop.permute.xlu0 %948
    %v951 = vmul.f32 %v949, %v945
    %v952 = vadd.f32 %v943, %v634
    %953 = vset.pattern.permute.xlu0 1
    %954 = vperm.xlu0 %953, %v924
    %v955 = vpop.permute.xlu0 %954
    %v957 = vmul.f32 %v955, %v952
    %959 = vrot.lane.b32.xlu0 %v957, 96
    %v960 = vpop.permute.xlu0 %959
    %v962 = vadd.f32 %v951, %v960
    %v963 = vadd.f32 %v943, %v650
    %964 = vset.pattern.permute.xlu0 2
    %965 = vperm.xlu0 %964, %v924
    %v966 = vpop.permute.xlu0 %965
    %v968 = vmul.f32 %v966, %v963
    %970 = vrot.lane.b32.xlu0 %v968, 64
    %v971 = vpop.permute.xlu0 %970
    %v973 = vadd.f32 %v962, %v971
    %v975 = vsel %vm263, %v973, 0
    %977 = vmatpush.msra.mxu0 0.0
    %978 = vmatpush.msra.mxu0 0.0
    %979 = vmatpush.msra.mxu0 0.0
    %980 = vmatpush.msra.mxu0 0.0
    %981 = vmatpush.msra.mxu0 0.0
    %982 = vmatpush.msra.mxu0 0.0
    %983 = vmatpush.msra.mxu0 0.0
    %984 = vmatpush.msra.mxu0 0.0
    %985 = vmatpush.msra.mxu0 0.0
    %986 = vmatpush.msra.mxu0 0.0
    %987 = vmatpush.msra.mxu0 0.0
    %988 = vmatpush.msra.mxu0 0.0
    %989 = vmatpush.msra.mxu0 %v227
    %990 = vmatpush.msra.mxu0 %v226
    %991 = vmatpush.msra.mxu0 %v225
    %992 = vmatpush.msra.mxu0 %v224
    %993 = vmatmul.f32.gmra.mxu0 %v975
    %v994 = vpop.f32.mrf.mxu0
    %v995 = vadd.f32 %v664, %v994
    %996 = vdwg.mxu0
    %v998 = vrot.slane %v995, 1
    %v999 = vrot.slane %v995, 2
    %v1000 = vrot.slane %v995, 3
    %1004 = vst [vmem:[#allocation19 + $0x1] sm:$0x1] %v995
    %1005 = vst [vmem:[#allocation19 + $0x9] sm:$0x1] %v998
    %1006 = vst [vmem:[#allocation19 + $0x11] sm:$0x1] %v999
    %1007 = vst [vmem:[#allocation19 + $0x19] sm:$0x1] %v1000
    %v1008 = vmul.f32 %v949, %v290
    %v1009 = vmul.f32 %v955, %v296
    %1011 = vrot.lane.b32.xlu0 %v1009, 96
    %v1012 = vpop.permute.xlu0 %1011
    %v1014 = vadd.f32 %v1008, %v1012
    %v1015 = vmul.f32 %v966, %v302
    %1017 = vrot.lane.b32.xlu0 %v1015, 64
    %v1018 = vpop.permute.xlu0 %1017
    %v1020 = vadd.f32 %v1014, %v1018
    %v1021 = vmul.f32 %v949, %v327
    %v1022 = vmul.f32 %v955, %v350
    %v1023 = vadd.f32 %v1021, %v1022
    %v1024 = vmul.f32 %v966, %v374
    %v1025 = vadd.f32 %v1023, %v1024
    %v1026 = vadd.f32 %v1020, %v1025
    %v1028 = vsel %vm263, %v1026, 0
    %1030 = vmatpush.msra.mxu0 0.0
    %1031 = vmatpush.msra.mxu0 0.0
    %1032 = vmatpush.msra.mxu0 0.0
    %1033 = vmatpush.msra.mxu0 0.0
    %1034 = vmatpush.msra.mxu0 0.0
    %1035 = vmatpush.msra.mxu0 0.0
    %1036 = vmatpush.msra.mxu0 0.0
    %1037 = vmatpush.msra.mxu0 0.0
    %1038 = vmatpush.msra.mxu0 0.0
    %1039 = vmatpush.msra.mxu0 0.0
    %1040 = vmatpush.msra.mxu0 0.0
    %1041 = vmatpush.msra.mxu0 0.0
    %1042 = vmatpush.msra.mxu0 %v242
    %1043 = vmatpush.msra.mxu0 %v241
    %1044 = vmatpush.msra.mxu0 %v240
    %1045 = vmatpush.msra.mxu0 %v239
    %1046 = vmatmul.f32.gmra.mxu0 %v1028
    %v1047 = vpop.f32.mrf.mxu0
    %v1048 = vadd.f32 %v378, %v1047
    %1049 = vdwg.mxu0
    %1050 = vmatpush.msra.mxu0 0.0
    %1051 = vmatpush.msra.mxu0 0.0
    %1052 = vmatpush.msra.mxu0 0.0
    %1053 = vmatpush.msra.mxu0 0.0
    %1054 = vmatpush.msra.mxu0 0.0
    %1055 = vmatpush.msra.mxu0 0.0
    %1056 = vmatpush.msra.mxu0 0.0
    %1057 = vmatpush.msra.mxu0 0.0
    %1058 = vmatpush.msra.mxu0 0.0
    %1059 = vmatpush.msra.mxu0 0.0
    %1060 = vmatpush.msra.mxu0 0.0
    %1061 = vmatpush.msra.mxu0 0.0
    %1062 = vmatpush.msra.mxu0 %v251
    %1063 = vmatpush.msra.mxu0 %v250
    %1064 = vmatpush.msra.mxu0 %v249
    %1065 = vmatpush.msra.mxu0 %v248
    %1066 = vmatmul.f32.gmra.mxu0 %v804
    %v1067 = vpop.f32.mrf.mxu0
    %v1068 = vadd.f32 %v404, %v1067
    %1069 = vdwg.mxu0
    %v1070 = vadd.f32 %v1048, %v1068
    %v1071 = vxor.u32 %v1070, 2147483648
    %v1072 = vmul.f32 %v1071, 1.442695
    %v1073 = vpow.pop %v1072
    %v1074 = vadd.f32 %v1073, 1.0
    %v1075 = vrcp.pop %v1074
    %v1076 = vmul.f32 %v1074, %v1075
    %v1077 = vsub.f32 1.0, %v1076
    %v1078 = vmul.f32 %v1075, %v1077
    %v1079 = vadd.f32 %v1075, %v1078
    %vm1080 = vweird.f32 %v1074
    %vm1081 = vweird.f32 %v1075
    %vm1082 = vmor %vm1080, %vm1081
    %v1083 = vsel %vm1082, %v1075, %v1079
    %v1084 = vand.u32 2147483647, %v1074
    %vm1085 = vcmp.eq.f32.partialorder %v1084, 8.507059e+37
    %v1086 = vand.u32 %v1074, 2147483648
    %v1087 = vor.u32 1.1754944e-38, %v1086
    %v1088 = vsel %vm1085, %v1087, %v1083
    %v1089 = vmul.f32 1.0, %v1088
    %1091 = vrot.lane.b32.xlu0 %v1068, 64
    %v1092 = vpop.permute.xlu0 %1091
    %v1094 = vmul.f32 %v1089, %v1092
    %1096 = vrot.lane.b32.xlu0 %v1094, 64
    %v1097 = vpop.permute.xlu0 %1096
    %v1099 = vadd.f32 %v1048, %v1097
    %v1100 = vtanh.pop %v1099
    %v1101 = vsub.f32 1.0, %v1089
    %1103 = vrot.lane.b32.xlu0 %v1100, 96
    %v1104 = vpop.permute.xlu0 %1103
    %v1106 = vmul.f32 %v1101, %v1104
    %v1107 = vmul.f32 %v1089, %v800
    %v1108 = vadd.f32 %v1106, %v1107
    %1110 = vrot.lane.b32.xlu0 %v1108, 96
    %v1111 = vpop.permute.xlu0 %1110
    %v1112 = vsel %vm263, %v1111, 0
    %1114 = vmatpush.msra.mxu0 0.0
    %1115 = vmatpush.msra.mxu0 0.0
    %1116 = vmatpush.msra.mxu0 0.0
    %1117 = vmatpush.msra.mxu0 0.0
    %1118 = vmatpush.msra.mxu0 0.0
    %1119 = vmatpush.msra.mxu0 0.0
    %1120 = vmatpush.msra.mxu0 0.0
    %1121 = vmatpush.msra.mxu0 0.0
    %1122 = vmatpush.msra.mxu0 0.0
    %1123 = vmatpush.msra.mxu0 0.0
    %1124 = vmatpush.msra.mxu0 0.0
    %1125 = vmatpush.msra.mxu0 0.0
    %1126 = vmatpush.msra.mxu0 %v247
    %1127 = vmatpush.msra.mxu0 %v246
    %1128 = vmatpush.msra.mxu0 %v245
    %1129 = vmatpush.msra.mxu0 %v244
    %1130 = vmatmul.f32.gmra.mxu0 %v1112
    %v1131 = vpop.f32.mrf.mxu0
    %v1132 = vadd.f32 %v469, %v1131
    %1133 = vdwg.mxu0
    %1134 = vmatpush.msra.mxu0 0.0
    %1135 = vmatpush.msra.mxu0 0.0
    %1136 = vmatpush.msra.mxu0 0.0
    %1137 = vmatpush.msra.mxu0 0.0
    %1138 = vmatpush.msra.mxu0 0.0
    %1139 = vmatpush.msra.mxu0 0.0
    %1140 = vmatpush.msra.mxu0 0.0
    %1141 = vmatpush.msra.mxu0 0.0
    %1142 = vmatpush.msra.mxu0 0.0
    %1143 = vmatpush.msra.mxu0 0.0
    %1144 = vmatpush.msra.mxu0 0.0
    %1145 = vmatpush.msra.mxu0 0.0
    %1146 = vmatpush.msra.mxu0 %v256
    %1147 = vmatpush.msra.mxu0 %v255
    %1148 = vmatpush.msra.mxu0 %v254
    %1149 = vmatpush.msra.mxu0 %v253
    %1150 = vmatmul.f32.gmra.mxu0 %v888
    %v1151 = vpop.f32.mrf.mxu0
    %v1152 = vadd.f32 %v497, %v1151
    %1153 = vdwg.mxu0
    %v1154 = vadd.f32 %v1132, %v1152
    %v1155 = vxor.u32 %v1154, 2147483648
    %v1156 = vmul.f32 %v1155, 1.442695
    %v1157 = vpow.pop %v1156
    %v1158 = vadd.f32 %v1157, 1.0
    %v1159 = vrcp.pop %v1158
    %v1160 = vmul.f32 %v1158, %v1159
    %v1161 = vsub.f32 1.0, %v1160
    %v1162 = vmul.f32 %v1159, %v1161
    %v1163 = vadd.f32 %v1159, %v1162
    %vm1164 = vweird.f32 %v1158
    %vm1165 = vweird.f32 %v1159
    %vm1166 = vmor %vm1164, %vm1165
    %v1167 = vsel %vm1166, %v1159, %v1163
    %v1168 = vand.u32 2147483647, %v1158
    %vm1169 = vcmp.eq.f32.partialorder %v1168, 8.507059e+37
    %v1170 = vand.u32 %v1158, 2147483648
    %v1171 = vor.u32 1.1754944e-38, %v1170
    %v1172 = vsel %vm1169, %v1171, %v1167
    %v1173 = vmul.f32 1.0, %v1172
    %1175 = vrot.lane.b32.xlu0 %v1152, 64
    %v1176 = vpop.permute.xlu0 %1175
    %v1178 = vmul.f32 %v1173, %v1176
    %1180 = vrot.lane.b32.xlu0 %v1178, 64
    %v1181 = vpop.permute.xlu0 %1180
    %v1183 = vadd.f32 %v1132, %v1181
    %v1184 = vtanh.pop %v1183
    %v1185 = vsub.f32 1.0, %v1173
    %1187 = vrot.lane.b32.xlu0 %v1184, 96
    %v1188 = vpop.permute.xlu0 %1187
    %v1190 = vmul.f32 %v1185, %v1188
    %v1191 = vmul.f32 %v1173, %v884
    %v1192 = vadd.f32 %v1190, %v1191
    %1194 = vrot.lane.b32.xlu0 %v1192, 96
    %v1195 = vpop.permute.xlu0 %1194
    %v1196 = vsel %vm263, %v1195, 0
    %1198 = vmatpush.msra.mxu0 0.0
    %1199 = vmatpush.msra.mxu0 0.0
    %1200 = vmatpush.msra.mxu0 0.0
    %1201 = vmatpush.msra.mxu0 0.0
    %1202 = vmatpush.msra.mxu0 0.0
    %1203 = vmatpush.msra.mxu0 0.0
    %1204 = vmatpush.msra.mxu0 0.0
    %1205 = vmatpush.msra.mxu0 0.0
    %1206 = vmatpush.msra.mxu0 0.0
    %1207 = vmatpush.msra.mxu0 0.0
    %1208 = vmatpush.msra.mxu0 0.0
    %1209 = vmatpush.msra.mxu0 0.0
    %1210 = vmatpush.msra.mxu0 %v218
    %1211 = vmatpush.msra.mxu0 %v217
    %1212 = vmatpush.msra.mxu0 %v216
    %1213 = vmatpush.msra.mxu0 %v215
    %1214 = vmatmul.f32.gmra.mxu0 %v1196
    %v1215 = vpop.f32.mrf.mxu0
    %v1216 = vadd.f32 %v559, %v1215
    %1217 = vdwg.mxu0
    %s1218 = scalar_lea.vmem %s4, 8
    %v1219 = vld [vmem:[%s1218] sm:$0xf]
    %v1220 = vadd.f32 %v1216, %v1219
    %v1221 = vmul.f32 %v1220, 1000.0
    %v1222 = vsel %vm589, %v1221, -inf
    %1223 = vmax.xlane.f32.xlu0 %v1222
    %v1224 = vpop.xlane.xlu0 %1223
    %v1225 = vsub.f32 %v1221, %v1224
    %v1226 = vmul.f32 %v1225, 1.442695
    %v1227 = vpow.pop %v1226
    %v1228 = vsel %vm589, %v1227, 0.0
    %1229 = vadd.xlane.f32.xlu0 %v1228
    %v1230 = vpop.xlane.xlu0 %1229
    %v1231 = vrcp.pop %v1230
    %v1232 = vmul.f32 %v1227, %v1231
    %1233 = vmatpush.msra.mxu0 0.0
    %1234 = vmatpush.msra.mxu0 0.0
    %1235 = vmatpush.msra.mxu0 0.0
    %1236 = vmatpush.msra.mxu0 0.0
    %1237 = vmatpush.msra.mxu0 0.0
    %1238 = vmatpush.msra.mxu0 0.0
    %1239 = vmatpush.msra.mxu0 0.0
    %1240 = vmatpush.msra.mxu0 0.0
    %1241 = vmatpush.msra.mxu0 0.0
    %1242 = vmatpush.msra.mxu0 0.0
    %1243 = vmatpush.msra.mxu0 0.0
    %1244 = vmatpush.msra.mxu0 0.0
    %1245 = vmatpush.msra.mxu0 %v223
    %1246 = vmatpush.msra.mxu0 %v222
    %1247 = vmatpush.msra.mxu0 %v221
    %1248 = vmatpush.msra.mxu0 %v220
    %1249 = vmatmul.f32.gmra.mxu0 %v1196
    %v1250 = vpop.f32.mrf.mxu0
    %v1251 = vadd.f32 0.0, %v1250
    %1252 = vdwg.mxu0
    %v1253 = vadd.f32 %v1251, %v622
    %1255 = vset.pattern.permute.xlu0 0
    %1256 = vperm.xlu0 %1255, %v1232
    %v1257 = vpop.permute.xlu0 %1256
    %v1259 = vmul.f32 %v1257, %v1253
    %v1260 = vadd.f32 %v1251, %v634
    %1261 = vset.pattern.permute.xlu0 1
    %1262 = vperm.xlu0 %1261, %v1232
    %v1263 = vpop.permute.xlu0 %1262
    %v1265 = vmul.f32 %v1263, %v1260
    %1267 = vrot.lane.b32.xlu0 %v1265, 96
    %v1268 = vpop.permute.xlu0 %1267
    %v1270 = vadd.f32 %v1259, %v1268
    %v1271 = vadd.f32 %v1251, %v650
    %1272 = vset.pattern.permute.xlu0 2
    %1273 = vperm.xlu0 %1272, %v1232
    %v1274 = vpop.permute.xlu0 %1273
    %v1276 = vmul.f32 %v1274, %v1271
    %1278 = vrot.lane.b32.xlu0 %v1276, 64
    %v1279 = vpop.permute.xlu0 %1278
    %v1281 = vadd.f32 %v1270, %v1279
    %v1283 = vsel %vm263, %v1281, 0
    %1285 = vmatpush.msra.mxu0 0.0
    %1286 = vmatpush.msra.mxu0 0.0
    %1287 = vmatpush.msra.mxu0 0.0
    %1288 = vmatpush.msra.mxu0 0.0
    %1289 = vmatpush.msra.mxu0 0.0
    %1290 = vmatpush.msra.mxu0 0.0
    %1291 = vmatpush.msra.mxu0 0.0
    %1292 = vmatpush.msra.mxu0 0.0
    %1293 = vmatpush.msra.mxu0 0.0
    %1294 = vmatpush.msra.mxu0 0.0
    %1295 = vmatpush.msra.mxu0 0.0
    %1296 = vmatpush.msra.mxu0 0.0
    %1297 = vmatpush.msra.mxu0 %v227
    %1298 = vmatpush.msra.mxu0 %v226
    %1299 = vmatpush.msra.mxu0 %v225
    %1300 = vmatpush.msra.mxu0 %v224
    %1301 = vmatmul.f32.gmra.mxu0 %v1283
    %v1302 = vpop.f32.mrf.mxu0
    %v1303 = vadd.f32 %v664, %v1302
    %1304 = vdwg.mxu0
    %v1306 = vrot.slane %v1303, 1
    %v1307 = vrot.slane %v1303, 2
    %v1308 = vrot.slane %v1303, 3
    %1312 = vst [vmem:[#allocation19 + $0x2] sm:$0x1] %v1303
    %1313 = vst [vmem:[#allocation19 + $0xa] sm:$0x1] %v1306
    %1314 = vst [vmem:[#allocation19 + $0x12] sm:$0x1] %v1307
    %1315 = vst [vmem:[#allocation19 + $0x1a] sm:$0x1] %v1308
    %v1316 = vmul.f32 %v1257, %v290
    %v1317 = vmul.f32 %v1263, %v296
    %1319 = vrot.lane.b32.xlu0 %v1317, 96
    %v1320 = vpop.permute.xlu0 %1319
    %v1322 = vadd.f32 %v1316, %v1320
    %v1323 = vmul.f32 %v1274, %v302
    %1325 = vrot.lane.b32.xlu0 %v1323, 64
    %v1326 = vpop.permute.xlu0 %1325
    %v1328 = vadd.f32 %v1322, %v1326
    %v1329 = vmul.f32 %v1257, %v327
    %v1330 = vmul.f32 %v1263, %v350
    %v1331 = vadd.f32 %v1329, %v1330
    %v1332 = vmul.f32 %v1274, %v374
    %v1333 = vadd.f32 %v1331, %v1332
    %v1334 = vadd.f32 %v1328, %v1333
    %v1336 = vsel %vm263, %v1334, 0
    %1338 = vmatpush.msra.mxu0 0.0
    %1339 = vmatpush.msra.mxu0 0.0
    %1340 = vmatpush.msra.mxu0 0.0
    %1341 = vmatpush.msra.mxu0 0.0
    %1342 = vmatpush.msra.mxu0 0.0
    %1343 = vmatpush.msra.mxu0 0.0
    %1344 = vmatpush.msra.mxu0 0.0
    %1345 = vmatpush.msra.mxu0 0.0
    %1346 = vmatpush.msra.mxu0 0.0
    %1347 = vmatpush.msra.mxu0 0.0
    %1348 = vmatpush.msra.mxu0 0.0
    %1349 = vmatpush.msra.mxu0 0.0
    %1350 = vmatpush.msra.mxu0 %v242
    %1351 = vmatpush.msra.mxu0 %v241
    %1352 = vmatpush.msra.mxu0 %v240
    %1353 = vmatpush.msra.mxu0 %v239
    %1354 = vmatmul.f32.gmra.mxu0 %v1336
    %v1355 = vpop.f32.mrf.mxu0
    %v1356 = vadd.f32 %v378, %v1355
    %1357 = vdwg.mxu0
    %1358 = vmatpush.msra.mxu0 0.0
    %1359 = vmatpush.msra.mxu0 0.0
    %1360 = vmatpush.msra.mxu0 0.0
    %1361 = vmatpush.msra.mxu0 0.0
    %1362 = vmatpush.msra.mxu0 0.0
    %1363 = vmatpush.msra.mxu0 0.0
    %1364 = vmatpush.msra.mxu0 0.0
    %1365 = vmatpush.msra.mxu0 0.0
    %1366 = vmatpush.msra.mxu0 0.0
    %1367 = vmatpush.msra.mxu0 0.0
    %1368 = vmatpush.msra.mxu0 0.0
    %1369 = vmatpush.msra.mxu0 0.0
    %1370 = vmatpush.msra.mxu0 %v251
    %1371 = vmatpush.msra.mxu0 %v250
    %1372 = vmatpush.msra.mxu0 %v249
    %1373 = vmatpush.msra.mxu0 %v248
    %1374 = vmatmul.f32.gmra.mxu0 %v1112
    %v1375 = vpop.f32.mrf.mxu0
    %v1376 = vadd.f32 %v404, %v1375
    %1377 = vdwg.mxu0
    %v1378 = vadd.f32 %v1356, %v1376
    %v1379 = vxor.u32 %v1378, 2147483648
    %v1380 = vmul.f32 %v1379, 1.442695
    %v1381 = vpow.pop %v1380
    %v1382 = vadd.f32 %v1381, 1.0
    %v1383 = vrcp.pop %v1382
    %v1384 = vmul.f32 %v1382, %v1383
    %v1385 = vsub.f32 1.0, %v1384
    %v1386 = vmul.f32 %v1383, %v1385
    %v1387 = vadd.f32 %v1383, %v1386
    %vm1388 = vweird.f32 %v1382
    %vm1389 = vweird.f32 %v1383
    %vm1390 = vmor %vm1388, %vm1389
    %v1391 = vsel %vm1390, %v1383, %v1387
    %v1392 = vand.u32 2147483647, %v1382
    %vm1393 = vcmp.eq.f32.partialorder %v1392, 8.507059e+37
    %v1394 = vand.u32 %v1382, 2147483648
    %v1395 = vor.u32 1.1754944e-38, %v1394
    %v1396 = vsel %vm1393, %v1395, %v1391
    %v1397 = vmul.f32 1.0, %v1396
    %1399 = vrot.lane.b32.xlu0 %v1376, 64
    %v1400 = vpop.permute.xlu0 %1399
    %v1402 = vmul.f32 %v1397, %v1400
    %1404 = vrot.lane.b32.xlu0 %v1402, 64
    %v1405 = vpop.permute.xlu0 %1404
    %v1407 = vadd.f32 %v1356, %v1405
    %v1408 = vtanh.pop %v1407
    %v1409 = vsub.f32 1.0, %v1397
    %1411 = vrot.lane.b32.xlu0 %v1408, 96
    %v1412 = vpop.permute.xlu0 %1411
    %v1414 = vmul.f32 %v1409, %v1412
    %v1415 = vmul.f32 %v1397, %v1108
    %v1416 = vadd.f32 %v1414, %v1415
    %1418 = vrot.lane.b32.xlu0 %v1416, 96
    %v1419 = vpop.permute.xlu0 %1418
    %v1420 = vsel %vm263, %v1419, 0
    %1422 = vmatpush.msra.mxu0 0.0
    %1423 = vmatpush.msra.mxu0 0.0
    %1424 = vmatpush.msra.mxu0 0.0
    %1425 = vmatpush.msra.mxu0 0.0
    %1426 = vmatpush.msra.mxu0 0.0
    %1427 = vmatpush.msra.mxu0 0.0
    %1428 = vmatpush.msra.mxu0 0.0
    %1429 = vmatpush.msra.mxu0 0.0
    %1430 = vmatpush.msra.mxu0 0.0
    %1431 = vmatpush.msra.mxu0 0.0
    %1432 = vmatpush.msra.mxu0 0.0
    %1433 = vmatpush.msra.mxu0 0.0
    %1434 = vmatpush.msra.mxu0 %v247
    %1435 = vmatpush.msra.mxu0 %v246
    %1436 = vmatpush.msra.mxu0 %v245
    %1437 = vmatpush.msra.mxu0 %v244
    %1438 = vmatmul.f32.gmra.mxu0 %v1420
    %v1439 = vpop.f32.mrf.mxu0
    %v1440 = vadd.f32 %v469, %v1439
    %1441 = vdwg.mxu0
    %1442 = vmatpush.msra.mxu0 0.0
    %1443 = vmatpush.msra.mxu0 0.0
    %1444 = vmatpush.msra.mxu0 0.0
    %1445 = vmatpush.msra.mxu0 0.0
    %1446 = vmatpush.msra.mxu0 0.0
    %1447 = vmatpush.msra.mxu0 0.0
    %1448 = vmatpush.msra.mxu0 0.0
    %1449 = vmatpush.msra.mxu0 0.0
    %1450 = vmatpush.msra.mxu0 0.0
    %1451 = vmatpush.msra.mxu0 0.0
    %1452 = vmatpush.msra.mxu0 0.0
    %1453 = vmatpush.msra.mxu0 0.0
    %1454 = vmatpush.msra.mxu0 %v256
    %1455 = vmatpush.msra.mxu0 %v255
    %1456 = vmatpush.msra.mxu0 %v254
    %1457 = vmatpush.msra.mxu0 %v253
    %1458 = vmatmul.f32.gmra.mxu0 %v1196
    %v1459 = vpop.f32.mrf.mxu0
    %v1460 = vadd.f32 %v497, %v1459
    %1461 = vdwg.mxu0
    %v1462 = vadd.f32 %v1440, %v1460
    %v1463 = vxor.u32 %v1462, 2147483648
    %v1464 = vmul.f32 %v1463, 1.442695
    %v1465 = vpow.pop %v1464
    %v1466 = vadd.f32 %v1465, 1.0
    %v1467 = vrcp.pop %v1466
    %v1468 = vmul.f32 %v1466, %v1467
    %v1469 = vsub.f32 1.0, %v1468
    %v1470 = vmul.f32 %v1467, %v1469
    %v1471 = vadd.f32 %v1467, %v1470
    %vm1472 = vweird.f32 %v1466
    %vm1473 = vweird.f32 %v1467
    %vm1474 = vmor %vm1472, %vm1473
    %v1475 = vsel %vm1474, %v1467, %v1471
    %v1476 = vand.u32 2147483647, %v1466
    %vm1477 = vcmp.eq.f32.partialorder %v1476, 8.507059e+37
    %v1478 = vand.u32 %v1466, 2147483648
    %v1479 = vor.u32 1.1754944e-38, %v1478
    %v1480 = vsel %vm1477, %v1479, %v1475
    %v1481 = vmul.f32 1.0, %v1480
    %1483 = vrot.lane.b32.xlu0 %v1460, 64
    %v1484 = vpop.permute.xlu0 %1483
    %v1486 = vmul.f32 %v1481, %v1484
    %1488 = vrot.lane.b32.xlu0 %v1486, 64
    %v1489 = vpop.permute.xlu0 %1488
    %v1491 = vadd.f32 %v1440, %v1489
    %v1492 = vtanh.pop %v1491
    %v1493 = vsub.f32 1.0, %v1481
    %1495 = vrot.lane.b32.xlu0 %v1492, 96
    %v1496 = vpop.permute.xlu0 %1495
    %v1498 = vmul.f32 %v1493, %v1496
    %v1499 = vmul.f32 %v1481, %v1192
    %v1500 = vadd.f32 %v1498, %v1499
    %1502 = vrot.lane.b32.xlu0 %v1500, 96
    %v1503 = vpop.permute.xlu0 %1502
    %v1504 = vsel %vm263, %v1503, 0
    %1506 = vmatpush.msra.mxu0 0.0
    %1507 = vmatpush.msra.mxu0 0.0
    %1508 = vmatpush.msra.mxu0 0.0
    %1509 = vmatpush.msra.mxu0 0.0
    %1510 = vmatpush.msra.mxu0 0.0
    %1511 = vmatpush.msra.mxu0 0.0
    %1512 = vmatpush.msra.mxu0 0.0
    %1513 = vmatpush.msra.mxu0 0.0
    %1514 = vmatpush.msra.mxu0 0.0
    %1515 = vmatpush.msra.mxu0 0.0
    %1516 = vmatpush.msra.mxu0 0.0
    %1517 = vmatpush.msra.mxu0 0.0
    %1518 = vmatpush.msra.mxu0 %v218
    %1519 = vmatpush.msra.mxu0 %v217
    %1520 = vmatpush.msra.mxu0 %v216
    %1521 = vmatpush.msra.mxu0 %v215
    %1522 = vmatmul.f32.gmra.mxu0 %v1504
    %v1523 = vpop.f32.mrf.mxu0
    %v1524 = vadd.f32 %v559, %v1523
    %1525 = vdwg.mxu0
    %s1526 = scalar_lea.vmem %s4, 12
    %v1527 = vld [vmem:[%s1526] sm:$0xf]
    %v1528 = vadd.f32 %v1524, %v1527
    %v1529 = vmul.f32 %v1528, 1000.0
    %v1530 = vsel %vm589, %v1529, -inf
    %1531 = vmax.xlane.f32.xlu0 %v1530
    %v1532 = vpop.xlane.xlu0 %1531
    %v1533 = vsub.f32 %v1529, %v1532
    %v1534 = vmul.f32 %v1533, 1.442695
    %v1535 = vpow.pop %v1534
    %v1536 = vsel %vm589, %v1535, 0.0
    %1537 = vadd.xlane.f32.xlu0 %v1536
    %v1538 = vpop.xlane.xlu0 %1537
    %v1539 = vrcp.pop %v1538
    %v1540 = vmul.f32 %v1535, %v1539
    %1541 = vmatpush.msra.mxu0 0.0
    %1542 = vmatpush.msra.mxu0 0.0
    %1543 = vmatpush.msra.mxu0 0.0
    %1544 = vmatpush.msra.mxu0 0.0
    %1545 = vmatpush.msra.mxu0 0.0
    %1546 = vmatpush.msra.mxu0 0.0
    %1547 = vmatpush.msra.mxu0 0.0
    %1548 = vmatpush.msra.mxu0 0.0
    %1549 = vmatpush.msra.mxu0 0.0
    %1550 = vmatpush.msra.mxu0 0.0
    %1551 = vmatpush.msra.mxu0 0.0
    %1552 = vmatpush.msra.mxu0 0.0
    %1553 = vmatpush.msra.mxu0 %v223
    %1554 = vmatpush.msra.mxu0 %v222
    %1555 = vmatpush.msra.mxu0 %v221
    %1556 = vmatpush.msra.mxu0 %v220
    %1557 = vmatmul.f32.gmra.mxu0 %v1504
    %v1558 = vpop.f32.mrf.mxu0
    %v1559 = vadd.f32 0.0, %v1558
    %1560 = vdwg.mxu0
    %v1561 = vadd.f32 %v1559, %v622
    %1563 = vset.pattern.permute.xlu0 0
    %1564 = vperm.xlu0 %1563, %v1540
    %v1565 = vpop.permute.xlu0 %1564
    %v1567 = vmul.f32 %v1565, %v1561
    %v1568 = vadd.f32 %v1559, %v634
    %1569 = vset.pattern.permute.xlu0 1
    %1570 = vperm.xlu0 %1569, %v1540
    %v1571 = vpop.permute.xlu0 %1570
    %v1573 = vmul.f32 %v1571, %v1568
    %1575 = vrot.lane.b32.xlu0 %v1573, 96
    %v1576 = vpop.permute.xlu0 %1575
    %v1578 = vadd.f32 %v1567, %v1576
    %v1579 = vadd.f32 %v1559, %v650
    %1580 = vset.pattern.permute.xlu0 2
    %1581 = vperm.xlu0 %1580, %v1540
    %v1582 = vpop.permute.xlu0 %1581
    %v1584 = vmul.f32 %v1582, %v1579
    %1586 = vrot.lane.b32.xlu0 %v1584, 64
    %v1587 = vpop.permute.xlu0 %1586
    %v1589 = vadd.f32 %v1578, %v1587
    %v1591 = vsel %vm263, %v1589, 0
    %1593 = vmatpush.msra.mxu0 0.0
    %1594 = vmatpush.msra.mxu0 0.0
    %1595 = vmatpush.msra.mxu0 0.0
    %1596 = vmatpush.msra.mxu0 0.0
    %1597 = vmatpush.msra.mxu0 0.0
    %1598 = vmatpush.msra.mxu0 0.0
    %1599 = vmatpush.msra.mxu0 0.0
    %1600 = vmatpush.msra.mxu0 0.0
    %1601 = vmatpush.msra.mxu0 0.0
    %1602 = vmatpush.msra.mxu0 0.0
    %1603 = vmatpush.msra.mxu0 0.0
    %1604 = vmatpush.msra.mxu0 0.0
    %1605 = vmatpush.msra.mxu0 %v227
    %1606 = vmatpush.msra.mxu0 %v226
    %1607 = vmatpush.msra.mxu0 %v225
    %1608 = vmatpush.msra.mxu0 %v224
    %1609 = vmatmul.f32.gmra.mxu0 %v1591
    %v1610 = vpop.f32.mrf.mxu0
    %v1611 = vadd.f32 %v664, %v1610
    %1612 = vdwg.mxu0
    %v1614 = vrot.slane %v1611, 1
    %v1615 = vrot.slane %v1611, 2
    %v1616 = vrot.slane %v1611, 3
    %1620 = vst [vmem:[#allocation19 + $0x3] sm:$0x1] %v1611
    %1621 = vst [vmem:[#allocation19 + $0xb] sm:$0x1] %v1614
    %1622 = vst [vmem:[#allocation19 + $0x13] sm:$0x1] %v1615
    %1623 = vst [vmem:[#allocation19 + $0x1b] sm:$0x1] %v1616
    %v1624 = vmul.f32 %v1565, %v290
    %v1625 = vmul.f32 %v1571, %v296
    %1627 = vrot.lane.b32.xlu0 %v1625, 96
    %v1628 = vpop.permute.xlu0 %1627
    %v1630 = vadd.f32 %v1624, %v1628
    %v1631 = vmul.f32 %v1582, %v302
    %1633 = vrot.lane.b32.xlu0 %v1631, 64
    %v1634 = vpop.permute.xlu0 %1633
    %v1636 = vadd.f32 %v1630, %v1634
    %v1637 = vmul.f32 %v1565, %v327
    %v1638 = vmul.f32 %v1571, %v350
    %v1639 = vadd.f32 %v1637, %v1638
    %v1640 = vmul.f32 %v1582, %v374
    %v1641 = vadd.f32 %v1639, %v1640
    %v1642 = vadd.f32 %v1636, %v1641
    %v1644 = vsel %vm263, %v1642, 0
    %1646 = vmatpush.msra.mxu0 0.0
    %1647 = vmatpush.msra.mxu0 0.0
    %1648 = vmatpush.msra.mxu0 0.0
    %1649 = vmatpush.msra.mxu0 0.0
    %1650 = vmatpush.msra.mxu0 0.0
    %1651 = vmatpush.msra.mxu0 0.0
    %1652 = vmatpush.msra.mxu0 0.0
    %1653 = vmatpush.msra.mxu0 0.0
    %1654 = vmatpush.msra.mxu0 0.0
    %1655 = vmatpush.msra.mxu0 0.0
    %1656 = vmatpush.msra.mxu0 0.0
    %1657 = vmatpush.msra.mxu0 0.0
    %1658 = vmatpush.msra.mxu0 %v242
    %1659 = vmatpush.msra.mxu0 %v241
    %1660 = vmatpush.msra.mxu0 %v240
    %1661 = vmatpush.msra.mxu0 %v239
    %1662 = vmatmul.f32.gmra.mxu0 %v1644
    %v1663 = vpop.f32.mrf.mxu0
    %v1664 = vadd.f32 %v378, %v1663
    %1665 = vdwg.mxu0
    %1666 = vmatpush.msra.mxu0 0.0
    %1667 = vmatpush.msra.mxu0 0.0
    %1668 = vmatpush.msra.mxu0 0.0
    %1669 = vmatpush.msra.mxu0 0.0
    %1670 = vmatpush.msra.mxu0 0.0
    %1671 = vmatpush.msra.mxu0 0.0
    %1672 = vmatpush.msra.mxu0 0.0
    %1673 = vmatpush.msra.mxu0 0.0
    %1674 = vmatpush.msra.mxu0 0.0
    %1675 = vmatpush.msra.mxu0 0.0
    %1676 = vmatpush.msra.mxu0 0.0
    %1677 = vmatpush.msra.mxu0 0.0
    %1678 = vmatpush.msra.mxu0 %v251
    %1679 = vmatpush.msra.mxu0 %v250
    %1680 = vmatpush.msra.mxu0 %v249
    %1681 = vmatpush.msra.mxu0 %v248
    %1682 = vmatmul.f32.gmra.mxu0 %v1420
    %v1683 = vpop.f32.mrf.mxu0
    %v1684 = vadd.f32 %v404, %v1683
    %1685 = vdwg.mxu0
    %v1686 = vadd.f32 %v1664, %v1684
    %v1687 = vxor.u32 %v1686, 2147483648
    %v1688 = vmul.f32 %v1687, 1.442695
    %v1689 = vpow.pop %v1688
    %v1690 = vadd.f32 %v1689, 1.0
    %v1691 = vrcp.pop %v1690
    %v1692 = vmul.f32 %v1690, %v1691
    %v1693 = vsub.f32 1.0, %v1692
    %v1694 = vmul.f32 %v1691, %v1693
    %v1695 = vadd.f32 %v1691, %v1694
    %vm1696 = vweird.f32 %v1690
    %vm1697 = vweird.f32 %v1691
    %vm1698 = vmor %vm1696, %vm1697
    %v1699 = vsel %vm1698, %v1691, %v1695
    %v1700 = vand.u32 2147483647, %v1690
    %vm1701 = vcmp.eq.f32.partialorder %v1700, 8.507059e+37
    %v1702 = vand.u32 %v1690, 2147483648
    %v1703 = vor.u32 1.1754944e-38, %v1702
    %v1704 = vsel %vm1701, %v1703, %v1699
    %v1705 = vmul.f32 1.0, %v1704
    %1707 = vrot.lane.b32.xlu0 %v1684, 64
    %v1708 = vpop.permute.xlu0 %1707
    %v1710 = vmul.f32 %v1705, %v1708
    %1712 = vrot.lane.b32.xlu0 %v1710, 64
    %v1713 = vpop.permute.xlu0 %1712
    %v1715 = vadd.f32 %v1664, %v1713
    %v1716 = vtanh.pop %v1715
    %v1717 = vsub.f32 1.0, %v1705
    %1719 = vrot.lane.b32.xlu0 %v1716, 96
    %v1720 = vpop.permute.xlu0 %1719
    %v1722 = vmul.f32 %v1717, %v1720
    %v1723 = vmul.f32 %v1705, %v1416
    %v1724 = vadd.f32 %v1722, %v1723
    %1726 = vrot.lane.b32.xlu0 %v1724, 96
    %v1727 = vpop.permute.xlu0 %1726
    %v1728 = vsel %vm263, %v1727, 0
    %1730 = vmatpush.msra.mxu0 0.0
    %1731 = vmatpush.msra.mxu0 0.0
    %1732 = vmatpush.msra.mxu0 0.0
    %1733 = vmatpush.msra.mxu0 0.0
    %1734 = vmatpush.msra.mxu0 0.0
    %1735 = vmatpush.msra.mxu0 0.0
    %1736 = vmatpush.msra.mxu0 0.0
    %1737 = vmatpush.msra.mxu0 0.0
    %1738 = vmatpush.msra.mxu0 0.0
    %1739 = vmatpush.msra.mxu0 0.0
    %1740 = vmatpush.msra.mxu0 0.0
    %1741 = vmatpush.msra.mxu0 0.0
    %1742 = vmatpush.msra.mxu0 %v247
    %1743 = vmatpush.msra.mxu0 %v246
    %1744 = vmatpush.msra.mxu0 %v245
    %1745 = vmatpush.msra.mxu0 %v244
    %1746 = vmatmul.f32.gmra.mxu0 %v1728
    %v1747 = vpop.f32.mrf.mxu0
    %v1748 = vadd.f32 %v469, %v1747
    %1749 = vdwg.mxu0
    %1750 = vmatpush.msra.mxu0 0.0
    %1751 = vmatpush.msra.mxu0 0.0
    %1752 = vmatpush.msra.mxu0 0.0
    %1753 = vmatpush.msra.mxu0 0.0
    %1754 = vmatpush.msra.mxu0 0.0
    %1755 = vmatpush.msra.mxu0 0.0
    %1756 = vmatpush.msra.mxu0 0.0
    %1757 = vmatpush.msra.mxu0 0.0
    %1758 = vmatpush.msra.mxu0 0.0
    %1759 = vmatpush.msra.mxu0 0.0
    %1760 = vmatpush.msra.mxu0 0.0
    %1761 = vmatpush.msra.mxu0 0.0
    %1762 = vmatpush.msra.mxu0 %v256
    %1763 = vmatpush.msra.mxu0 %v255
    %1764 = vmatpush.msra.mxu0 %v254
    %1765 = vmatpush.msra.mxu0 %v253
    %1766 = vmatmul.f32.gmra.mxu0 %v1504
    %v1767 = vpop.f32.mrf.mxu0
    %v1768 = vadd.f32 %v497, %v1767
    %1769 = vdwg.mxu0
    %v1770 = vadd.f32 %v1748, %v1768
    %v1771 = vxor.u32 %v1770, 2147483648
    %v1772 = vmul.f32 %v1771, 1.442695
    %v1773 = vpow.pop %v1772
    %v1774 = vadd.f32 %v1773, 1.0
    %v1775 = vrcp.pop %v1774
    %v1776 = vmul.f32 %v1774, %v1775
    %v1777 = vsub.f32 1.0, %v1776
    %v1778 = vmul.f32 %v1775, %v1777
    %v1779 = vadd.f32 %v1775, %v1778
    %vm1780 = vweird.f32 %v1774
    %vm1781 = vweird.f32 %v1775
    %vm1782 = vmor %vm1780, %vm1781
    %v1783 = vsel %vm1782, %v1775, %v1779
    %v1784 = vand.u32 2147483647, %v1774
    %vm1785 = vcmp.eq.f32.partialorder %v1784, 8.507059e+37
    %v1786 = vand.u32 %v1774, 2147483648
    %v1787 = vor.u32 1.1754944e-38, %v1786
    %v1788 = vsel %vm1785, %v1787, %v1783
    %v1789 = vmul.f32 1.0, %v1788
    %1791 = vrot.lane.b32.xlu0 %v1768, 64
    %v1792 = vpop.permute.xlu0 %1791
    %v1794 = vmul.f32 %v1789, %v1792
    %1796 = vrot.lane.b32.xlu0 %v1794, 64
    %v1797 = vpop.permute.xlu0 %1796
    %v1799 = vadd.f32 %v1748, %v1797
    %v1800 = vtanh.pop %v1799
    %v1801 = vsub.f32 1.0, %v1789
    %1803 = vrot.lane.b32.xlu0 %v1800, 96
    %v1804 = vpop.permute.xlu0 %1803
    %v1806 = vmul.f32 %v1801, %v1804
    %v1807 = vmul.f32 %v1789, %v1500
    %v1808 = vadd.f32 %v1806, %v1807
    %1810 = vrot.lane.b32.xlu0 %v1808, 96
    %v1811 = vpop.permute.xlu0 %1810
    %v1812 = vsel %vm263, %v1811, 0
    %1814 = vmatpush.msra.mxu0 0.0
    %1815 = vmatpush.msra.mxu0 0.0
    %1816 = vmatpush.msra.mxu0 0.0
    %1817 = vmatpush.msra.mxu0 0.0
    %1818 = vmatpush.msra.mxu0 0.0
    %1819 = vmatpush.msra.mxu0 0.0
    %1820 = vmatpush.msra.mxu0 0.0
    %1821 = vmatpush.msra.mxu0 0.0
    %1822 = vmatpush.msra.mxu0 0.0
    %1823 = vmatpush.msra.mxu0 0.0
    %1824 = vmatpush.msra.mxu0 0.0
    %1825 = vmatpush.msra.mxu0 0.0
    %1826 = vmatpush.msra.mxu0 %v218
    %1827 = vmatpush.msra.mxu0 %v217
    %1828 = vmatpush.msra.mxu0 %v216
    %1829 = vmatpush.msra.mxu0 %v215
    %1830 = vmatmul.f32.gmra.mxu0 %v1812
    %v1831 = vpop.f32.mrf.mxu0
    %v1832 = vadd.f32 %v559, %v1831
    %1833 = vdwg.mxu0
    %s1834 = scalar_lea.vmem %s4, 16
    %v1835 = vld [vmem:[%s1834] sm:$0xf]
    %v1836 = vadd.f32 %v1832, %v1835
    %v1837 = vmul.f32 %v1836, 1000.0
    %v1838 = vsel %vm589, %v1837, -inf
    %1839 = vmax.xlane.f32.xlu0 %v1838
    %v1840 = vpop.xlane.xlu0 %1839
    %v1841 = vsub.f32 %v1837, %v1840
    %v1842 = vmul.f32 %v1841, 1.442695
    %v1843 = vpow.pop %v1842
    %v1844 = vsel %vm589, %v1843, 0.0
    %1845 = vadd.xlane.f32.xlu0 %v1844
    %v1846 = vpop.xlane.xlu0 %1845
    %v1847 = vrcp.pop %v1846
    %v1848 = vmul.f32 %v1843, %v1847
    %1849 = vmatpush.msra.mxu0 0.0
    %1850 = vmatpush.msra.mxu0 0.0
    %1851 = vmatpush.msra.mxu0 0.0
    %1852 = vmatpush.msra.mxu0 0.0
    %1853 = vmatpush.msra.mxu0 0.0
    %1854 = vmatpush.msra.mxu0 0.0
    %1855 = vmatpush.msra.mxu0 0.0
    %1856 = vmatpush.msra.mxu0 0.0
    %1857 = vmatpush.msra.mxu0 0.0
    %1858 = vmatpush.msra.mxu0 0.0
    %1859 = vmatpush.msra.mxu0 0.0
    %1860 = vmatpush.msra.mxu0 0.0
    %1861 = vmatpush.msra.mxu0 %v223
    %1862 = vmatpush.msra.mxu0 %v222
    %1863 = vmatpush.msra.mxu0 %v221
    %1864 = vmatpush.msra.mxu0 %v220
    %1865 = vmatmul.f32.gmra.mxu0 %v1812
    %v1866 = vpop.f32.mrf.mxu0
    %v1867 = vadd.f32 0.0, %v1866
    %1868 = vdwg.mxu0
    %v1869 = vadd.f32 %v1867, %v622
    %1871 = vset.pattern.permute.xlu0 0
    %1872 = vperm.xlu0 %1871, %v1848
    %v1873 = vpop.permute.xlu0 %1872
    %v1875 = vmul.f32 %v1873, %v1869
    %v1876 = vadd.f32 %v1867, %v634
    %1877 = vset.pattern.permute.xlu0 1
    %1878 = vperm.xlu0 %1877, %v1848
    %v1879 = vpop.permute.xlu0 %1878
    %v1881 = vmul.f32 %v1879, %v1876
    %1883 = vrot.lane.b32.xlu0 %v1881, 96
    %v1884 = vpop.permute.xlu0 %1883
    %v1886 = vadd.f32 %v1875, %v1884
    %v1887 = vadd.f32 %v1867, %v650
    %1888 = vset.pattern.permute.xlu0 2
    %1889 = vperm.xlu0 %1888, %v1848
    %v1890 = vpop.permute.xlu0 %1889
    %v1892 = vmul.f32 %v1890, %v1887
    %1894 = vrot.lane.b32.xlu0 %v1892, 64
    %v1895 = vpop.permute.xlu0 %1894
    %v1897 = vadd.f32 %v1886, %v1895
    %v1899 = vsel %vm263, %v1897, 0
    %1901 = vmatpush.msra.mxu0 0.0
    %1902 = vmatpush.msra.mxu0 0.0
    %1903 = vmatpush.msra.mxu0 0.0
    %1904 = vmatpush.msra.mxu0 0.0
    %1905 = vmatpush.msra.mxu0 0.0
    %1906 = vmatpush.msra.mxu0 0.0
    %1907 = vmatpush.msra.mxu0 0.0
    %1908 = vmatpush.msra.mxu0 0.0
    %1909 = vmatpush.msra.mxu0 0.0
    %1910 = vmatpush.msra.mxu0 0.0
    %1911 = vmatpush.msra.mxu0 0.0
    %1912 = vmatpush.msra.mxu0 0.0
    %1913 = vmatpush.msra.mxu0 %v227
    %1914 = vmatpush.msra.mxu0 %v226
    %1915 = vmatpush.msra.mxu0 %v225
    %1916 = vmatpush.msra.mxu0 %v224
    %1917 = vmatmul.f32.gmra.mxu0 %v1899
    %v1918 = vpop.f32.mrf.mxu0
    %v1919 = vadd.f32 %v664, %v1918
    %1920 = vdwg.mxu0
    %v1922 = vrot.slane %v1919, 1
    %v1923 = vrot.slane %v1919, 2
    %v1924 = vrot.slane %v1919, 3
    %1928 = vst [vmem:[#allocation19 + $0x4] sm:$0x1] %v1919
    %1929 = vst [vmem:[#allocation19 + $0xc] sm:$0x1] %v1922
    %1930 = vst [vmem:[#allocation19 + $0x14] sm:$0x1] %v1923
    %1931 = vst [vmem:[#allocation19 + $0x1c] sm:$0x1] %v1924
    %v1932 = vmul.f32 %v1873, %v290
    %v1933 = vmul.f32 %v1879, %v296
    %1935 = vrot.lane.b32.xlu0 %v1933, 96
    %v1936 = vpop.permute.xlu0 %1935
    %v1938 = vadd.f32 %v1932, %v1936
    %v1939 = vmul.f32 %v1890, %v302
    %1941 = vrot.lane.b32.xlu0 %v1939, 64
    %v1942 = vpop.permute.xlu0 %1941
    %v1944 = vadd.f32 %v1938, %v1942
    %v1945 = vmul.f32 %v1873, %v327
    %v1946 = vmul.f32 %v1879, %v350
    %v1947 = vadd.f32 %v1945, %v1946
    %v1948 = vmul.f32 %v1890, %v374
    %v1949 = vadd.f32 %v1947, %v1948
    %v1950 = vadd.f32 %v1944, %v1949
    %v1952 = vsel %vm263, %v1950, 0
    %1954 = vmatpush.msra.mxu0 0.0
    %1955 = vmatpush.msra.mxu0 0.0
    %1956 = vmatpush.msra.mxu0 0.0
    %1957 = vmatpush.msra.mxu0 0.0
    %1958 = vmatpush.msra.mxu0 0.0
    %1959 = vmatpush.msra.mxu0 0.0
    %1960 = vmatpush.msra.mxu0 0.0
    %1961 = vmatpush.msra.mxu0 0.0
    %1962 = vmatpush.msra.mxu0 0.0
    %1963 = vmatpush.msra.mxu0 0.0
    %1964 = vmatpush.msra.mxu0 0.0
    %1965 = vmatpush.msra.mxu0 0.0
    %1966 = vmatpush.msra.mxu0 %v242
    %1967 = vmatpush.msra.mxu0 %v241
    %1968 = vmatpush.msra.mxu0 %v240
    %1969 = vmatpush.msra.mxu0 %v239
    %1970 = vmatmul.f32.gmra.mxu0 %v1952
    %v1971 = vpop.f32.mrf.mxu0
    %v1972 = vadd.f32 %v378, %v1971
    %1973 = vdwg.mxu0
    %1974 = vmatpush.msra.mxu0 0.0
    %1975 = vmatpush.msra.mxu0 0.0
    %1976 = vmatpush.msra.mxu0 0.0
    %1977 = vmatpush.msra.mxu0 0.0
    %1978 = vmatpush.msra.mxu0 0.0
    %1979 = vmatpush.msra.mxu0 0.0
    %1980 = vmatpush.msra.mxu0 0.0
    %1981 = vmatpush.msra.mxu0 0.0
    %1982 = vmatpush.msra.mxu0 0.0
    %1983 = vmatpush.msra.mxu0 0.0
    %1984 = vmatpush.msra.mxu0 0.0
    %1985 = vmatpush.msra.mxu0 0.0
    %1986 = vmatpush.msra.mxu0 %v251
    %1987 = vmatpush.msra.mxu0 %v250
    %1988 = vmatpush.msra.mxu0 %v249
    %1989 = vmatpush.msra.mxu0 %v248
    %1990 = vmatmul.f32.gmra.mxu0 %v1728
    %v1991 = vpop.f32.mrf.mxu0
    %v1992 = vadd.f32 %v404, %v1991
    %1993 = vdwg.mxu0
    %v1994 = vadd.f32 %v1972, %v1992
    %v1995 = vxor.u32 %v1994, 2147483648
    %v1996 = vmul.f32 %v1995, 1.442695
    %v1997 = vpow.pop %v1996
    %v1998 = vadd.f32 %v1997, 1.0
    %v1999 = vrcp.pop %v1998
    %v2000 = vmul.f32 %v1998, %v1999
    %v2001 = vsub.f32 1.0, %v2000
    %v2002 = vmul.f32 %v1999, %v2001
    %v2003 = vadd.f32 %v1999, %v2002
    %vm2004 = vweird.f32 %v1998
    %vm2005 = vweird.f32 %v1999
    %vm2006 = vmor %vm2004, %vm2005
    %v2007 = vsel %vm2006, %v1999, %v2003
    %v2008 = vand.u32 2147483647, %v1998
    %vm2009 = vcmp.eq.f32.partialorder %v2008, 8.507059e+37
    %v2010 = vand.u32 %v1998, 2147483648
    %v2011 = vor.u32 1.1754944e-38, %v2010
    %v2012 = vsel %vm2009, %v2011, %v2007
    %v2013 = vmul.f32 1.0, %v2012
    %2015 = vrot.lane.b32.xlu0 %v1992, 64
    %v2016 = vpop.permute.xlu0 %2015
    %v2018 = vmul.f32 %v2013, %v2016
    %2020 = vrot.lane.b32.xlu0 %v2018, 64
    %v2021 = vpop.permute.xlu0 %2020
    %v2023 = vadd.f32 %v1972, %v2021
    %v2024 = vtanh.pop %v2023
    %v2025 = vsub.f32 1.0, %v2013
    %2027 = vrot.lane.b32.xlu0 %v2024, 96
    %v2028 = vpop.permute.xlu0 %2027
    %v2030 = vmul.f32 %v2025, %v2028
    %v2031 = vmul.f32 %v2013, %v1724
    %v2032 = vadd.f32 %v2030, %v2031
    %2034 = vrot.lane.b32.xlu0 %v2032, 96
    %v2035 = vpop.permute.xlu0 %2034
    %v2036 = vsel %vm263, %v2035, 0
    %2038 = vmatpush.msra.mxu0 0.0
    %2039 = vmatpush.msra.mxu0 0.0
    %2040 = vmatpush.msra.mxu0 0.0
    %2041 = vmatpush.msra.mxu0 0.0
    %2042 = vmatpush.msra.mxu0 0.0
    %2043 = vmatpush.msra.mxu0 0.0
    %2044 = vmatpush.msra.mxu0 0.0
    %2045 = vmatpush.msra.mxu0 0.0
    %2046 = vmatpush.msra.mxu0 0.0
    %2047 = vmatpush.msra.mxu0 0.0
    %2048 = vmatpush.msra.mxu0 0.0
    %2049 = vmatpush.msra.mxu0 0.0
    %2050 = vmatpush.msra.mxu0 %v247
    %2051 = vmatpush.msra.mxu0 %v246
    %2052 = vmatpush.msra.mxu0 %v245
    %2053 = vmatpush.msra.mxu0 %v244
    %2054 = vmatmul.f32.gmra.mxu0 %v2036
    %v2055 = vpop.f32.mrf.mxu0
    %v2056 = vadd.f32 %v469, %v2055
    %2057 = vdwg.mxu0
    %2058 = vmatpush.msra.mxu0 0.0
    %2059 = vmatpush.msra.mxu0 0.0
    %2060 = vmatpush.msra.mxu0 0.0
    %2061 = vmatpush.msra.mxu0 0.0
    %2062 = vmatpush.msra.mxu0 0.0
    %2063 = vmatpush.msra.mxu0 0.0
    %2064 = vmatpush.msra.mxu0 0.0
    %2065 = vmatpush.msra.mxu0 0.0
    %2066 = vmatpush.msra.mxu0 0.0
    %2067 = vmatpush.msra.mxu0 0.0
    %2068 = vmatpush.msra.mxu0 0.0
    %2069 = vmatpush.msra.mxu0 0.0
    %2070 = vmatpush.msra.mxu0 %v256
    %2071 = vmatpush.msra.mxu0 %v255
    %2072 = vmatpush.msra.mxu0 %v254
    %2073 = vmatpush.msra.mxu0 %v253
    %2074 = vmatmul.f32.gmra.mxu0 %v1812
    %v2075 = vpop.f32.mrf.mxu0
    %v2076 = vadd.f32 %v497, %v2075
    %2077 = vdwg.mxu0
    %v2078 = vadd.f32 %v2056, %v2076
    %v2079 = vxor.u32 %v2078, 2147483648
    %v2080 = vmul.f32 %v2079, 1.442695
    %v2081 = vpow.pop %v2080
    %v2082 = vadd.f32 %v2081, 1.0
    %v2083 = vrcp.pop %v2082
    %v2084 = vmul.f32 %v2082, %v2083
    %v2085 = vsub.f32 1.0, %v2084
    %v2086 = vmul.f32 %v2083, %v2085
    %v2087 = vadd.f32 %v2083, %v2086
    %vm2088 = vweird.f32 %v2082
    %vm2089 = vweird.f32 %v2083
    %vm2090 = vmor %vm2088, %vm2089
    %v2091 = vsel %vm2090, %v2083, %v2087
    %v2092 = vand.u32 2147483647, %v2082
    %vm2093 = vcmp.eq.f32.partialorder %v2092, 8.507059e+37
    %v2094 = vand.u32 %v2082, 2147483648
    %v2095 = vor.u32 1.1754944e-38, %v2094
    %v2096 = vsel %vm2093, %v2095, %v2091
    %v2097 = vmul.f32 1.0, %v2096
    %2099 = vrot.lane.b32.xlu0 %v2076, 64
    %v2100 = vpop.permute.xlu0 %2099
    %v2102 = vmul.f32 %v2097, %v2100
    %2104 = vrot.lane.b32.xlu0 %v2102, 64
    %v2105 = vpop.permute.xlu0 %2104
    %v2107 = vadd.f32 %v2056, %v2105
    %v2108 = vtanh.pop %v2107
    %v2109 = vsub.f32 1.0, %v2097
    %2111 = vrot.lane.b32.xlu0 %v2108, 96
    %v2112 = vpop.permute.xlu0 %2111
    %v2114 = vmul.f32 %v2109, %v2112
    %v2115 = vmul.f32 %v2097, %v1808
    %v2116 = vadd.f32 %v2114, %v2115
    %2118 = vrot.lane.b32.xlu0 %v2116, 96
    %v2119 = vpop.permute.xlu0 %2118
    %v2120 = vsel %vm263, %v2119, 0
    %2122 = vmatpush.msra.mxu0 0.0
    %2123 = vmatpush.msra.mxu0 0.0
    %2124 = vmatpush.msra.mxu0 0.0
    %2125 = vmatpush.msra.mxu0 0.0
    %2126 = vmatpush.msra.mxu0 0.0
    %2127 = vmatpush.msra.mxu0 0.0
    %2128 = vmatpush.msra.mxu0 0.0
    %2129 = vmatpush.msra.mxu0 0.0
    %2130 = vmatpush.msra.mxu0 0.0
    %2131 = vmatpush.msra.mxu0 0.0
    %2132 = vmatpush.msra.mxu0 0.0
    %2133 = vmatpush.msra.mxu0 0.0
    %2134 = vmatpush.msra.mxu0 %v218
    %2135 = vmatpush.msra.mxu0 %v217
    %2136 = vmatpush.msra.mxu0 %v216
    %2137 = vmatpush.msra.mxu0 %v215
    %2138 = vmatmul.f32.gmra.mxu0 %v2120
    %v2139 = vpop.f32.mrf.mxu0
    %v2140 = vadd.f32 %v559, %v2139
    %2141 = vdwg.mxu0
    %s2142 = scalar_lea.vmem %s4, 20
    %v2143 = vld [vmem:[%s2142] sm:$0xf]
    %v2144 = vadd.f32 %v2140, %v2143
    %v2145 = vmul.f32 %v2144, 1000.0
    %v2146 = vsel %vm589, %v2145, -inf
    %2147 = vmax.xlane.f32.xlu0 %v2146
    %v2148 = vpop.xlane.xlu0 %2147
    %v2149 = vsub.f32 %v2145, %v2148
    %v2150 = vmul.f32 %v2149, 1.442695
    %v2151 = vpow.pop %v2150
    %v2152 = vsel %vm589, %v2151, 0.0
    %2153 = vadd.xlane.f32.xlu0 %v2152
    %v2154 = vpop.xlane.xlu0 %2153
    %v2155 = vrcp.pop %v2154
    %v2156 = vmul.f32 %v2151, %v2155
    %2157 = vmatpush.msra.mxu0 0.0
    %2158 = vmatpush.msra.mxu0 0.0
    %2159 = vmatpush.msra.mxu0 0.0
    %2160 = vmatpush.msra.mxu0 0.0
    %2161 = vmatpush.msra.mxu0 0.0
    %2162 = vmatpush.msra.mxu0 0.0
    %2163 = vmatpush.msra.mxu0 0.0
    %2164 = vmatpush.msra.mxu0 0.0
    %2165 = vmatpush.msra.mxu0 0.0
    %2166 = vmatpush.msra.mxu0 0.0
    %2167 = vmatpush.msra.mxu0 0.0
    %2168 = vmatpush.msra.mxu0 0.0
    %2169 = vmatpush.msra.mxu0 %v223
    %2170 = vmatpush.msra.mxu0 %v222
    %2171 = vmatpush.msra.mxu0 %v221
    %2172 = vmatpush.msra.mxu0 %v220
    %2173 = vmatmul.f32.gmra.mxu0 %v2120
    %v2174 = vpop.f32.mrf.mxu0
    %v2175 = vadd.f32 0.0, %v2174
    %2176 = vdwg.mxu0
    %v2177 = vadd.f32 %v2175, %v622
    %2179 = vset.pattern.permute.xlu0 0
    %2180 = vperm.xlu0 %2179, %v2156
    %v2181 = vpop.permute.xlu0 %2180
    %v2183 = vmul.f32 %v2181, %v2177
    %v2184 = vadd.f32 %v2175, %v634
    %2185 = vset.pattern.permute.xlu0 1
    %2186 = vperm.xlu0 %2185, %v2156
    %v2187 = vpop.permute.xlu0 %2186
    %v2189 = vmul.f32 %v2187, %v2184
    %2191 = vrot.lane.b32.xlu0 %v2189, 96
    %v2192 = vpop.permute.xlu0 %2191
    %v2194 = vadd.f32 %v2183, %v2192
    %v2195 = vadd.f32 %v2175, %v650
    %2196 = vset.pattern.permute.xlu0 2
    %2197 = vperm.xlu0 %2196, %v2156
    %v2198 = vpop.permute.xlu0 %2197
    %v2200 = vmul.f32 %v2198, %v2195
    %2202 = vrot.lane.b32.xlu0 %v2200, 64
    %v2203 = vpop.permute.xlu0 %2202
    %v2205 = vadd.f32 %v2194, %v2203
    %v2207 = vsel %vm263, %v2205, 0
    %2209 = vmatpush.msra.mxu0 0.0
    %2210 = vmatpush.msra.mxu0 0.0
    %2211 = vmatpush.msra.mxu0 0.0
    %2212 = vmatpush.msra.mxu0 0.0
    %2213 = vmatpush.msra.mxu0 0.0
    %2214 = vmatpush.msra.mxu0 0.0
    %2215 = vmatpush.msra.mxu0 0.0
    %2216 = vmatpush.msra.mxu0 0.0
    %2217 = vmatpush.msra.mxu0 0.0
    %2218 = vmatpush.msra.mxu0 0.0
    %2219 = vmatpush.msra.mxu0 0.0
    %2220 = vmatpush.msra.mxu0 0.0
    %2221 = vmatpush.msra.mxu0 %v227
    %2222 = vmatpush.msra.mxu0 %v226
    %2223 = vmatpush.msra.mxu0 %v225
    %2224 = vmatpush.msra.mxu0 %v224
    %2225 = vmatmul.f32.gmra.mxu0 %v2207
    %v2226 = vpop.f32.mrf.mxu0
    %v2227 = vadd.f32 %v664, %v2226
    %2228 = vdwg.mxu0
    %v2230 = vrot.slane %v2227, 1
    %v2231 = vrot.slane %v2227, 2
    %v2232 = vrot.slane %v2227, 3
    %2236 = vst [vmem:[#allocation19 + $0x5] sm:$0x1] %v2227
    %2237 = vst [vmem:[#allocation19 + $0xd] sm:$0x1] %v2230
    %2238 = vst [vmem:[#allocation19 + $0x15] sm:$0x1] %v2231
    %2239 = vst [vmem:[#allocation19 + $0x1d] sm:$0x1] %v2232
    %v2240 = vmul.f32 %v2181, %v290
    %v2241 = vmul.f32 %v2187, %v296
    %2243 = vrot.lane.b32.xlu0 %v2241, 96
    %v2244 = vpop.permute.xlu0 %2243
    %v2246 = vadd.f32 %v2240, %v2244
    %v2247 = vmul.f32 %v2198, %v302
    %2249 = vrot.lane.b32.xlu0 %v2247, 64
    %v2250 = vpop.permute.xlu0 %2249
    %v2252 = vadd.f32 %v2246, %v2250
    %v2253 = vmul.f32 %v2181, %v327
    %v2254 = vmul.f32 %v2187, %v350
    %v2255 = vadd.f32 %v2253, %v2254
    %v2256 = vmul.f32 %v2198, %v374
    %v2257 = vadd.f32 %v2255, %v2256
    %v2258 = vadd.f32 %v2252, %v2257
    %v2260 = vsel %vm263, %v2258, 0
    %2262 = vmatpush.msra.mxu0 0.0
    %2263 = vmatpush.msra.mxu0 0.0
    %2264 = vmatpush.msra.mxu0 0.0
    %2265 = vmatpush.msra.mxu0 0.0
    %2266 = vmatpush.msra.mxu0 0.0
    %2267 = vmatpush.msra.mxu0 0.0
    %2268 = vmatpush.msra.mxu0 0.0
    %2269 = vmatpush.msra.mxu0 0.0
    %2270 = vmatpush.msra.mxu0 0.0
    %2271 = vmatpush.msra.mxu0 0.0
    %2272 = vmatpush.msra.mxu0 0.0
    %2273 = vmatpush.msra.mxu0 0.0
    %2274 = vmatpush.msra.mxu0 %v242
    %2275 = vmatpush.msra.mxu0 %v241
    %2276 = vmatpush.msra.mxu0 %v240
    %2277 = vmatpush.msra.mxu0 %v239
    %2278 = vmatmul.f32.gmra.mxu0 %v2260
    %v2279 = vpop.f32.mrf.mxu0
    %v2280 = vadd.f32 %v378, %v2279
    %2281 = vdwg.mxu0
    %2282 = vmatpush.msra.mxu0 0.0
    %2283 = vmatpush.msra.mxu0 0.0
    %2284 = vmatpush.msra.mxu0 0.0
    %2285 = vmatpush.msra.mxu0 0.0
    %2286 = vmatpush.msra.mxu0 0.0
    %2287 = vmatpush.msra.mxu0 0.0
    %2288 = vmatpush.msra.mxu0 0.0
    %2289 = vmatpush.msra.mxu0 0.0
    %2290 = vmatpush.msra.mxu0 0.0
    %2291 = vmatpush.msra.mxu0 0.0
    %2292 = vmatpush.msra.mxu0 0.0
    %2293 = vmatpush.msra.mxu0 0.0
    %2294 = vmatpush.msra.mxu0 %v251
    %2295 = vmatpush.msra.mxu0 %v250
    %2296 = vmatpush.msra.mxu0 %v249
    %2297 = vmatpush.msra.mxu0 %v248
    %2298 = vmatmul.f32.gmra.mxu0 %v2036
    %v2299 = vpop.f32.mrf.mxu0
    %v2300 = vadd.f32 %v404, %v2299
    %2301 = vdwg.mxu0
    %v2302 = vadd.f32 %v2280, %v2300
    %v2303 = vxor.u32 %v2302, 2147483648
    %v2304 = vmul.f32 %v2303, 1.442695
    %v2305 = vpow.pop %v2304
    %v2306 = vadd.f32 %v2305, 1.0
    %v2307 = vrcp.pop %v2306
    %v2308 = vmul.f32 %v2306, %v2307
    %v2309 = vsub.f32 1.0, %v2308
    %v2310 = vmul.f32 %v2307, %v2309
    %v2311 = vadd.f32 %v2307, %v2310
    %vm2312 = vweird.f32 %v2306
    %vm2313 = vweird.f32 %v2307
    %vm2314 = vmor %vm2312, %vm2313
    %v2315 = vsel %vm2314, %v2307, %v2311
    %v2316 = vand.u32 2147483647, %v2306
    %vm2317 = vcmp.eq.f32.partialorder %v2316, 8.507059e+37
    %v2318 = vand.u32 %v2306, 2147483648
    %v2319 = vor.u32 1.1754944e-38, %v2318
    %v2320 = vsel %vm2317, %v2319, %v2315
    %v2321 = vmul.f32 1.0, %v2320
    %2323 = vrot.lane.b32.xlu0 %v2300, 64
    %v2324 = vpop.permute.xlu0 %2323
    %v2326 = vmul.f32 %v2321, %v2324
    %2328 = vrot.lane.b32.xlu0 %v2326, 64
    %v2329 = vpop.permute.xlu0 %2328
    %v2331 = vadd.f32 %v2280, %v2329
    %v2332 = vtanh.pop %v2331
    %v2333 = vsub.f32 1.0, %v2321
    %2335 = vrot.lane.b32.xlu0 %v2332, 96
    %v2336 = vpop.permute.xlu0 %2335
    %v2338 = vmul.f32 %v2333, %v2336
    %v2339 = vmul.f32 %v2321, %v2032
    %v2340 = vadd.f32 %v2338, %v2339
    %2342 = vrot.lane.b32.xlu0 %v2340, 96
    %v2343 = vpop.permute.xlu0 %2342
    %v2344 = vsel %vm263, %v2343, 0
    %2346 = vmatpush.msra.mxu0 0.0
    %2347 = vmatpush.msra.mxu0 0.0
    %2348 = vmatpush.msra.mxu0 0.0
    %2349 = vmatpush.msra.mxu0 0.0
    %2350 = vmatpush.msra.mxu0 0.0
    %2351 = vmatpush.msra.mxu0 0.0
    %2352 = vmatpush.msra.mxu0 0.0
    %2353 = vmatpush.msra.mxu0 0.0
    %2354 = vmatpush.msra.mxu0 0.0
    %2355 = vmatpush.msra.mxu0 0.0
    %2356 = vmatpush.msra.mxu0 0.0
    %2357 = vmatpush.msra.mxu0 0.0
    %2358 = vmatpush.msra.mxu0 %v247
    %2359 = vmatpush.msra.mxu0 %v246
    %2360 = vmatpush.msra.mxu0 %v245
    %2361 = vmatpush.msra.mxu0 %v244
    %2362 = vmatmul.f32.gmra.mxu0 %v2344
    %v2363 = vpop.f32.mrf.mxu0
    %v2364 = vadd.f32 %v469, %v2363
    %2365 = vdwg.mxu0
    %2366 = vmatpush.msra.mxu0 0.0
    %2367 = vmatpush.msra.mxu0 0.0
    %2368 = vmatpush.msra.mxu0 0.0
    %2369 = vmatpush.msra.mxu0 0.0
    %2370 = vmatpush.msra.mxu0 0.0
    %2371 = vmatpush.msra.mxu0 0.0
    %2372 = vmatpush.msra.mxu0 0.0
    %2373 = vmatpush.msra.mxu0 0.0
    %2374 = vmatpush.msra.mxu0 0.0
    %2375 = vmatpush.msra.mxu0 0.0
    %2376 = vmatpush.msra.mxu0 0.0
    %2377 = vmatpush.msra.mxu0 0.0
    %2378 = vmatpush.msra.mxu0 %v256
    %2379 = vmatpush.msra.mxu0 %v255
    %2380 = vmatpush.msra.mxu0 %v254
    %2381 = vmatpush.msra.mxu0 %v253
    %2382 = vmatmul.f32.gmra.mxu0 %v2120
    %v2383 = vpop.f32.mrf.mxu0
    %v2384 = vadd.f32 %v497, %v2383
    %2385 = vdwg.mxu0
    %v2386 = vadd.f32 %v2364, %v2384
    %v2387 = vxor.u32 %v2386, 2147483648
    %v2388 = vmul.f32 %v2387, 1.442695
    %v2389 = vpow.pop %v2388
    %v2390 = vadd.f32 %v2389, 1.0
    %v2391 = vrcp.pop %v2390
    %v2392 = vmul.f32 %v2390, %v2391
    %v2393 = vsub.f32 1.0, %v2392
    %v2394 = vmul.f32 %v2391, %v2393
    %v2395 = vadd.f32 %v2391, %v2394
    %vm2396 = vweird.f32 %v2390
    %vm2397 = vweird.f32 %v2391
    %vm2398 = vmor %vm2396, %vm2397
    %v2399 = vsel %vm2398, %v2391, %v2395
    %v2400 = vand.u32 2147483647, %v2390
    %vm2401 = vcmp.eq.f32.partialorder %v2400, 8.507059e+37
    %v2402 = vand.u32 %v2390, 2147483648
    %v2403 = vor.u32 1.1754944e-38, %v2402
    %v2404 = vsel %vm2401, %v2403, %v2399
    %v2405 = vmul.f32 1.0, %v2404
    %2407 = vrot.lane.b32.xlu0 %v2384, 64
    %v2408 = vpop.permute.xlu0 %2407
    %v2410 = vmul.f32 %v2405, %v2408
    %2412 = vrot.lane.b32.xlu0 %v2410, 64
    %v2413 = vpop.permute.xlu0 %2412
    %v2415 = vadd.f32 %v2364, %v2413
    %v2416 = vtanh.pop %v2415
    %v2417 = vsub.f32 1.0, %v2405
    %2419 = vrot.lane.b32.xlu0 %v2416, 96
    %v2420 = vpop.permute.xlu0 %2419
    %v2422 = vmul.f32 %v2417, %v2420
    %v2423 = vmul.f32 %v2405, %v2116
    %v2424 = vadd.f32 %v2422, %v2423
    %2426 = vrot.lane.b32.xlu0 %v2424, 96
    %v2427 = vpop.permute.xlu0 %2426
    %v2428 = vsel %vm263, %v2427, 0
    %2430 = vmatpush.msra.mxu0 0.0
    %2431 = vmatpush.msra.mxu0 0.0
    %2432 = vmatpush.msra.mxu0 0.0
    %2433 = vmatpush.msra.mxu0 0.0
    %2434 = vmatpush.msra.mxu0 0.0
    %2435 = vmatpush.msra.mxu0 0.0
    %2436 = vmatpush.msra.mxu0 0.0
    %2437 = vmatpush.msra.mxu0 0.0
    %2438 = vmatpush.msra.mxu0 0.0
    %2439 = vmatpush.msra.mxu0 0.0
    %2440 = vmatpush.msra.mxu0 0.0
    %2441 = vmatpush.msra.mxu0 0.0
    %2442 = vmatpush.msra.mxu0 %v218
    %2443 = vmatpush.msra.mxu0 %v217
    %2444 = vmatpush.msra.mxu0 %v216
    %2445 = vmatpush.msra.mxu0 %v215
    %2446 = vmatmul.f32.gmra.mxu0 %v2428
    %v2447 = vpop.f32.mrf.mxu0
    %v2448 = vadd.f32 %v559, %v2447
    %2449 = vdwg.mxu0
    %s2450 = scalar_lea.vmem %s4, 24
    %v2451 = vld [vmem:[%s2450] sm:$0xf]
    %v2452 = vadd.f32 %v2448, %v2451
    %v2453 = vmul.f32 %v2452, 1000.0
    %v2454 = vsel %vm589, %v2453, -inf
    %2455 = vmax.xlane.f32.xlu0 %v2454
    %v2456 = vpop.xlane.xlu0 %2455
    %v2457 = vsub.f32 %v2453, %v2456
    %v2458 = vmul.f32 %v2457, 1.442695
    %v2459 = vpow.pop %v2458
    %v2460 = vsel %vm589, %v2459, 0.0
    %2461 = vadd.xlane.f32.xlu0 %v2460
    %v2462 = vpop.xlane.xlu0 %2461
    %v2463 = vrcp.pop %v2462
    %v2464 = vmul.f32 %v2459, %v2463
    %2465 = vmatpush.msra.mxu0 0.0
    %2466 = vmatpush.msra.mxu0 0.0
    %2467 = vmatpush.msra.mxu0 0.0
    %2468 = vmatpush.msra.mxu0 0.0
    %2469 = vmatpush.msra.mxu0 0.0
    %2470 = vmatpush.msra.mxu0 0.0
    %2471 = vmatpush.msra.mxu0 0.0
    %2472 = vmatpush.msra.mxu0 0.0
    %2473 = vmatpush.msra.mxu0 0.0
    %2474 = vmatpush.msra.mxu0 0.0
    %2475 = vmatpush.msra.mxu0 0.0
    %2476 = vmatpush.msra.mxu0 0.0
    %2477 = vmatpush.msra.mxu0 %v223
    %2478 = vmatpush.msra.mxu0 %v222
    %2479 = vmatpush.msra.mxu0 %v221
    %2480 = vmatpush.msra.mxu0 %v220
    %2481 = vmatmul.f32.gmra.mxu0 %v2428
    %v2482 = vpop.f32.mrf.mxu0
    %v2483 = vadd.f32 0.0, %v2482
    %2484 = vdwg.mxu0
    %v2485 = vadd.f32 %v2483, %v622
    %2487 = vset.pattern.permute.xlu0 0
    %2488 = vperm.xlu0 %2487, %v2464
    %v2489 = vpop.permute.xlu0 %2488
    %v2491 = vmul.f32 %v2489, %v2485
    %v2492 = vadd.f32 %v2483, %v634
    %2493 = vset.pattern.permute.xlu0 1
    %2494 = vperm.xlu0 %2493, %v2464
    %v2495 = vpop.permute.xlu0 %2494
    %v2497 = vmul.f32 %v2495, %v2492
    %2499 = vrot.lane.b32.xlu0 %v2497, 96
    %v2500 = vpop.permute.xlu0 %2499
    %v2502 = vadd.f32 %v2491, %v2500
    %v2503 = vadd.f32 %v2483, %v650
    %2504 = vset.pattern.permute.xlu0 2
    %2505 = vperm.xlu0 %2504, %v2464
    %v2506 = vpop.permute.xlu0 %2505
    %v2508 = vmul.f32 %v2506, %v2503
    %2510 = vrot.lane.b32.xlu0 %v2508, 64
    %v2511 = vpop.permute.xlu0 %2510
    %v2513 = vadd.f32 %v2502, %v2511
    %v2515 = vsel %vm263, %v2513, 0
    %2517 = vmatpush.msra.mxu0 0.0
    %2518 = vmatpush.msra.mxu0 0.0
    %2519 = vmatpush.msra.mxu0 0.0
    %2520 = vmatpush.msra.mxu0 0.0
    %2521 = vmatpush.msra.mxu0 0.0
    %2522 = vmatpush.msra.mxu0 0.0
    %2523 = vmatpush.msra.mxu0 0.0
    %2524 = vmatpush.msra.mxu0 0.0
    %2525 = vmatpush.msra.mxu0 0.0
    %2526 = vmatpush.msra.mxu0 0.0
    %2527 = vmatpush.msra.mxu0 0.0
    %2528 = vmatpush.msra.mxu0 0.0
    %2529 = vmatpush.msra.mxu0 %v227
    %2530 = vmatpush.msra.mxu0 %v226
    %2531 = vmatpush.msra.mxu0 %v225
    %2532 = vmatpush.msra.mxu0 %v224
    %2533 = vmatmul.f32.gmra.mxu0 %v2515
    %v2534 = vpop.f32.mrf.mxu0
    %v2535 = vadd.f32 %v664, %v2534
    %2536 = vdwg.mxu0
    %v2538 = vrot.slane %v2535, 1
    %v2539 = vrot.slane %v2535, 2
    %v2540 = vrot.slane %v2535, 3
    %2544 = vst [vmem:[#allocation19 + $0x6] sm:$0x1] %v2535
    %2545 = vst [vmem:[#allocation19 + $0xe] sm:$0x1] %v2538
    %2546 = vst [vmem:[#allocation19 + $0x16] sm:$0x1] %v2539
    %2547 = vst [vmem:[#allocation19 + $0x1e] sm:$0x1] %v2540
    %v2548 = vmul.f32 %v2489, %v290
    %v2549 = vmul.f32 %v2495, %v296
    %2551 = vrot.lane.b32.xlu0 %v2549, 96
    %v2552 = vpop.permute.xlu0 %2551
    %v2554 = vadd.f32 %v2548, %v2552
    %v2555 = vmul.f32 %v2506, %v302
    %2557 = vrot.lane.b32.xlu0 %v2555, 64
    %v2558 = vpop.permute.xlu0 %2557
    %v2560 = vadd.f32 %v2554, %v2558
    %v2561 = vmul.f32 %v2489, %v327
    %v2562 = vmul.f32 %v2495, %v350
    %v2563 = vadd.f32 %v2561, %v2562
    %v2564 = vmul.f32 %v2506, %v374
    %v2565 = vadd.f32 %v2563, %v2564
    %v2566 = vadd.f32 %v2560, %v2565
    %v2568 = vsel %vm263, %v2566, 0
    %2570 = vmatpush.msra.mxu0 0.0
    %2571 = vmatpush.msra.mxu0 0.0
    %2572 = vmatpush.msra.mxu0 0.0
    %2573 = vmatpush.msra.mxu0 0.0
    %2574 = vmatpush.msra.mxu0 0.0
    %2575 = vmatpush.msra.mxu0 0.0
    %2576 = vmatpush.msra.mxu0 0.0
    %2577 = vmatpush.msra.mxu0 0.0
    %2578 = vmatpush.msra.mxu0 0.0
    %2579 = vmatpush.msra.mxu0 0.0
    %2580 = vmatpush.msra.mxu0 0.0
    %2581 = vmatpush.msra.mxu0 0.0
    %2582 = vmatpush.msra.mxu0 %v242
    %2583 = vmatpush.msra.mxu0 %v241
    %2584 = vmatpush.msra.mxu0 %v240
    %2585 = vmatpush.msra.mxu0 %v239
    %2586 = vmatmul.f32.gmra.mxu0 %v2568
    %v2587 = vpop.f32.mrf.mxu0
    %v2588 = vadd.f32 %v378, %v2587
    %2589 = vdwg.mxu0
    %2590 = vmatpush.msra.mxu0 0.0
    %2591 = vmatpush.msra.mxu0 0.0
    %2592 = vmatpush.msra.mxu0 0.0
    %2593 = vmatpush.msra.mxu0 0.0
    %2594 = vmatpush.msra.mxu0 0.0
    %2595 = vmatpush.msra.mxu0 0.0
    %2596 = vmatpush.msra.mxu0 0.0
    %2597 = vmatpush.msra.mxu0 0.0
    %2598 = vmatpush.msra.mxu0 0.0
    %2599 = vmatpush.msra.mxu0 0.0
    %2600 = vmatpush.msra.mxu0 0.0
    %2601 = vmatpush.msra.mxu0 0.0
    %2602 = vmatpush.msra.mxu0 %v251
    %2603 = vmatpush.msra.mxu0 %v250
    %2604 = vmatpush.msra.mxu0 %v249
    %2605 = vmatpush.msra.mxu0 %v248
    %2606 = vmatmul.f32.gmra.mxu0 %v2344
    %v2607 = vpop.f32.mrf.mxu0
    %v2608 = vadd.f32 %v404, %v2607
    %2609 = vdwg.mxu0
    %v2610 = vadd.f32 %v2588, %v2608
    %v2611 = vxor.u32 %v2610, 2147483648
    %v2612 = vmul.f32 %v2611, 1.442695
    %v2613 = vpow.pop %v2612
    %v2614 = vadd.f32 %v2613, 1.0
    %v2615 = vrcp.pop %v2614
    %v2616 = vmul.f32 %v2614, %v2615
    %v2617 = vsub.f32 1.0, %v2616
    %v2618 = vmul.f32 %v2615, %v2617
    %v2619 = vadd.f32 %v2615, %v2618
    %vm2620 = vweird.f32 %v2614
    %vm2621 = vweird.f32 %v2615
    %vm2622 = vmor %vm2620, %vm2621
    %v2623 = vsel %vm2622, %v2615, %v2619
    %v2624 = vand.u32 2147483647, %v2614
    %vm2625 = vcmp.eq.f32.partialorder %v2624, 8.507059e+37
    %v2626 = vand.u32 %v2614, 2147483648
    %v2627 = vor.u32 1.1754944e-38, %v2626
    %v2628 = vsel %vm2625, %v2627, %v2623
    %v2629 = vmul.f32 1.0, %v2628
    %2631 = vrot.lane.b32.xlu0 %v2608, 64
    %v2632 = vpop.permute.xlu0 %2631
    %v2634 = vmul.f32 %v2629, %v2632
    %2636 = vrot.lane.b32.xlu0 %v2634, 64
    %v2637 = vpop.permute.xlu0 %2636
    %v2639 = vadd.f32 %v2588, %v2637
    %v2640 = vtanh.pop %v2639
    %v2641 = vsub.f32 1.0, %v2629
    %2643 = vrot.lane.b32.xlu0 %v2640, 96
    %v2644 = vpop.permute.xlu0 %2643
    %v2646 = vmul.f32 %v2641, %v2644
    %v2647 = vmul.f32 %v2629, %v2340
    %v2648 = vadd.f32 %v2646, %v2647
    %2650 = vrot.lane.b32.xlu0 %v2648, 96
    %v2651 = vpop.permute.xlu0 %2650
    %v2652 = vsel %vm263, %v2651, 0
    %2654 = vmatpush.msra.mxu0 0.0
    %2655 = vmatpush.msra.mxu0 0.0
    %2656 = vmatpush.msra.mxu0 0.0
    %2657 = vmatpush.msra.mxu0 0.0
    %2658 = vmatpush.msra.mxu0 0.0
    %2659 = vmatpush.msra.mxu0 0.0
    %2660 = vmatpush.msra.mxu0 0.0
    %2661 = vmatpush.msra.mxu0 0.0
    %2662 = vmatpush.msra.mxu0 0.0
    %2663 = vmatpush.msra.mxu0 0.0
    %2664 = vmatpush.msra.mxu0 0.0
    %2665 = vmatpush.msra.mxu0 0.0
    %2666 = vmatpush.msra.mxu0 %v247
    %2667 = vmatpush.msra.mxu0 %v246
    %2668 = vmatpush.msra.mxu0 %v245
    %2669 = vmatpush.msra.mxu0 %v244
    %2670 = vmatmul.f32.gmra.mxu0 %v2652
    %v2671 = vpop.f32.mrf.mxu0
    %v2672 = vadd.f32 %v469, %v2671
    %2673 = vdwg.mxu0
    %2674 = vmatpush.msra.mxu0 0.0
    %2675 = vmatpush.msra.mxu0 0.0
    %2676 = vmatpush.msra.mxu0 0.0
    %2677 = vmatpush.msra.mxu0 0.0
    %2678 = vmatpush.msra.mxu0 0.0
    %2679 = vmatpush.msra.mxu0 0.0
    %2680 = vmatpush.msra.mxu0 0.0
    %2681 = vmatpush.msra.mxu0 0.0
    %2682 = vmatpush.msra.mxu0 0.0
    %2683 = vmatpush.msra.mxu0 0.0
    %2684 = vmatpush.msra.mxu0 0.0
    %2685 = vmatpush.msra.mxu0 0.0
    %2686 = vmatpush.msra.mxu0 %v256
    %2687 = vmatpush.msra.mxu0 %v255
    %2688 = vmatpush.msra.mxu0 %v254
    %2689 = vmatpush.msra.mxu0 %v253
    %2690 = vmatmul.f32.gmra.mxu0 %v2428
    %v2691 = vpop.f32.mrf.mxu0
    %v2692 = vadd.f32 %v497, %v2691
    %2693 = vdwg.mxu0
    %v2694 = vadd.f32 %v2672, %v2692
    %v2695 = vxor.u32 %v2694, 2147483648
    %v2696 = vmul.f32 %v2695, 1.442695
    %v2697 = vpow.pop %v2696
    %v2698 = vadd.f32 %v2697, 1.0
    %v2699 = vrcp.pop %v2698
    %v2700 = vmul.f32 %v2698, %v2699
    %v2701 = vsub.f32 1.0, %v2700
    %v2702 = vmul.f32 %v2699, %v2701
    %v2703 = vadd.f32 %v2699, %v2702
    %vm2704 = vweird.f32 %v2698
    %vm2705 = vweird.f32 %v2699
    %vm2706 = vmor %vm2704, %vm2705
    %v2707 = vsel %vm2706, %v2699, %v2703
    %v2708 = vand.u32 2147483647, %v2698
    %vm2709 = vcmp.eq.f32.partialorder %v2708, 8.507059e+37
    %v2710 = vand.u32 %v2698, 2147483648
    %v2711 = vor.u32 1.1754944e-38, %v2710
    %v2712 = vsel %vm2709, %v2711, %v2707
    %v2713 = vmul.f32 1.0, %v2712
    %2715 = vrot.lane.b32.xlu0 %v2692, 64
    %v2716 = vpop.permute.xlu0 %2715
    %v2718 = vmul.f32 %v2713, %v2716
    %2720 = vrot.lane.b32.xlu0 %v2718, 64
    %v2721 = vpop.permute.xlu0 %2720
    %v2723 = vadd.f32 %v2672, %v2721
    %v2724 = vtanh.pop %v2723
    %v2725 = vsub.f32 1.0, %v2713
    %2727 = vrot.lane.b32.xlu0 %v2724, 96
    %v2728 = vpop.permute.xlu0 %2727
    %v2730 = vmul.f32 %v2725, %v2728
    %v2731 = vmul.f32 %v2713, %v2424
    %v2732 = vadd.f32 %v2730, %v2731
    %2734 = vrot.lane.b32.xlu0 %v2732, 96
    %v2735 = vpop.permute.xlu0 %2734
    %v2736 = vsel %vm263, %v2735, 0
    %2738 = vmatpush.msra.mxu0 0.0
    %2739 = vmatpush.msra.mxu0 0.0
    %2740 = vmatpush.msra.mxu0 0.0
    %2741 = vmatpush.msra.mxu0 0.0
    %2742 = vmatpush.msra.mxu0 0.0
    %2743 = vmatpush.msra.mxu0 0.0
    %2744 = vmatpush.msra.mxu0 0.0
    %2745 = vmatpush.msra.mxu0 0.0
    %2746 = vmatpush.msra.mxu0 0.0
    %2747 = vmatpush.msra.mxu0 0.0
    %2748 = vmatpush.msra.mxu0 0.0
    %2749 = vmatpush.msra.mxu0 0.0
    %2750 = vmatpush.msra.mxu0 %v218
    %2751 = vmatpush.msra.mxu0 %v217
    %2752 = vmatpush.msra.mxu0 %v216
    %2753 = vmatpush.msra.mxu0 %v215
    %2754 = vmatmul.f32.gmra.mxu0 %v2736
    %v2755 = vpop.f32.mrf.mxu0
    %v2756 = vadd.f32 %v559, %v2755
    %2757 = vdwg.mxu0
    %s2758 = scalar_lea.vmem %s4, 28
    %v2759 = vld [vmem:[%s2758] sm:$0xf]
    %v2760 = vadd.f32 %v2756, %v2759
    %v2761 = vmul.f32 %v2760, 1000.0
    %v2762 = vsel %vm589, %v2761, -inf
    %2763 = vmax.xlane.f32.xlu0 %v2762
    %v2764 = vpop.xlane.xlu0 %2763
    %v2765 = vsub.f32 %v2761, %v2764
    %v2766 = vmul.f32 %v2765, 1.442695
    %v2767 = vpow.pop %v2766
    %v2768 = vsel %vm589, %v2767, 0.0
    %2769 = vadd.xlane.f32.xlu0 %v2768
    %v2770 = vpop.xlane.xlu0 %2769
    %v2771 = vrcp.pop %v2770
    %v2772 = vmul.f32 %v2767, %v2771
    %2773 = vmatpush.msra.mxu0 0.0
    %2774 = vmatpush.msra.mxu0 0.0
    %2775 = vmatpush.msra.mxu0 0.0
    %2776 = vmatpush.msra.mxu0 0.0
    %2777 = vmatpush.msra.mxu0 0.0
    %2778 = vmatpush.msra.mxu0 0.0
    %2779 = vmatpush.msra.mxu0 0.0
    %2780 = vmatpush.msra.mxu0 0.0
    %2781 = vmatpush.msra.mxu0 0.0
    %2782 = vmatpush.msra.mxu0 0.0
    %2783 = vmatpush.msra.mxu0 0.0
    %2784 = vmatpush.msra.mxu0 0.0
    %2785 = vmatpush.msra.mxu0 %v223
    %2786 = vmatpush.msra.mxu0 %v222
    %2787 = vmatpush.msra.mxu0 %v221
    %2788 = vmatpush.msra.mxu0 %v220
    %2789 = vmatmul.f32.gmra.mxu0 %v2736
    %v2790 = vpop.f32.mrf.mxu0
    %v2791 = vadd.f32 0.0, %v2790
    %2792 = vdwg.mxu0
    %v2793 = vadd.f32 %v2791, %v622
    %2795 = vset.pattern.permute.xlu0 0
    %2796 = vperm.xlu0 %2795, %v2772
    %v2797 = vpop.permute.xlu0 %2796
    %v2799 = vmul.f32 %v2797, %v2793
    %v2800 = vadd.f32 %v2791, %v634
    %2801 = vset.pattern.permute.xlu0 1
    %2802 = vperm.xlu0 %2801, %v2772
    %v2803 = vpop.permute.xlu0 %2802
    %v2805 = vmul.f32 %v2803, %v2800
    %2807 = vrot.lane.b32.xlu0 %v2805, 96
    %v2808 = vpop.permute.xlu0 %2807
    %v2810 = vadd.f32 %v2799, %v2808
    %v2811 = vadd.f32 %v2791, %v650
    %2812 = vset.pattern.permute.xlu0 2
    %2813 = vperm.xlu0 %2812, %v2772
    %v2814 = vpop.permute.xlu0 %2813
    %v2816 = vmul.f32 %v2814, %v2811
    %2818 = vrot.lane.b32.xlu0 %v2816, 64
    %v2819 = vpop.permute.xlu0 %2818
    %v2821 = vadd.f32 %v2810, %v2819
    %v2823 = vsel %vm263, %v2821, 0
    %2825 = vmatpush.msra.mxu0 0.0
    %2826 = vmatpush.msra.mxu0 0.0
    %2827 = vmatpush.msra.mxu0 0.0
    %2828 = vmatpush.msra.mxu0 0.0
    %2829 = vmatpush.msra.mxu0 0.0
    %2830 = vmatpush.msra.mxu0 0.0
    %2831 = vmatpush.msra.mxu0 0.0
    %2832 = vmatpush.msra.mxu0 0.0
    %2833 = vmatpush.msra.mxu0 0.0
    %2834 = vmatpush.msra.mxu0 0.0
    %2835 = vmatpush.msra.mxu0 0.0
    %2836 = vmatpush.msra.mxu0 0.0
    %2837 = vmatpush.msra.mxu0 %v227
    %2838 = vmatpush.msra.mxu0 %v226
    %2839 = vmatpush.msra.mxu0 %v225
    %2840 = vmatpush.msra.mxu0 %v224
    %2841 = vmatmul.f32.gmra.mxu0 %v2823
    %v2842 = vpop.f32.mrf.mxu0
    %v2843 = vadd.f32 %v664, %v2842
    %2844 = vdwg.mxu0
    %v2846 = vrot.slane %v2843, 1
    %v2847 = vrot.slane %v2843, 2
    %v2848 = vrot.slane %v2843, 3
    %2852 = vst [vmem:[#allocation19 + $0x7] sm:$0x1] %v2843
    %2853 = vst [vmem:[#allocation19 + $0xf] sm:$0x1] %v2846
    %2854 = vst [vmem:[#allocation19 + $0x17] sm:$0x1] %v2847
    %2855 = vst [vmem:[#allocation19 + $0x1f] sm:$0x1] %v2848
    // Predicated region
    $region114: #{tpu_custom_call.1} parent=1 // pred_check
      _
    $region115: #{tpu_custom_call.1} parent=1 // pred_check_branch
      %2857 = sbr.rel (0) target = $region117
    $region116: #{tpu_custom_call.1} parent=1 // pred_region
      %2859 = vsyncadd [#allocation4], 0
      %s2860 = sshll.u32 [#allocation19], 4
      %s2861 = int_to_ptr.vmem [resolvable:$true] %s2860
      %s2862 = sshll.u32 %s18, 4
      %s2863 = int_to_ptr.hbm [resolvable:$true] %s2862
      %2868 = dma.vmem_to_hbm [thread:$0]  %s2861, 512, %s2863, [#allocation4], 128, 128, 8
    $region117: #{tpu_custom_call.1} parent=1 // pred_fallthru
      _
    // Predicated region
    $region118: #{tpu_custom_call.1} parent=1 // pred_check
      _
    $region119: #{tpu_custom_call.1} parent=1 // pred_check_branch
      %2870 = sbr.rel (0) target = $region121
    $region120: #{tpu_custom_call.1} parent=1 // pred_region
      %2872 = dma.done [#allocation4], 512
    $region121: #{tpu_custom_call.1} parent=1 // pred_fallthru
      _
    %2873 = vsyncpa [#allocation3], 1
    %2874 = vsyncpa [#allocation6], 1
    %2875 = vsyncpa [#allocation9], 1
    %2876 = vsyncpa [#allocation12], 1
    %2877 = vsyncpa [#allocation15], 1
    %2878 = vsyncpa [#allocation18], 1
    %2879 = vsyncpa [#allocation4], 1

</llo_original>
